<compile_context>
chip_gen: v5e
topology: v5e:2x2
jax: 0.10.0
libtpu: 0.0.40
codegen_flags: <defaults>
</compile_context>

<pallas_src>
import functools

import jax
import jax.numpy as jnp
import numpy as np
from jax.experimental import pallas as pl
from jax.experimental.pallas import tpu as pltpu

LN_EPS = 1e-5


def _layer_norm(x, gamma, beta):
    # One-pass LN: mean and E[x^2] are independent reductions (shorter
    # critical path than mean -> centered variance).
    mean = jnp.mean(x, axis=-1, keepdims=True)
    mean_sq = jnp.mean(x * x, axis=-1, keepdims=True)
    var = mean_sq - mean * mean
    return (x - mean) * jax.lax.rsqrt(var + LN_EPS) * gamma + beta


def _cross_attn_kernel(
    x_ref, xf_ref,
    ln_g_ref, ln_b_ref, tln_g_ref, tln_b_ref,
    wq_ref, bq_ref, wk_ref, bk_ref, wv_ref, bv_ref,
    hblk_ref,
    o_ref,
    *, num_heads,
):
    Bb, T, D = x_ref.shape
    N, L = xf_ref.shape[1], xf_ref.shape[2]
    Dh = D // num_heads
    M = Bb * T

    x3 = x_ref[...].astype(jnp.float32)      # [Bb, T, D]
    xf3 = xf_ref[...].astype(jnp.float32)    # [Bb, N, L]

    # Fold the batch block into the matmul M dimension (layout-preserving:
    # minor dim unchanged, T/N multiples of 8).
    x2 = x3.reshape(M, D)
    xf2 = xf3.reshape(Bb * N, L)

    # LayerNorms (gamma/beta stored as [1, dim]) in f32.
    xn = _layer_norm(x2, ln_g_ref[...], ln_b_ref[...])       # [M, D]
    xfn = _layer_norm(xf2, tln_g_ref[...], tln_b_ref[...])   # [Bb*N, L]

    # bf16 operands for the MXU, f32 accumulation; elementwise math stays f32.
    xn_b = xn.astype(jnp.bfloat16)
    xfn_b = xfn.astype(jnp.bfloat16)

    q = jnp.dot(xn_b, wq_ref[...], preferred_element_type=jnp.float32) + bq_ref[...]   # [M, D]
    k = jnp.dot(xfn_b, wk_ref[...], preferred_element_type=jnp.float32) + bk_ref[...]  # [Bb*N, D]
    v = jnp.dot(xfn_b, wv_ref[...], preferred_element_type=jnp.float32) + bv_ref[...]  # [Bb*N, D]

    # Constant block-diagonal "same head" indicator [D, D] (built on host).
    hblk = hblk_ref[...]

    # softmax(query, dim=-1) within each head, using a PER-HEAD max for
    # numerical safety.  H is small/static so these slice-reductions unroll at
    # trace time; the [M,1] per-head stats are broadcast back to lane width
    # against the head-indicator rows of the constant mask.
    qmax = None
    for h in range(num_heads):
        mh = jnp.max(q[:, h * Dh:(h + 1) * Dh], axis=-1, keepdims=True)     # [M, 1]
        term = mh * hblk[h * Dh:h * Dh + 1, :]                              # [M, D]
        qmax = term if qmax is None else qmax + term
    exp_q = jnp.exp(q - qmax)
    qden = None
    for h in range(num_heads):
        sh = jnp.sum(exp_q[:, h * Dh:(h + 1) * Dh], axis=-1, keepdims=True)  # [M, 1]
        term = sh * hblk[h * Dh:h * Dh + 1, :]                               # [M, D]
        qden = term if qden is None else qden + term
    q_sm = exp_q * pl.reciprocal(qden, approx=True)          # [M, D]; den >= 1

    # softmax(key, dim=1): over N, per batch element, per feature lane.
    k3 = k.reshape(Bb, N, D)
    k3 = k3 - jnp.max(k3, axis=1, keepdims=True)
    exp_k = jnp.exp(k3)
    k_den = jnp.sum(exp_k, axis=1, keepdims=True)
    k_sm = exp_k * pl.reciprocal(k_den, approx=True)          # [Bb, N, D]; den >= 1

    v3 = v.reshape(Bb, N, D)
    q3 = q_sm.reshape(Bb, T, D)

    k_b = k_sm.astype(jnp.bfloat16)
    v_b = v3.astype(jnp.bfloat16)
    q_b = q3.astype(jnp.bfloat16)

    # Per-head attention = block-diagonal of the full [D, D] contraction:
    # dot_general contracts dim 1 (N) of both operands directly (A^T @ B
    # pattern), so no explicit [N, D] -> [D, N] transpose is materialized.
    att = jax.lax.dot_general(
        k_b, v_b,
        dimension_numbers=(((1,), (1,)), ((0,), (0,))),
        preferred_element_type=jnp.float32)                   # [Bb, D, D]
    att = (att * hblk).astype(jnp.bfloat16)                   # zero cross-head blocks
    y = jax.lax.dot_general(
        q_b, att,
        dimension_numbers=(((2,), (1,)), ((0,), (0,))),
        preferred_element_type=jnp.float32)                   # [Bb, T, D]

    o_ref[...] = (x3 + y).astype(o_ref.dtype)                 # residual add (f32)


def _vmem_bytes_estimate(bb, T, N, D, L):
    """Rough per-grid-step VMEM footprint (bytes), used for block sizing."""
    f32, bf16 = 4, 2
    # Double-buffered sliding operands: x, xf, out.
    io = 2 * bb * (T * D + N * L + T * D) * f32
    # Constant operands (bf16 weights, f32 head mask, LN params / biases).
    consts = 2 * ((D * D + 2 * L * D) * bf16 + D * D * f32 + 8 * max(D, L) * f32)
    # In-body temporaries (q/k/v, exps, softmaxes, per-batch [D,D] att, y).
    temps = bb * (6 * T * D + 6 * N * D + 2 * D * D) * f32
    return io + consts + temps


def _pick_block_b(B, T, N, D, L, vmem_budget=40 * 1024 * 1024,
                  min_steps=2, target_m=256):
    """Largest-M batch block that fits VMEM while keeping >= min_steps grid
    steps; among blocks already filling the MXU (bb*T >= target_m), prefer the
    smallest one so the pipeline keeps more steps (and v7x keeps both TCs fed)."""
    divisors = [d for d in range(1, B + 1) if B % d == 0]
    fits = [d for d in divisors
            if _vmem_bytes_estimate(d, T, N, D, L) <= vmem_budget] or [1]
    cands = [d for d in fits if B // d >= min_steps] or fits
    full = [d for d in cands if d * T >= target_m]
    if full:
        return min(full)
    return max(cands)


def efficient_cross_attention(x, xf, params, num_heads, block_b=None):
    B, T, D = x.shape
    _, N, L = xf.shape
    assert D % num_heads == 0
    Dh = D // num_heads

    if block_b is None:
        block_b = _pick_block_b(B, T, N, D, L)
    assert B % block_b == 0, "batch must be divisible by block_b"

    # Pre-cast matmul weights to bf16 (MXU-native on v5e/v6e/v7x, halves their
    # DMA traffic).  Biases and LN params stay f32.
    wq = params["wq"].astype(jnp.bfloat16)
    wk = params["wk"].astype(jnp.bfloat16)
    wv = params["wv"].astype(jnp.bfloat16)

    # Constant block-diagonal "same head" mask, built once on the host.
    rows = np.arange(D)[:, None] // Dh
    cols = np.arange(D)[None, :] // Dh
    hblk = jnp.asarray((rows == cols).astype(np.float32))

    est = _vmem_bytes_estimate(block_b, T, N, D, L)
    vmem_limit = int(min(max(2 * est, 32 * 1024 * 1024), 56 * 1024 * 1024))

    kernel = functools.partial(_cross_attn_kernel, num_heads=num_heads)

    # Constant operands: constant index_map -> fetched once across the grid.
    const2d = lambda shape: pl.BlockSpec(shape, lambda b: (0, 0))

    return pl.pallas_call(
        kernel,
        out_shape=jax.ShapeDtypeStruct((B, T, D), x.dtype),
        grid_spec=pltpu.PrefetchScalarGridSpec(
            num_scalar_prefetch=0,
            grid=(B // block_b,),
            in_specs=[
                pl.BlockSpec((block_b, T, D), lambda b: (b, 0, 0)),   # x
                pl.BlockSpec((block_b, N, L), lambda b: (b, 0, 0)),   # xf
                const2d((1, D)),   # ln gamma
                const2d((1, D)),   # ln beta
                const2d((1, L)),   # text ln gamma
                const2d((1, L)),   # text ln beta
                const2d((D, D)),   # Wq (bf16)
                const2d((1, D)),   # bq
                const2d((L, D)),   # Wk (bf16)
                const2d((1, D)),   # bk
                const2d((L, D)),   # Wv (bf16)
                const2d((1, D)),   # bv
                const2d((D, D)),   # head block-diagonal mask
            ],
            out_specs=pl.BlockSpec((block_b, T, D), lambda b: (b, 0, 0)),
        ),
        compiler_params=pltpu.CompilerParams(
            dimension_semantics=("parallel",),
            vmem_limit_bytes=vmem_limit),
    )(
        x, xf,
        params["ln_g"], params["ln_b"], params["tln_g"], params["tln_b"],
        wq, params["bq"], wk, params["bk"], wv, params["bv"],
        hblk,
    )


def reference_jax(x, xf, params, num_heads):
    """Pure-JAX f32 reference mirroring the PyTorch forward (cond_type=None)."""
    B, T, D = x.shape
    N = xf.shape[1]
    H = num_heads

    def ln(v, g, b):
        mean = jnp.mean(v, axis=-1, keepdims=True)
        var = jnp.mean(jnp.square(v - mean), axis=-1, keepdims=True)
        return (v - mean) * jax.lax.rsqrt(var + LN_EPS) * g + b

    xn = ln(x, params["ln_g"], params["ln_b"])
    xfn = ln(xf, params["tln_g"], params["tln_b"])
    q = xn @ params["wq"] + params["bq"]
    k = xfn @ params["wk"] + params["bk"]
    v = (xfn @ params["wv"] + params["bv"]).reshape(B, N, H, -1)
    q = jax.nn.softmax(q.reshape(B, T, H, -1), axis=-1)
    k = jax.nn.softmax(k.reshape(B, N, H, -1), axis=1)
    att = jnp.einsum("bnhd,bnhl->bhdl", k, v)
    y = jnp.einsum("bnhd,bhdl->bnhl", q, att).reshape(B, T, D)
    return x + y


if __name__ == "__main__":
    # Shapes consistent with the module's forward, lane-dense (D = L = 128),
    # large enough that the auto-picked block_b fills the MXU M dimension
    # (block_b*T >= 256) while keeping an even >= 2-step grid.
    B, T, D = 32, 32, 128   # motion: [B, T, D]
    N, L = 16, 128          # text:   [B, N, L]
    H = 4                   # num_heads (D % H == 0)

    key = jax.random.PRNGKey(0)
    ks = jax.random.split(key, 8)

    x = jax.random.normal(ks[0], (B, T, D), dtype=jnp.float32)
    xf = jax.random.normal(ks[1], (B, N, L), dtype=jnp.float32)

    scale = 0.05
    params = {
        # LayerNorm(latent_dim) / LayerNorm(text_latent_dim)
        "ln_g": jnp.ones((1, D), jnp.float32),
        "ln_b": jnp.zeros((1, D), jnp.float32),
        "tln_g": jnp.ones((1, L), jnp.float32),
        "tln_b": jnp.zeros((1, L), jnp.float32),
        # nn.Linear weights stored as [in, out] (transposed vs. PyTorch)
        "wq": scale * jax.random.normal(ks[2], (D, D), dtype=jnp.float32),
        "bq": scale * jax.random.normal(ks[3], (1, D), dtype=jnp.float32),
        "wk": scale * jax.random.normal(ks[4], (L, D), dtype=jnp.float32),
        "bk": scale * jax.random.normal(ks[5], (1, D), dtype=jnp.float32),
        "wv": scale * jax.random.normal(ks[6], (L, D), dtype=jnp.float32),
        "bv": scale * jax.random.normal(ks[7], (1, D), dtype=jnp.float32),
    }

    out = efficient_cross_attention(x, xf, params, num_heads=H)
    out = jax.block_until_ready(out)

    ref = jax.block_until_ready(reference_jax(x, xf, params, num_heads=H))
    np.testing.assert_allclose(np.asarray(out), np.asarray(ref),
                               rtol=5e-2, atol=5e-2)

    print("KERNEL_OK")
</pallas_src>

<mosaic_0001>
module attributes {stable_mosaic.version = 11 : i64} {
  func.func @_cross_attn_kernel(%arg0: i32, %arg1: memref<8x32x128xf32, #tpu.memory_space<vmem>>, %arg2: memref<8x16x128xf32, #tpu.memory_space<vmem>>, %arg3: memref<1x128xf32, #tpu.memory_space<vmem>>, %arg4: memref<1x128xf32, #tpu.memory_space<vmem>>, %arg5: memref<1x128xf32, #tpu.memory_space<vmem>>, %arg6: memref<1x128xf32, #tpu.memory_space<vmem>>, %arg7: memref<128x128xbf16, #tpu.memory_space<vmem>>, %arg8: memref<1x128xf32, #tpu.memory_space<vmem>>, %arg9: memref<128x128xbf16, #tpu.memory_space<vmem>>, %arg10: memref<1x128xf32, #tpu.memory_space<vmem>>, %arg11: memref<128x128xbf16, #tpu.memory_space<vmem>>, %arg12: memref<1x128xf32, #tpu.memory_space<vmem>>, %arg13: memref<128x128xf32, #tpu.memory_space<vmem>>, %arg14: memref<8x32x128xf32, #tpu.memory_space<vmem>>) attributes {dimension_semantics = [#tpu.dimension_semantics<parallel>], iteration_bounds = array<i64: 4>, scalar_prefetch = 0 : i64, scratch_operands = 0 : i64, tpu.core_type = #tpu.core_type<tc>, window_params = [{transform_indices = @transform_0, window_bounds = array<i64: 8, 32, 128>}, {transform_indices = @transform_1, window_bounds = array<i64: 8, 16, 128>}, {pipeline_mode = #tpu.pipeline_mode<synchronous>, transform_indices = @transform_2, window_bounds = array<i64: 1, 128>}, {pipeline_mode = #tpu.pipeline_mode<synchronous>, transform_indices = @transform_3, window_bounds = array<i64: 1, 128>}, {pipeline_mode = #tpu.pipeline_mode<synchronous>, transform_indices = @transform_4, window_bounds = array<i64: 1, 128>}, {pipeline_mode = #tpu.pipeline_mode<synchronous>, transform_indices = @transform_5, window_bounds = array<i64: 1, 128>}, {pipeline_mode = #tpu.pipeline_mode<synchronous>, transform_indices = @transform_6, window_bounds = array<i64: 128, 128>}, {pipeline_mode = #tpu.pipeline_mode<synchronous>, transform_indices = @transform_7, window_bounds = array<i64: 1, 128>}, {pipeline_mode = #tpu.pipeline_mode<synchronous>, transform_indices = @transform_8, window_bounds = array<i64: 128, 128>}, {pipeline_mode = #tpu.pipeline_mode<synchronous>, transform_indices = @transform_9, window_bounds = array<i64: 1, 128>}, {pipeline_mode = #tpu.pipeline_mode<synchronous>, transform_indices = @transform_10, window_bounds = array<i64: 128, 128>}, {pipeline_mode = #tpu.pipeline_mode<synchronous>, transform_indices = @transform_11, window_bounds = array<i64: 1, 128>}, {pipeline_mode = #tpu.pipeline_mode<synchronous>, transform_indices = @transform_12, window_bounds = array<i64: 128, 128>}, {transform_indices = @transform_13, window_bounds = array<i64: 8, 32, 128>}]} {
    %c0 = arith.constant 0 : index
    %c0_0 = arith.constant 0 : index
    %c0_1 = arith.constant 0 : index
    %0 = vector.load %arg1[%c0, %c0_0, %c0_1] : memref<8x32x128xf32, #tpu.memory_space<vmem>>, vector<8x32x128xf32>
    %c0_2 = arith.constant 0 : index
    %c0_3 = arith.constant 0 : index
    %c0_4 = arith.constant 0 : index
    %1 = vector.load %arg2[%c0_2, %c0_3, %c0_4] : memref<8x16x128xf32, #tpu.memory_space<vmem>>, vector<8x16x128xf32>
    %2 = vector.shape_cast %0 : vector<8x32x128xf32> to vector<256x128xf32>
    %3 = vector.shape_cast %1 : vector<8x16x128xf32> to vector<128x128xf32>
    %c0_5 = arith.constant 0 : index
    %c0_6 = arith.constant 0 : index
    %4 = vector.load %arg3[%c0_5, %c0_6] : memref<1x128xf32, #tpu.memory_space<vmem>>, vector<1x128xf32>
    %c0_7 = arith.constant 0 : index
    %c0_8 = arith.constant 0 : index
    %5 = vector.load %arg4[%c0_7, %c0_8] : memref<1x128xf32, #tpu.memory_space<vmem>>, vector<1x128xf32>
    %cst = arith.constant dense<0.000000e+00> : vector<256xf32>
    %6 = vector.multi_reduction <add>, %2, %cst [1] : vector<256x128xf32> to vector<256xf32>
    %7 = vector.shape_cast %6 : vector<256xf32> to vector<256x1xf32>
    %cst_9 = arith.constant 1.280000e+02 : f32
    %8 = vector.broadcast %cst_9 : f32 to vector<256x1xf32>
    %9 = arith.divf %7, %8 : vector<256x1xf32>
    %10 = arith.mulf %2, %2 : vector<256x128xf32>
    %cst_10 = arith.constant dense<0.000000e+00> : vector<256xf32>
    %11 = vector.multi_reduction <add>, %10, %cst_10 [1] : vector<256x128xf32> to vector<256xf32>
    %12 = vector.shape_cast %11 : vector<256xf32> to vector<256x1xf32>
    %cst_11 = arith.constant 1.280000e+02 : f32
    %13 = vector.broadcast %cst_11 : f32 to vector<256x1xf32>
    %14 = arith.divf %12, %13 : vector<256x1xf32>
    %15 = arith.mulf %9, %9 : vector<256x1xf32>
    %16 = arith.subf %14, %15 : vector<256x1xf32>
    %17 = vector.broadcast %9 : vector<256x1xf32> to vector<256x128xf32>
    %18 = arith.subf %2, %17 : vector<256x128xf32>
    %cst_12 = arith.constant 9.99999974E-6 : f32
    %19 = vector.broadcast %cst_12 : f32 to vector<256x1xf32>
    %20 = arith.addf %16, %19 : vector<256x1xf32>
    %21 = math.rsqrt %20 : vector<256x1xf32>
    %22 = vector.broadcast %21 : vector<256x1xf32> to vector<256x128xf32>
    %23 = arith.mulf %18, %22 : vector<256x128xf32>
    %24 = vector.broadcast %4 : vector<1x128xf32> to vector<256x128xf32>
    %25 = arith.mulf %23, %24 : vector<256x128xf32>
    %26 = vector.broadcast %5 : vector<1x128xf32> to vector<256x128xf32>
    %27 = arith.addf %25, %26 : vector<256x128xf32>
    %c0_13 = arith.constant 0 : index
    %c0_14 = arith.constant 0 : index
    %28 = vector.load %arg5[%c0_13, %c0_14] : memref<1x128xf32, #tpu.memory_space<vmem>>, vector<1x128xf32>
    %c0_15 = arith.constant 0 : index
    %c0_16 = arith.constant 0 : index
    %29 = vector.load %arg6[%c0_15, %c0_16] : memref<1x128xf32, #tpu.memory_space<vmem>>, vector<1x128xf32>
    %cst_17 = arith.constant dense<0.000000e+00> : vector<128xf32>
    %30 = vector.multi_reduction <add>, %3, %cst_17 [1] : vector<128x128xf32> to vector<128xf32>
    %31 = vector.shape_cast %30 : vector<128xf32> to vector<128x1xf32>
    %cst_18 = arith.constant 1.280000e+02 : f32
    %32 = vector.broadcast %cst_18 : f32 to vector<128x1xf32>
    %33 = arith.divf %31, %32 : vector<128x1xf32>
    %34 = arith.mulf %3, %3 : vector<128x128xf32>
    %cst_19 = arith.constant dense<0.000000e+00> : vector<128xf32>
    %35 = vector.multi_reduction <add>, %34, %cst_19 [1] : vector<128x128xf32> to vector<128xf32>
    %36 = vector.shape_cast %35 : vector<128xf32> to vector<128x1xf32>
    %cst_20 = arith.constant 1.280000e+02 : f32
    %37 = vector.broadcast %cst_20 : f32 to vector<128x1xf32>
    %38 = arith.divf %36, %37 : vector<128x1xf32>
    %39 = arith.mulf %33, %33 : vector<128x1xf32>
    %40 = arith.subf %38, %39 : vector<128x1xf32>
    %41 = vector.broadcast %33 : vector<128x1xf32> to vector<128x128xf32>
    %42 = arith.subf %3, %41 : vector<128x128xf32>
    %cst_21 = arith.constant 9.99999974E-6 : f32
    %43 = vector.broadcast %cst_21 : f32 to vector<128x1xf32>
    %44 = arith.addf %40, %43 : vector<128x1xf32>
    %45 = math.rsqrt %44 : vector<128x1xf32>
    %46 = vector.broadcast %45 : vector<128x1xf32> to vector<128x128xf32>
    %47 = arith.mulf %42, %46 : vector<128x128xf32>
    %48 = vector.broadcast %28 : vector<1x128xf32> to vector<128x128xf32>
    %49 = arith.mulf %47, %48 : vector<128x128xf32>
    %50 = vector.broadcast %29 : vector<1x128xf32> to vector<128x128xf32>
    %51 = arith.addf %49, %50 : vector<128x128xf32>
    %52 = arith.truncf %27 : vector<256x128xf32> to vector<256x128xbf16>
    %53 = arith.truncf %51 : vector<128x128xf32> to vector<128x128xbf16>
    %c0_22 = arith.constant 0 : index
    %c0_23 = arith.constant 0 : index
    %54 = vector.load %arg7[%c0_22, %c0_23] : memref<128x128xbf16, #tpu.memory_space<vmem>>, vector<128x128xbf16>
    %cst_24 = arith.constant dense<0.000000e+00> : vector<256x128xf32>
    %55 = tpu.matmul %52, %54, %cst_24 {dimension_numbers = #tpu.dot_dimension_numbers<[1], [0], [0], [1], [0, 0, 1, 1], [], []>} : vector<256x128xbf16>, vector<128x128xbf16>, vector<256x128xf32> -> vector<256x128xf32>
    %c0_25 = arith.constant 0 : index
    %c0_26 = arith.constant 0 : index
    %56 = vector.load %arg8[%c0_25, %c0_26] : memref<1x128xf32, #tpu.memory_space<vmem>>, vector<1x128xf32>
    %57 = vector.broadcast %56 : vector<1x128xf32> to vector<256x128xf32>
    %58 = arith.addf %55, %57 : vector<256x128xf32>
    %c0_27 = arith.constant 0 : index
    %c0_28 = arith.constant 0 : index
    %59 = vector.load %arg9[%c0_27, %c0_28] : memref<128x128xbf16, #tpu.memory_space<vmem>>, vector<128x128xbf16>
    %cst_29 = arith.constant dense<0.000000e+00> : vector<128x128xf32>
    %60 = tpu.matmul %53, %59, %cst_29 {dimension_numbers = #tpu.dot_dimension_numbers<[1], [0], [0], [1], [0, 0, 1, 1], [], []>} : vector<128x128xbf16>, vector<128x128xbf16>, vector<128x128xf32> -> vector<128x128xf32>
    %c0_30 = arith.constant 0 : index
    %c0_31 = arith.constant 0 : index
    %61 = vector.load %arg10[%c0_30, %c0_31] : memref<1x128xf32, #tpu.memory_space<vmem>>, vector<1x128xf32>
    %62 = vector.broadcast %61 : vector<1x128xf32> to vector<128x128xf32>
    %63 = arith.addf %60, %62 : vector<128x128xf32>
    %c0_32 = arith.constant 0 : index
    %c0_33 = arith.constant 0 : index
    %64 = vector.load %arg11[%c0_32, %c0_33] : memref<128x128xbf16, #tpu.memory_space<vmem>>, vector<128x128xbf16>
    %cst_34 = arith.constant dense<0.000000e+00> : vector<128x128xf32>
    %65 = tpu.matmul %53, %64, %cst_34 {dimension_numbers = #tpu.dot_dimension_numbers<[1], [0], [0], [1], [0, 0, 1, 1], [], []>} : vector<128x128xbf16>, vector<128x128xbf16>, vector<128x128xf32> -> vector<128x128xf32>
    %c0_35 = arith.constant 0 : index
    %c0_36 = arith.constant 0 : index
    %66 = vector.load %arg12[%c0_35, %c0_36] : memref<1x128xf32, #tpu.memory_space<vmem>>, vector<1x128xf32>
    %67 = vector.broadcast %66 : vector<1x128xf32> to vector<128x128xf32>
    %68 = arith.addf %65, %67 : vector<128x128xf32>
    %c0_37 = arith.constant 0 : index
    %c0_38 = arith.constant 0 : index
    %69 = vector.load %arg13[%c0_37, %c0_38] : memref<128x128xf32, #tpu.memory_space<vmem>>, vector<128x128xf32>
    %70 = vector.extract_strided_slice %58 {offsets = [0, 0], sizes = [256, 32], strides = [1, 1]} : vector<256x128xf32> to vector<256x32xf32>
    %cst_39 = arith.constant dense<0xFF800000> : vector<256xf32>
    %71 = vector.multi_reduction <maximumf>, %70, %cst_39 [1] : vector<256x32xf32> to vector<256xf32>
    %72 = vector.shape_cast %71 : vector<256xf32> to vector<256x1xf32>
    %73 = vector.extract_strided_slice %69 {offsets = [0, 0], sizes = [1, 128], strides = [1, 1]} : vector<128x128xf32> to vector<1x128xf32>
    %74 = vector.broadcast %72 : vector<256x1xf32> to vector<256x128xf32>
    %75 = vector.broadcast %73 : vector<1x128xf32> to vector<256x128xf32>
    %76 = arith.mulf %74, %75 : vector<256x128xf32>
    %77 = vector.extract_strided_slice %58 {offsets = [0, 32], sizes = [256, 32], strides = [1, 1]} : vector<256x128xf32> to vector<256x32xf32>
    %cst_40 = arith.constant dense<0xFF800000> : vector<256xf32>
    %78 = vector.multi_reduction <maximumf>, %77, %cst_40 [1] : vector<256x32xf32> to vector<256xf32>
    %79 = vector.shape_cast %78 : vector<256xf32> to vector<256x1xf32>
    %80 = vector.extract_strided_slice %69 {offsets = [32, 0], sizes = [1, 128], strides = [1, 1]} : vector<128x128xf32> to vector<1x128xf32>
    %81 = vector.broadcast %79 : vector<256x1xf32> to vector<256x128xf32>
    %82 = vector.broadcast %80 : vector<1x128xf32> to vector<256x128xf32>
    %83 = arith.mulf %81, %82 : vector<256x128xf32>
    %84 = arith.addf %76, %83 : vector<256x128xf32>
    %85 = vector.extract_strided_slice %58 {offsets = [0, 64], sizes = [256, 32], strides = [1, 1]} : vector<256x128xf32> to vector<256x32xf32>
    %cst_41 = arith.constant dense<0xFF800000> : vector<256xf32>
    %86 = vector.multi_reduction <maximumf>, %85, %cst_41 [1] : vector<256x32xf32> to vector<256xf32>
    %87 = vector.shape_cast %86 : vector<256xf32> to vector<256x1xf32>
    %88 = vector.extract_strided_slice %69 {offsets = [64, 0], sizes = [1, 128], strides = [1, 1]} : vector<128x128xf32> to vector<1x128xf32>
    %89 = vector.broadcast %87 : vector<256x1xf32> to vector<256x128xf32>
    %90 = vector.broadcast %88 : vector<1x128xf32> to vector<256x128xf32>
    %91 = arith.mulf %89, %90 : vector<256x128xf32>
    %92 = arith.addf %84, %91 : vector<256x128xf32>
    %93 = vector.extract_strided_slice %58 {offsets = [0, 96], sizes = [256, 32], strides = [1, 1]} : vector<256x128xf32> to vector<256x32xf32>
    %cst_42 = arith.constant dense<0xFF800000> : vector<256xf32>
    %94 = vector.multi_reduction <maximumf>, %93, %cst_42 [1] : vector<256x32xf32> to vector<256xf32>
    %95 = vector.shape_cast %94 : vector<256xf32> to vector<256x1xf32>
    %96 = vector.extract_strided_slice %69 {offsets = [96, 0], sizes = [1, 128], strides = [1, 1]} : vector<128x128xf32> to vector<1x128xf32>
    %97 = vector.broadcast %95 : vector<256x1xf32> to vector<256x128xf32>
    %98 = vector.broadcast %96 : vector<1x128xf32> to vector<256x128xf32>
    %99 = arith.mulf %97, %98 : vector<256x128xf32>
    %100 = arith.addf %92, %99 : vector<256x128xf32>
    %101 = arith.subf %58, %100 : vector<256x128xf32>
    %102 = math.exp %101 : vector<256x128xf32>
    %103 = vector.extract_strided_slice %102 {offsets = [0, 0], sizes = [256, 32], strides = [1, 1]} : vector<256x128xf32> to vector<256x32xf32>
    %cst_43 = arith.constant dense<0.000000e+00> : vector<256xf32>
    %104 = vector.multi_reduction <add>, %103, %cst_43 [1] : vector<256x32xf32> to vector<256xf32>
    %105 = vector.shape_cast %104 : vector<256xf32> to vector<256x1xf32>
    %106 = vector.extract_strided_slice %69 {offsets = [0, 0], sizes = [1, 128], strides = [1, 1]} : vector<128x128xf32> to vector<1x128xf32>
    %107 = vector.broadcast %105 : vector<256x1xf32> to vector<256x128xf32>
    %108 = vector.broadcast %106 : vector<1x128xf32> to vector<256x128xf32>
    %109 = arith.mulf %107, %108 : vector<256x128xf32>
    %110 = vector.extract_strided_slice %102 {offsets = [0, 32], sizes = [256, 32], strides = [1, 1]} : vector<256x128xf32> to vector<256x32xf32>
    %cst_44 = arith.constant dense<0.000000e+00> : vector<256xf32>
    %111 = vector.multi_reduction <add>, %110, %cst_44 [1] : vector<256x32xf32> to vector<256xf32>
    %112 = vector.shape_cast %111 : vector<256xf32> to vector<256x1xf32>
    %113 = vector.extract_strided_slice %69 {offsets = [32, 0], sizes = [1, 128], strides = [1, 1]} : vector<128x128xf32> to vector<1x128xf32>
    %114 = vector.broadcast %112 : vector<256x1xf32> to vector<256x128xf32>
    %115 = vector.broadcast %113 : vector<1x128xf32> to vector<256x128xf32>
    %116 = arith.mulf %114, %115 : vector<256x128xf32>
    %117 = arith.addf %109, %116 : vector<256x128xf32>
    %118 = vector.extract_strided_slice %102 {offsets = [0, 64], sizes = [256, 32], strides = [1, 1]} : vector<256x128xf32> to vector<256x32xf32>
    %cst_45 = arith.constant dense<0.000000e+00> : vector<256xf32>
    %119 = vector.multi_reduction <add>, %118, %cst_45 [1] : vector<256x32xf32> to vector<256xf32>
    %120 = vector.shape_cast %119 : vector<256xf32> to vector<256x1xf32>
    %121 = vector.extract_strided_slice %69 {offsets = [64, 0], sizes = [1, 128], strides = [1, 1]} : vector<128x128xf32> to vector<1x128xf32>
    %122 = vector.broadcast %120 : vector<256x1xf32> to vector<256x128xf32>
    %123 = vector.broadcast %121 : vector<1x128xf32> to vector<256x128xf32>
    %124 = arith.mulf %122, %123 : vector<256x128xf32>
    %125 = arith.addf %117, %124 : vector<256x128xf32>
    %126 = vector.extract_strided_slice %102 {offsets = [0, 96], sizes = [256, 32], strides = [1, 1]} : vector<256x128xf32> to vector<256x32xf32>
    %cst_46 = arith.constant dense<0.000000e+00> : vector<256xf32>
    %127 = vector.multi_reduction <add>, %126, %cst_46 [1] : vector<256x32xf32> to vector<256xf32>
    %128 = vector.shape_cast %127 : vector<256xf32> to vector<256x1xf32>
    %129 = vector.extract_strided_slice %69 {offsets = [96, 0], sizes = [1, 128], strides = [1, 1]} : vector<128x128xf32> to vector<1x128xf32>
    %130 = vector.broadcast %128 : vector<256x1xf32> to vector<256x128xf32>
    %131 = vector.broadcast %129 : vector<1x128xf32> to vector<256x128xf32>
    %132 = arith.mulf %130, %131 : vector<256x128xf32>
    %133 = arith.addf %125, %132 : vector<256x128xf32>
    %134 = tpu.reciprocal %133 {approx = true} : vector<256x128xf32> -> vector<256x128xf32>
    %135 = arith.mulf %102, %134 : vector<256x128xf32>
    %136 = vector.shape_cast %63 : vector<128x128xf32> to vector<8x16x128xf32>
    %cst_47 = arith.constant dense<0xFF800000> : vector<8x128xf32>
    %137 = vector.multi_reduction <maximumf>, %136, %cst_47 [1] : vector<8x16x128xf32> to vector<8x128xf32>
    %138 = vector.shape_cast %137 : vector<8x128xf32> to vector<8x1x128xf32>
    %139 = vector.broadcast %138 : vector<8x1x128xf32> to vector<8x16x128xf32>
    %140 = arith.subf %136, %139 : vector<8x16x128xf32>
    %141 = math.exp %140 : vector<8x16x128xf32>
    %cst_48 = arith.constant dense<0.000000e+00> : vector<8x128xf32>
    %142 = vector.multi_reduction <add>, %141, %cst_48 [1] : vector<8x16x128xf32> to vector<8x128xf32>
    %143 = vector.shape_cast %142 : vector<8x128xf32> to vector<8x1x128xf32>
    %144 = tpu.reciprocal %143 {approx = true} : vector<8x1x128xf32> -> vector<8x1x128xf32>
    %145 = vector.broadcast %144 : vector<8x1x128xf32> to vector<8x16x128xf32>
    %146 = arith.mulf %141, %145 : vector<8x16x128xf32>
    %147 = vector.shape_cast %68 : vector<128x128xf32> to vector<8x16x128xf32>
    %148 = vector.shape_cast %135 : vector<256x128xf32> to vector<8x32x128xf32>
    %149 = arith.truncf %146 : vector<8x16x128xf32> to vector<8x16x128xbf16>
    %150 = arith.truncf %147 : vector<8x16x128xf32> to vector<8x16x128xbf16>
    %151 = arith.truncf %148 : vector<8x32x128xf32> to vector<8x32x128xbf16>
    %cst_49 = arith.constant dense<0.000000e+00> : vector<8x128x128xf32>
    %152 = tpu.matmul %149, %150, %cst_49 {dimension_numbers = #tpu.dot_dimension_numbers<[1], [1], [2], [2], [0, 0, 0, 2, 1, 2], [0], [0]>} : vector<8x16x128xbf16>, vector<8x16x128xbf16>, vector<8x128x128xf32> -> vector<8x128x128xf32>
    %153 = vector.shape_cast %69 : vector<128x128xf32> to vector<1x128x128xf32>
    %154 = vector.broadcast %153 : vector<1x128x128xf32> to vector<8x128x128xf32>
    %155 = arith.mulf %152, %154 : vector<8x128x128xf32>
    %156 = arith.truncf %155 : vector<8x128x128xf32> to vector<8x128x128xbf16>
    %cst_50 = arith.constant dense<0.000000e+00> : vector<8x32x128xf32>
    %157 = tpu.matmul %151, %156, %cst_50 {dimension_numbers = #tpu.dot_dimension_numbers<[2], [1], [1], [2], [0, 0, 0, 1, 1, 2], [0], [0]>} : vector<8x32x128xbf16>, vector<8x128x128xbf16>, vector<8x32x128xf32> -> vector<8x32x128xf32>
    %158 = arith.addf %0, %157 : vector<8x32x128xf32>
    %c0_51 = arith.constant 0 : index
    %c0_52 = arith.constant 0 : index
    %c0_53 = arith.constant 0 : index
    %159 = vector.load %arg14[%c0_51, %c0_52, %c0_53] : memref<8x32x128xf32, #tpu.memory_space<vmem>>, vector<8x32x128xf32>
    tpu.vector_store %arg14[%c0_51, %c0_52, %c0_53], %158 {strides = array<i32>} : memref<8x32x128xf32, #tpu.memory_space<vmem>>, vector<8x32x128xf32>,
    return
  }
  func.func @transform_0(%arg0: i32) -> (i32, i32, i32) {
    %c0_i32 = arith.constant 0 : i32
    %c0_i32_0 = arith.constant 0 : i32
    %c0_i32_1 = arith.constant 0 : i32
    return %arg0, %c0_i32, %c0_i32_0 : i32, i32, i32
  }
  func.func @transform_1(%arg0: i32) -> (i32, i32, i32) {
    %c0_i32 = arith.constant 0 : i32
    %c0_i32_0 = arith.constant 0 : i32
    %c0_i32_1 = arith.constant 0 : i32
    return %arg0, %c0_i32, %c0_i32_0 : i32, i32, i32
  }
  func.func @transform_2(%arg0: i32) -> (i32, i32) {
    %c0_i32 = arith.constant 0 : i32
    %c0_i32_0 = arith.constant 0 : i32
    %c0_i32_1 = arith.constant 0 : i32
    return %c0_i32, %c0_i32_0 : i32, i32
  }
  func.func @transform_3(%arg0: i32) -> (i32, i32) {
    %c0_i32 = arith.constant 0 : i32
    %c0_i32_0 = arith.constant 0 : i32
    %c0_i32_1 = arith.constant 0 : i32
    return %c0_i32, %c0_i32_0 : i32, i32
  }
  func.func @transform_4(%arg0: i32) -> (i32, i32) {
    %c0_i32 = arith.constant 0 : i32
    %c0_i32_0 = arith.constant 0 : i32
    %c0_i32_1 = arith.constant 0 : i32
    return %c0_i32, %c0_i32_0 : i32, i32
  }
  func.func @transform_5(%arg0: i32) -> (i32, i32) {
    %c0_i32 = arith.constant 0 : i32
    %c0_i32_0 = arith.constant 0 : i32
    %c0_i32_1 = arith.constant 0 : i32
    return %c0_i32, %c0_i32_0 : i32, i32
  }
  func.func @transform_6(%arg0: i32) -> (i32, i32) {
    %c0_i32 = arith.constant 0 : i32
    %c0_i32_0 = arith.constant 0 : i32
    %c0_i32_1 = arith.constant 0 : i32
    return %c0_i32, %c0_i32_0 : i32, i32
  }
  func.func @transform_7(%arg0: i32) -> (i32, i32) {
    %c0_i32 = arith.constant 0 : i32
    %c0_i32_0 = arith.constant 0 : i32
    %c0_i32_1 = arith.constant 0 : i32
    return %c0_i32, %c0_i32_0 : i32, i32
  }
  func.func @transform_8(%arg0: i32) -> (i32, i32) {
    %c0_i32 = arith.constant 0 : i32
    %c0_i32_0 = arith.constant 0 : i32
    %c0_i32_1 = arith.constant 0 : i32
    return %c0_i32, %c0_i32_0 : i32, i32
  }
  func.func @transform_9(%arg0: i32) -> (i32, i32) {
    %c0_i32 = arith.constant 0 : i32
    %c0_i32_0 = arith.constant 0 : i32
    %c0_i32_1 = arith.constant 0 : i32
    return %c0_i32, %c0_i32_0 : i32, i32
  }
  func.func @transform_10(%arg0: i32) -> (i32, i32) {
    %c0_i32 = arith.constant 0 : i32
    %c0_i32_0 = arith.constant 0 : i32
    %c0_i32_1 = arith.constant 0 : i32
    return %c0_i32, %c0_i32_0 : i32, i32
  }
  func.func @transform_11(%arg0: i32) -> (i32, i32) {
    %c0_i32 = arith.constant 0 : i32
    %c0_i32_0 = arith.constant 0 : i32
    %c0_i32_1 = arith.constant 0 : i32
    return %c0_i32, %c0_i32_0 : i32, i32
  }
  func.func @transform_12(%arg0: i32) -> (i32, i32) {
    %c0_i32 = arith.constant 0 : i32
    %c0_i32_0 = arith.constant 0 : i32
    %c0_i32_1 = arith.constant 0 : i32
    return %c0_i32, %c0_i32_0 : i32, i32
  }
  func.func @transform_13(%arg0: i32) -> (i32, i32, i32) {
    %c0_i32 = arith.constant 0 : i32
    %c0_i32_0 = arith.constant 0 : i32
    %c0_i32_1 = arith.constant 0 : i32
    return %arg0, %c0_i32, %c0_i32_0 : i32, i32, i32
  }
}

</mosaic_0001>

<llo_original>
// kernel: tpu_custom_call.1
$region0: #{tpu_custom_call.1}
  #allocation0 [shape = 'u32[]', space=smem, size = 0x4, offset = 0x4, fixed_abs, tag = 'smem constant byte address 0x4 - core index']
  #allocation1 [shape = 'u32[72,128]{1,0:T(1,128)}', space=vmem, size = 0x9000, scoped, tag = 'internal scratch']
  %s0 = inlined_call_operand.hbm [shape: f32[32,32,128], index: 0, kind: input, shape index: {}]
  %s1 = inlined_call_operand.hbm [shape: f32[32,16,128], index: 1, kind: input, shape index: {}]
  %s2 = inlined_call_operand.vmem [shape: f32[1,128], index: 2, kind: input, shape index: {}]
  %s3 = inlined_call_operand.vmem [shape: f32[1,128], index: 3, kind: input, shape index: {}]
  %s4 = inlined_call_operand.vmem [shape: f32[1,128], index: 4, kind: input, shape index: {}]
  %s5 = inlined_call_operand.vmem [shape: f32[1,128], index: 5, kind: input, shape index: {}]
  %s6 = inlined_call_operand.hbm [shape: bf16[128,128], index: 6, kind: input, shape index: {}]
  %s7 = inlined_call_operand.vmem [shape: f32[1,128], index: 7, kind: input, shape index: {}]
  %s8 = inlined_call_operand.hbm [shape: bf16[128,128], index: 8, kind: input, shape index: {}]
  %s9 = inlined_call_operand.vmem [shape: f32[1,128], index: 9, kind: input, shape index: {}]
  %s10 = inlined_call_operand.hbm [shape: bf16[128,128], index: 10, kind: input, shape index: {}]
  %s11 = inlined_call_operand.vmem [shape: f32[1,128], index: 11, kind: input, shape index: {}]
  %s12 = inlined_call_operand.hbm [shape: f32[128,128], index: 12, kind: input, shape index: {}]
  %s13 = inlined_call_operand.hbm [shape: f32[32,32,128], index: 13, kind: output, shape index: {}]
  %s14 = sld [smem:[#allocation0]]
  $region109: #{tpu_custom_call.1} parent=0
    _
  %s16 = ssub.s32 1, %s14
  %s17 = scalar_select 0, %s16, %s14
  $region1: #{tpu_custom_call.1} parent=0
    #allocation2 [shape = 'u8[262144]{0}', space=vmem, size = 0x40000, scoped, tag = 'input window, operand 0']
    #allocation3 [shape = 's32[2]{0}', space=sflag, size = 0x8, scoped, tag = 'scoped memory for tpu_custom_call.1']
    #allocation4 [shape = 's32[2]{0}', space=sflag, size = 0x8, scoped, tag = 'scoped memory for tpu_custom_call.1']
    #allocation5 [shape = 'u8[131072]{0}', space=vmem, size = 0x20000, scoped, tag = 'input window, operand 1']
    #allocation6 [shape = 's32[2]{0}', space=sflag, size = 0x8, scoped, tag = 'scoped memory for tpu_custom_call.1']
    #allocation7 [shape = 'u8[32768]{0}', space=vmem, size = 0x8000, scoped, tag = 'input window, operand 6, single buffered']
    #allocation8 [shape = 'u8[32768]{0}', space=vmem, size = 0x8000, scoped, tag = 'input window, operand 8, single buffered']
    #allocation9 [shape = 's32[1]{0}', space=sflag, size = 0x4, scoped, tag = 'scoped memory for tpu_custom_call.1']
    #allocation10 [shape = 'u8[32768]{0}', space=vmem, size = 0x8000, scoped, tag = 'input window, operand 10, single buffered']
    #allocation11 [shape = 'u8[65536]{0}', space=vmem, size = 0x10000, scoped, tag = 'input window, operand 12, single buffered']
    #allocation12 [shape = 's32[1]{0}', space=sflag, size = 0x4, scoped, tag = 'scoped memory for tpu_custom_call.1']
    #allocation13 [shape = 'u8[262144]{0}', space=vmem, size = 0x40000, scoped, tag = 'output window, operand 0']
    %18 = vsyncpa [#allocation3], 0
    %s19 = scalar_lea.sflag [#allocation3], 1
    %20 = vsyncpa %s19, 0
    %21 = vsyncpa [#allocation6], 0
    %s22 = scalar_lea.sflag [#allocation6], 1
    %23 = vsyncpa %s22, 0
    %24 = vsyncpa [#allocation9], 0
    %25 = vsyncpa [#allocation12], 0
    %26 = vsyncpa [#allocation4], 0
    %s27 = scalar_lea.sflag [#allocation4], 1
    %28 = vsyncpa %s27, 0
    loop: start=0, step=1, limit=6
    $region2: #{tpu_custom_call.1} parent=1 // loop_pre_header
      _
    $region3: #{tpu_custom_call.1} parent=1 // loop_header
      %s30 = sphi 0, %s34
      %p31 = scmp.ge.s32.totalorder %s30, 6
      %s40 = sphi 0, %s42
      %s43 = sphi 0, %s40
      %s44 = sphi 0, %s43
      %s60 = sphi 0, %s44
      %s66 = sphi 0, %s68
      %s69 = sphi 0, %s66
      %s70 = sphi 0, %s69
      %s86 = sphi 0, %s70
      %s90 = sphi 0, %s90
      %s92 = sphi 0, %s90
      %s93 = sphi 0, %s92
      %s107 = sphi 0, %s93
      %s111 = sphi 0, %s111
      %s113 = sphi 0, %s111
      %s114 = sphi 0, %s113
      %s128 = sphi 0, %s114
      %s132 = sphi 0, %s132
      %s134 = sphi 0, %s132
      %s135 = sphi 0, %s134
      %s149 = sphi 0, %s135
      %s153 = sphi 0, %s153
      %s155 = sphi 0, %s153
      %s156 = sphi 0, %s155
      %s170 = sphi 0, %s156
      %s174 = sphi 0, %s174
      %s176 = sphi 0, %s174
      %s177 = sphi 0, %s176
      %s191 = sphi 0, %s177
      %s195 = sphi 0, %s195
      %s197 = sphi 0, %s195
      %s198 = sphi 0, %s197
      %s212 = sphi 0, %s198
      %s216 = sphi 0, %s216
      %s218 = sphi 0, %s216
      %s219 = sphi 0, %s218
      %s233 = sphi 0, %s219
      %s237 = sphi 0, %s237
      %s239 = sphi 0, %s237
      %s240 = sphi 0, %s239
      %s254 = sphi 0, %s240
      %s258 = sphi 0, %s258
      %s260 = sphi 0, %s258
      %s261 = sphi 0, %s260
      %s275 = sphi 0, %s261
      %s279 = sphi 0, %s279
      %s281 = sphi 0, %s279
      %s282 = sphi 0, %s281
      %s296 = sphi 0, %s282
      %s300 = sphi 0, %s300
      %s302 = sphi 0, %s300
      %s303 = sphi 0, %s302
      %s317 = sphi 0, %s303
      %s323 = sphi 0, %s325
      %s326 = sphi 0, %s323
      %s327 = sphi 0, %s326
      %s343 = sphi 0, %s327
    $region4: #{tpu_custom_call.1} parent=1 // loop_header_branch
      %33 = sbr.rel (%p31) target = $region8
    $region5: #{tpu_custom_call.1} parent=1 // loop_body
      %s35 = ssub.s32 %s30, 1
      %s36 = ssub.s32 %s30, 2
      %s37 = sadd.s32 %s30, 1
      %s38 = ssub.s32 %s30, %s37
      %p39 = scmp.eq.s32.totalorder %s38, 0
      %s41 = sadd.s32 %s40, 1
      %s42 = scalar_select %p39, %s40, %s41
      %p45 = pneg %p39
      %p46 = scmp.eq.s32.totalorder %s30, 3
      %p47 = por %p45, %p46
      %p48 = scmp.ne.s32.totalorder %s40, %s43
      %p49 = scmp.eq.s32.totalorder %s30, 0
      %p50 = por %p48, %p49
      %p51 = scmp.ne.s32.totalorder %s40, %s43
      %p52 = scmp.eq.s32.totalorder %s35, 3
      %p53 = por %p51, %p52
      %p54 = scmp.ne.s32.totalorder %s43, %s44
      %p55 = scmp.eq.s32.totalorder %s35, 0
      %p56 = por %p54, %p55
      %p57 = scmp.ne.s32.totalorder %s43, %s44
      %p58 = scmp.eq.s32.totalorder %s36, 3
      %p59 = por %p57, %p58
      %p61 = scmp.ne.s32.totalorder %s44, %s60
      %p62 = scmp.eq.s32.totalorder %s36, 0
      %p63 = por %p61, %p62
      %s64 = ssub.s32 %s30, %s37
      %p65 = scmp.eq.s32.totalorder %s64, 0
      %s67 = sadd.s32 %s66, 1
      %s68 = scalar_select %p65, %s66, %s67
      %p71 = pneg %p65
      %p72 = scmp.eq.s32.totalorder %s30, 3
      %p73 = por %p71, %p72
      %p74 = scmp.ne.s32.totalorder %s66, %s69
      %p75 = scmp.eq.s32.totalorder %s30, 0
      %p76 = por %p74, %p75
      %p77 = scmp.ne.s32.totalorder %s66, %s69
      %p78 = scmp.eq.s32.totalorder %s35, 3
      %p79 = por %p77, %p78
      %p80 = scmp.ne.s32.totalorder %s69, %s70
      %p81 = scmp.eq.s32.totalorder %s35, 0
      %p82 = por %p80, %p81
      %p83 = scmp.ne.s32.totalorder %s69, %s70
      %p84 = scmp.eq.s32.totalorder %s36, 3
      %p85 = por %p83, %p84
      %p87 = scmp.ne.s32.totalorder %s70, %s86
      %p88 = scmp.eq.s32.totalorder %s36, 0
      %p89 = por %p87, %p88
      %s91 = sadd.s32 %s90, 1
      %p94 = scmp.eq.s32.totalorder %s30, 3
      %p95 = scmp.ne.s32.totalorder %s90, %s92
      %p96 = scmp.eq.s32.totalorder %s30, 0
      %p97 = por %p95, %p96
      %p98 = scmp.ne.s32.totalorder %s90, %s92
      %p99 = scmp.eq.s32.totalorder %s35, 3
      %p100 = por %p98, %p99
      %p101 = scmp.ne.s32.totalorder %s92, %s93
      %p102 = scmp.eq.s32.totalorder %s35, 0
      %p103 = por %p101, %p102
      %p104 = scmp.ne.s32.totalorder %s92, %s93
      %p105 = scmp.eq.s32.totalorder %s36, 3
      %p106 = por %p104, %p105
      %p108 = scmp.ne.s32.totalorder %s93, %s107
      %p109 = scmp.eq.s32.totalorder %s36, 0
      %p110 = por %p108, %p109
      %s112 = sadd.s32 %s111, 1
      %p115 = scmp.eq.s32.totalorder %s30, 3
      %p116 = scmp.ne.s32.totalorder %s111, %s113
      %p117 = scmp.eq.s32.totalorder %s30, 0
      %p118 = por %p116, %p117
      %p119 = scmp.ne.s32.totalorder %s111, %s113
      %p120 = scmp.eq.s32.totalorder %s35, 3
      %p121 = por %p119, %p120
      %p122 = scmp.ne.s32.totalorder %s113, %s114
      %p123 = scmp.eq.s32.totalorder %s35, 0
      %p124 = por %p122, %p123
      %p125 = scmp.ne.s32.totalorder %s113, %s114
      %p126 = scmp.eq.s32.totalorder %s36, 3
      %p127 = por %p125, %p126
      %p129 = scmp.ne.s32.totalorder %s114, %s128
      %p130 = scmp.eq.s32.totalorder %s36, 0
      %p131 = por %p129, %p130
      %s133 = sadd.s32 %s132, 1
      %p136 = scmp.eq.s32.totalorder %s30, 3
      %p137 = scmp.ne.s32.totalorder %s132, %s134
      %p138 = scmp.eq.s32.totalorder %s30, 0
      %p139 = por %p137, %p138
      %p140 = scmp.ne.s32.totalorder %s132, %s134
      %p141 = scmp.eq.s32.totalorder %s35, 3
      %p142 = por %p140, %p141
      %p143 = scmp.ne.s32.totalorder %s134, %s135
      %p144 = scmp.eq.s32.totalorder %s35, 0
      %p145 = por %p143, %p144
      %p146 = scmp.ne.s32.totalorder %s134, %s135
      %p147 = scmp.eq.s32.totalorder %s36, 3
      %p148 = por %p146, %p147
      %p150 = scmp.ne.s32.totalorder %s135, %s149
      %p151 = scmp.eq.s32.totalorder %s36, 0
      %p152 = por %p150, %p151
      %s154 = sadd.s32 %s153, 1
      %p157 = scmp.eq.s32.totalorder %s30, 3
      %p158 = scmp.ne.s32.totalorder %s153, %s155
      %p159 = scmp.eq.s32.totalorder %s30, 0
      %p160 = por %p158, %p159
      %p161 = scmp.ne.s32.totalorder %s153, %s155
      %p162 = scmp.eq.s32.totalorder %s35, 3
      %p163 = por %p161, %p162
      %p164 = scmp.ne.s32.totalorder %s155, %s156
      %p165 = scmp.eq.s32.totalorder %s35, 0
      %p166 = por %p164, %p165
      %p167 = scmp.ne.s32.totalorder %s155, %s156
      %p168 = scmp.eq.s32.totalorder %s36, 3
      %p169 = por %p167, %p168
      %p171 = scmp.ne.s32.totalorder %s156, %s170
      %p172 = scmp.eq.s32.totalorder %s36, 0
      %p173 = por %p171, %p172
      %s175 = sadd.s32 %s174, 1
      %p178 = scmp.eq.s32.totalorder %s30, 3
      %p179 = scmp.ne.s32.totalorder %s174, %s176
      %p180 = scmp.eq.s32.totalorder %s30, 0
      %p181 = por %p179, %p180
      %p182 = scmp.ne.s32.totalorder %s174, %s176
      %p183 = scmp.eq.s32.totalorder %s35, 3
      %p184 = por %p182, %p183
      %p185 = scmp.ne.s32.totalorder %s176, %s177
      %p186 = scmp.eq.s32.totalorder %s35, 0
      %p187 = por %p185, %p186
      %p188 = scmp.ne.s32.totalorder %s176, %s177
      %p189 = scmp.eq.s32.totalorder %s36, 3
      %p190 = por %p188, %p189
      %p192 = scmp.ne.s32.totalorder %s177, %s191
      %p193 = scmp.eq.s32.totalorder %s36, 0
      %p194 = por %p192, %p193
      %s196 = sadd.s32 %s195, 1
      %p199 = scmp.eq.s32.totalorder %s30, 3
      %p200 = scmp.ne.s32.totalorder %s195, %s197
      %p201 = scmp.eq.s32.totalorder %s30, 0
      %p202 = por %p200, %p201
      %p203 = scmp.ne.s32.totalorder %s195, %s197
      %p204 = scmp.eq.s32.totalorder %s35, 3
      %p205 = por %p203, %p204
      %p206 = scmp.ne.s32.totalorder %s197, %s198
      %p207 = scmp.eq.s32.totalorder %s35, 0
      %p208 = por %p206, %p207
      %p209 = scmp.ne.s32.totalorder %s197, %s198
      %p210 = scmp.eq.s32.totalorder %s36, 3
      %p211 = por %p209, %p210
      %p213 = scmp.ne.s32.totalorder %s198, %s212
      %p214 = scmp.eq.s32.totalorder %s36, 0
      %p215 = por %p213, %p214
      %s217 = sadd.s32 %s216, 1
      %p220 = scmp.eq.s32.totalorder %s30, 3
      %p221 = scmp.ne.s32.totalorder %s216, %s218
      %p222 = scmp.eq.s32.totalorder %s30, 0
      %p223 = por %p221, %p222
      %p224 = scmp.ne.s32.totalorder %s216, %s218
      %p225 = scmp.eq.s32.totalorder %s35, 3
      %p226 = por %p224, %p225
      %p227 = scmp.ne.s32.totalorder %s218, %s219
      %p228 = scmp.eq.s32.totalorder %s35, 0
      %p229 = por %p227, %p228
      %p230 = scmp.ne.s32.totalorder %s218, %s219
      %p231 = scmp.eq.s32.totalorder %s36, 3
      %p232 = por %p230, %p231
      %p234 = scmp.ne.s32.totalorder %s219, %s233
      %p235 = scmp.eq.s32.totalorder %s36, 0
      %p236 = por %p234, %p235
      %s238 = sadd.s32 %s237, 1
      %p241 = scmp.eq.s32.totalorder %s30, 3
      %p242 = scmp.ne.s32.totalorder %s237, %s239
      %p243 = scmp.eq.s32.totalorder %s30, 0
      %p244 = por %p242, %p243
      %p245 = scmp.ne.s32.totalorder %s237, %s239
      %p246 = scmp.eq.s32.totalorder %s35, 3
      %p247 = por %p245, %p246
      %p248 = scmp.ne.s32.totalorder %s239, %s240
      %p249 = scmp.eq.s32.totalorder %s35, 0
      %p250 = por %p248, %p249
      %p251 = scmp.ne.s32.totalorder %s239, %s240
      %p252 = scmp.eq.s32.totalorder %s36, 3
      %p253 = por %p251, %p252
      %p255 = scmp.ne.s32.totalorder %s240, %s254
      %p256 = scmp.eq.s32.totalorder %s36, 0
      %p257 = por %p255, %p256
      %s259 = sadd.s32 %s258, 1
      %p262 = scmp.eq.s32.totalorder %s30, 3
      %p263 = scmp.ne.s32.totalorder %s258, %s260
      %p264 = scmp.eq.s32.totalorder %s30, 0
      %p265 = por %p263, %p264
      %p266 = scmp.ne.s32.totalorder %s258, %s260
      %p267 = scmp.eq.s32.totalorder %s35, 3
      %p268 = por %p266, %p267
      %p269 = scmp.ne.s32.totalorder %s260, %s261
      %p270 = scmp.eq.s32.totalorder %s35, 0
      %p271 = por %p269, %p270
      %p272 = scmp.ne.s32.totalorder %s260, %s261
      %p273 = scmp.eq.s32.totalorder %s36, 3
      %p274 = por %p272, %p273
      %p276 = scmp.ne.s32.totalorder %s261, %s275
      %p277 = scmp.eq.s32.totalorder %s36, 0
      %p278 = por %p276, %p277
      %s280 = sadd.s32 %s279, 1
      %p283 = scmp.eq.s32.totalorder %s30, 3
      %p284 = scmp.ne.s32.totalorder %s279, %s281
      %p285 = scmp.eq.s32.totalorder %s30, 0
      %p286 = por %p284, %p285
      %p287 = scmp.ne.s32.totalorder %s279, %s281
      %p288 = scmp.eq.s32.totalorder %s35, 3
      %p289 = por %p287, %p288
      %p290 = scmp.ne.s32.totalorder %s281, %s282
      %p291 = scmp.eq.s32.totalorder %s35, 0
      %p292 = por %p290, %p291
      %p293 = scmp.ne.s32.totalorder %s281, %s282
      %p294 = scmp.eq.s32.totalorder %s36, 3
      %p295 = por %p293, %p294
      %p297 = scmp.ne.s32.totalorder %s282, %s296
      %p298 = scmp.eq.s32.totalorder %s36, 0
      %p299 = por %p297, %p298
      %s301 = sadd.s32 %s300, 1
      %p304 = scmp.eq.s32.totalorder %s30, 3
      %p305 = scmp.ne.s32.totalorder %s300, %s302
      %p306 = scmp.eq.s32.totalorder %s30, 0
      %p307 = por %p305, %p306
      %p308 = scmp.ne.s32.totalorder %s300, %s302
      %p309 = scmp.eq.s32.totalorder %s35, 3
      %p310 = por %p308, %p309
      %p311 = scmp.ne.s32.totalorder %s302, %s303
      %p312 = scmp.eq.s32.totalorder %s35, 0
      %p313 = por %p311, %p312
      %p314 = scmp.ne.s32.totalorder %s302, %s303
      %p315 = scmp.eq.s32.totalorder %s36, 3
      %p316 = por %p314, %p315
      %p318 = scmp.ne.s32.totalorder %s303, %s317
      %p319 = scmp.eq.s32.totalorder %s36, 0
      %p320 = por %p318, %p319
      %s321 = ssub.s32 %s30, %s37
      %p322 = scmp.eq.s32.totalorder %s321, 0
      %s324 = sadd.s32 %s323, 1
      %s325 = scalar_select %p322, %s323, %s324
      %p328 = pneg %p322
      %p329 = scmp.eq.s32.totalorder %s30, 3
      %p330 = por %p328, %p329
      %p331 = scmp.ne.s32.totalorder %s323, %s326
      %p332 = scmp.eq.s32.totalorder %s30, 0
      %p333 = por %p331, %p332
      %p334 = scmp.ne.s32.totalorder %s323, %s326
      %p335 = scmp.eq.s32.totalorder %s35, 3
      %p336 = por %p334, %p335
      %p337 = scmp.ne.s32.totalorder %s326, %s327
      %p338 = scmp.eq.s32.totalorder %s35, 0
      %p339 = por %p337, %p338
      %p340 = scmp.ne.s32.totalorder %s326, %s327
      %p341 = scmp.eq.s32.totalorder %s36, 3
      %p342 = por %p340, %p341
      %p344 = scmp.ne.s32.totalorder %s327, %s343
      %p345 = scmp.eq.s32.totalorder %s36, 0
      %p346 = por %p344, %p345
      %p347 = scmp.le.s32.totalorder 1, %s30
      %p348 = scmp.lt.s32.totalorder %s30, 5
      %p349 = pnand %p347, %p348
      %p350 = pneg %p349
      // Predicated region
      $region9: #{tpu_custom_call.1} parent=5 // pred_check
        _
      $region10: #{tpu_custom_call.1} parent=5 // pred_check_branch
        %352 = sbr.rel (%p349) target = $region12
      $region11: #{tpu_custom_call.1} parent=5 // pred_region
        %s353 = ssub.s32 %s30, 1
        // Predicated region
        $region13: #{tpu_custom_call.1} parent=11 // pred_check
          %p354 = pneg %p103
        $region14: #{tpu_custom_call.1} parent=11 // pred_check_branch
          %356 = sbr.rel (%p354) target = $region16
        $region15: #{tpu_custom_call.1} parent=11 // pred_region
          _
        $region16: #{tpu_custom_call.1} parent=11 // pred_fallthru
          _
        // Predicated region
        $region17: #{tpu_custom_call.1} parent=11 // pred_check
          %p357 = pneg %p124
        $region18: #{tpu_custom_call.1} parent=11 // pred_check_branch
          %359 = sbr.rel (%p357) target = $region20
        $region19: #{tpu_custom_call.1} parent=11 // pred_region
          _
        $region20: #{tpu_custom_call.1} parent=11 // pred_fallthru
          _
        // Predicated region
        $region21: #{tpu_custom_call.1} parent=11 // pred_check
          %p360 = pneg %p145
        $region22: #{tpu_custom_call.1} parent=11 // pred_check_branch
          %362 = sbr.rel (%p360) target = $region24
        $region23: #{tpu_custom_call.1} parent=11 // pred_region
          _
        $region24: #{tpu_custom_call.1} parent=11 // pred_fallthru
          _
        // Predicated region
        $region25: #{tpu_custom_call.1} parent=11 // pred_check
          %p363 = pneg %p166
        $region26: #{tpu_custom_call.1} parent=11 // pred_check_branch
          %365 = sbr.rel (%p363) target = $region28
        $region27: #{tpu_custom_call.1} parent=11 // pred_region
          _
        $region28: #{tpu_custom_call.1} parent=11 // pred_fallthru
          _
        // Predicated region
        $region29: #{tpu_custom_call.1} parent=11 // pred_check
          %p366 = pneg %p187
        $region30: #{tpu_custom_call.1} parent=11 // pred_check_branch
          %368 = sbr.rel (%p366) target = $region32
        $region31: #{tpu_custom_call.1} parent=11 // pred_region
          %370 = vsyncadd [#allocation6], 0
          %s371 = sshll.u32 %s6, 4
          %s372 = int_to_ptr.hbm [resolvable:$true] %s371
          %s373 = sshll.u32 [#allocation7], 4
          %s374 = int_to_ptr.vmem [resolvable:$true] %s373
          %379 = dma.hbm_to_vmem [thread:$0]  %s372, 1024, %s374, [#allocation6], 64, 64, 4
        $region32: #{tpu_custom_call.1} parent=11 // pred_fallthru
          _
        // Predicated region
        $region33: #{tpu_custom_call.1} parent=11 // pred_check
          %p380 = pneg %p208
        $region34: #{tpu_custom_call.1} parent=11 // pred_check_branch
          %382 = sbr.rel (%p380) target = $region36
        $region35: #{tpu_custom_call.1} parent=11 // pred_region
          _
        $region36: #{tpu_custom_call.1} parent=11 // pred_fallthru
          _
        // Predicated region
        $region37: #{tpu_custom_call.1} parent=11 // pred_check
          %p383 = pneg %p229
        $region38: #{tpu_custom_call.1} parent=11 // pred_check_branch
          %385 = sbr.rel (%p383) target = $region40
        $region39: #{tpu_custom_call.1} parent=11 // pred_region
          %387 = vsyncadd [#allocation9], 0
          %s388 = sshll.u32 %s8, 4
          %s389 = int_to_ptr.hbm [resolvable:$true] %s388
          %s390 = sshll.u32 [#allocation8], 4
          %s391 = int_to_ptr.vmem [resolvable:$true] %s390
          %396 = dma.hbm_to_vmem [thread:$0]  %s389, 1024, %s391, [#allocation9], 64, 64, 4
        $region40: #{tpu_custom_call.1} parent=11 // pred_fallthru
          _
        // Predicated region
        $region41: #{tpu_custom_call.1} parent=11 // pred_check
          %p397 = pneg %p250
        $region42: #{tpu_custom_call.1} parent=11 // pred_check_branch
          %399 = sbr.rel (%p397) target = $region44
        $region43: #{tpu_custom_call.1} parent=11 // pred_region
          _
        $region44: #{tpu_custom_call.1} parent=11 // pred_fallthru
          _
        // Predicated region
        $region45: #{tpu_custom_call.1} parent=11 // pred_check
          %p400 = pneg %p271
        $region46: #{tpu_custom_call.1} parent=11 // pred_check_branch
          %402 = sbr.rel (%p400) target = $region48
        $region47: #{tpu_custom_call.1} parent=11 // pred_region
          %404 = vsyncadd [#allocation9], 0
          %s405 = sshll.u32 %s10, 4
          %s406 = int_to_ptr.hbm [resolvable:$true] %s405
          %s407 = sshll.u32 [#allocation10], 4
          %s408 = int_to_ptr.vmem [resolvable:$true] %s407
          %413 = dma.hbm_to_vmem [thread:$0]  %s406, 1024, %s408, [#allocation9], 64, 64, 4
        $region48: #{tpu_custom_call.1} parent=11 // pred_fallthru
          _
        // Predicated region
        $region49: #{tpu_custom_call.1} parent=11 // pred_check
          %p414 = pneg %p292
        $region50: #{tpu_custom_call.1} parent=11 // pred_check_branch
          %416 = sbr.rel (%p414) target = $region52
        $region51: #{tpu_custom_call.1} parent=11 // pred_region
          _
        $region52: #{tpu_custom_call.1} parent=11 // pred_fallthru
          _
        // Predicated region
        $region53: #{tpu_custom_call.1} parent=11 // pred_check
          %p417 = pneg %p313
        $region54: #{tpu_custom_call.1} parent=11 // pred_check_branch
          %419 = sbr.rel (%p417) target = $region56
        $region55: #{tpu_custom_call.1} parent=11 // pred_region
          %421 = vsyncadd [#allocation12], 0
          %s422 = sshll.u32 %s12, 4
          %s423 = int_to_ptr.hbm [resolvable:$true] %s422
          %s424 = sshll.u32 [#allocation11], 4
          %s425 = int_to_ptr.vmem [resolvable:$true] %s424
          %430 = dma.hbm_to_vmem [thread:$0]  %s423, 2048, %s425, [#allocation12], 128, 128, 8
        $region56: #{tpu_custom_call.1} parent=11 // pred_fallthru
          _
      $region12: #{tpu_custom_call.1} parent=5 // pred_fallthru
        _
      %p431 = scmp.lt.s32.totalorder %s30, 4
      // Predicated region
      $region57: #{tpu_custom_call.1} parent=5 // pred_check
        %p432 = pneg %p431
      $region58: #{tpu_custom_call.1} parent=5 // pred_check_branch
        %434 = sbr.rel (%p432) target = $region60
      $region59: #{tpu_custom_call.1} parent=5 // pred_region
        // Predicated region
        $region61: #{tpu_custom_call.1} parent=59 // pred_check
          %p435 = pneg %p50
        $region62: #{tpu_custom_call.1} parent=59 // pred_check_branch
          %437 = sbr.rel (%p435) target = $region64
        $region63: #{tpu_custom_call.1} parent=59 // pred_region
          %s438 = sand.u32 %s40, 1
          %s439 = scalar_lea.sflag [#allocation3], %s438
          %s440 = sand.u32 %s40, 1
          %s441 = smul.addr %s440, 256
          %s442 = scalar_lea.vmem [#allocation2], %s441
          %s443 = smul.u32 8, %s30
          %445 = vsyncadd %s439, 0
          %s446 = smul.addr %s443, 4
          %s447 = smul.addr %s446, 8
          %s448 = scalar_lea.hbm %s0, %s447
          %s449 = sshll.u32 %s448, 4
          %s450 = int_to_ptr.hbm [resolvable:$true] %s449
          %s451 = sshll.u32 %s442, 4
          %s452 = int_to_ptr.vmem [resolvable:$true] %s451
          %457 = dma.hbm_to_vmem [thread:$0]  %s450, 4096, %s452, %s439, 128, 128, 8
        $region64: #{tpu_custom_call.1} parent=59 // pred_fallthru
          _
        // Predicated region
        $region65: #{tpu_custom_call.1} parent=59 // pred_check
          %p458 = pneg %p76
        $region66: #{tpu_custom_call.1} parent=59 // pred_check_branch
          %460 = sbr.rel (%p458) target = $region68
        $region67: #{tpu_custom_call.1} parent=59 // pred_region
          %s461 = sand.u32 %s30, 1
          %s462 = scalar_lea.sflag [#allocation6], %s461
          %s463 = sand.u32 %s66, 1
          %s464 = smul.addr %s463, 128
          %s465 = scalar_lea.vmem [#allocation5], %s464
          %s466 = smul.u32 8, %s30
          %468 = vsyncadd %s462, 0
          %s469 = smul.addr %s466, 2
          %s470 = smul.addr %s469, 8
          %s471 = scalar_lea.hbm %s1, %s470
          %s472 = sshll.u32 %s471, 4
          %s473 = int_to_ptr.hbm [resolvable:$true] %s472
          %s474 = sshll.u32 %s465, 4
          %s475 = int_to_ptr.vmem [resolvable:$true] %s474
          %480 = dma.hbm_to_vmem [thread:$0]  %s473, 2048, %s475, %s462, 128, 128, 8
        $region68: #{tpu_custom_call.1} parent=59 // pred_fallthru
          _
      $region60: #{tpu_custom_call.1} parent=5 // pred_fallthru
        _
      %p481 = scmp.le.s32.totalorder 1, %s30
      %p482 = scmp.lt.s32.totalorder %s30, 5
      %p483 = pnand %p481, %p482
      %p484 = pneg %p483
      // Predicated region
      $region69: #{tpu_custom_call.1} parent=5 // pred_check
        _
      $region70: #{tpu_custom_call.1} parent=5 // pred_check_branch
        %486 = sbr.rel (%p483) target = $region72
      $region71: #{tpu_custom_call.1} parent=5 // pred_region
        %s487 = ssub.s32 %s30, 1
        %s488 = sand.u32 %s43, 1
        %s489 = scalar_lea.sflag [#allocation3], %s488
        %s490 = sand.u32 %s43, 1
        %s491 = smul.addr %s490, 256
        %s492 = scalar_lea.vmem [#allocation2], %s491
        // Predicated region
        $region73: #{tpu_custom_call.1} parent=71 // pred_check
          %p493 = pneg %p56
        $region74: #{tpu_custom_call.1} parent=71 // pred_check_branch
          %495 = sbr.rel (%p493) target = $region76
        $region75: #{tpu_custom_call.1} parent=71 // pred_region
          %497 = dma.done %s489, 4096
        $region76: #{tpu_custom_call.1} parent=71 // pred_fallthru
          _
        %s498 = sand.u32 %s35, 1
        %s499 = scalar_lea.sflag [#allocation6], %s498
        %s500 = sand.u32 %s69, 1
        %s501 = smul.addr %s500, 128
        %s502 = scalar_lea.vmem [#allocation5], %s501
        // Predicated region
        $region77: #{tpu_custom_call.1} parent=71 // pred_check
          %p503 = pneg %p82
        $region78: #{tpu_custom_call.1} parent=71 // pred_check_branch
          %505 = sbr.rel (%p503) target = $region80
        $region79: #{tpu_custom_call.1} parent=71 // pred_region
          %507 = dma.done %s499, 2048
        $region80: #{tpu_custom_call.1} parent=71 // pred_fallthru
          _
        // Predicated region
        $region81: #{tpu_custom_call.1} parent=71 // pred_check
          %p508 = pneg %p187
        $region82: #{tpu_custom_call.1} parent=71 // pred_check_branch
          %510 = sbr.rel (%p508) target = $region84
        $region83: #{tpu_custom_call.1} parent=71 // pred_region
          %512 = dma.done [#allocation6], 1024
        $region84: #{tpu_custom_call.1} parent=71 // pred_fallthru
          _
        // Predicated region
        $region85: #{tpu_custom_call.1} parent=71 // pred_check
          %p513 = pneg %p229
        $region86: #{tpu_custom_call.1} parent=71 // pred_check_branch
          %515 = sbr.rel (%p513) target = $region88
        $region87: #{tpu_custom_call.1} parent=71 // pred_region
          %517 = dma.done [#allocation9], 1024
        $region88: #{tpu_custom_call.1} parent=71 // pred_fallthru
          _
        // Predicated region
        $region89: #{tpu_custom_call.1} parent=71 // pred_check
          %p518 = pneg %p271
        $region90: #{tpu_custom_call.1} parent=71 // pred_check_branch
          %520 = sbr.rel (%p518) target = $region92
        $region91: #{tpu_custom_call.1} parent=71 // pred_region
          %522 = dma.done [#allocation9], 1024
        $region92: #{tpu_custom_call.1} parent=71 // pred_fallthru
          _
        // Predicated region
        $region93: #{tpu_custom_call.1} parent=71 // pred_check
          %p523 = pneg %p313
        $region94: #{tpu_custom_call.1} parent=71 // pred_check_branch
          %525 = sbr.rel (%p523) target = $region96
        $region95: #{tpu_custom_call.1} parent=71 // pred_region
          %527 = dma.done [#allocation12], 2048
        $region96: #{tpu_custom_call.1} parent=71 // pred_fallthru
          _
        %s528 = sand.u32 %s43, 1
        %s529 = scalar_lea.sflag [#allocation3], %s528
        %s530 = sand.u32 %s43, 1
        %s531 = smul.addr %s530, 256
        %s532 = scalar_lea.vmem [#allocation2], %s531
        %p533 = pneg %p56
        %p534 = pneg %p53
        %s535 = sand.u32 %s35, 1
        %s536 = scalar_lea.sflag [#allocation6], %s535
        %s537 = sand.u32 %s69, 1
        %s538 = smul.addr %s537, 128
        %s539 = scalar_lea.vmem [#allocation5], %s538
        %p540 = pneg %p82
        %p541 = pneg %p79
        %p542 = pneg %p103
        %p543 = pneg %p100
        %p544 = pneg %p124
        %p545 = pneg %p121
        %p546 = pneg %p145
        %p547 = pneg %p142
        %p548 = pneg %p166
        %p549 = pneg %p163
        %p550 = pneg %p187
        %p551 = pneg %p184
        %p552 = pneg %p208
        %p553 = pneg %p205
        %p554 = pneg %p229
        %p555 = pneg %p226
        %p556 = pneg %p250
        %p557 = pneg %p247
        %p558 = pneg %p271
        %p559 = pneg %p268
        %p560 = pneg %p292
        %p561 = pneg %p289
        %p562 = pneg %p313
        %p563 = pneg %p310
        %p564 = pneg %p339
        %p565 = pneg %p336
        %s566 = sand.u32 %s326, 1
        %s567 = scalar_lea.sflag [#allocation4], %s566
        %s568 = sand.u32 %s326, 1
        %s569 = smul.addr %s568, 256
        %s570 = scalar_lea.vmem [#allocation13], %s569
        %s571 = smul.u32 8, %s35
        %s572 = smul.u32 8, %s35
        %s573 = smul.u32 8, %s35
        %v575 = vld [vmem:[%s492] sm:$0xff]
        %v576 = vld [vmem:[%s492 + $0x8] sm:$0xff]
        %v577 = vld [vmem:[%s492 + $0x10] sm:$0xff]
        %v578 = vld [vmem:[%s492 + $0x18] sm:$0xff]
        %v579 = vld [vmem:[%s492 + $0x20] sm:$0xff]
        %v580 = vld [vmem:[%s492 + $0x28] sm:$0xff]
        %v581 = vld [vmem:[%s492 + $0x30] sm:$0xff]
        %v582 = vld [vmem:[%s492 + $0x38] sm:$0xff]
        %v583 = vld [vmem:[%s492 + $0x40] sm:$0xff]
        %v584 = vld [vmem:[%s492 + $0x48] sm:$0xff]
        %v585 = vld [vmem:[%s492 + $0x50] sm:$0xff]
        %v586 = vld [vmem:[%s492 + $0x58] sm:$0xff]
        %v587 = vld [vmem:[%s492 + $0x60] sm:$0xff]
        %v588 = vld [vmem:[%s492 + $0x68] sm:$0xff]
        %v589 = vld [vmem:[%s492 + $0x70] sm:$0xff]
        %v590 = vld [vmem:[%s492 + $0x78] sm:$0xff]
        %v591 = vld [vmem:[%s492 + $0x80] sm:$0xff]
        %v592 = vld [vmem:[%s492 + $0x88] sm:$0xff]
        %v593 = vld [vmem:[%s492 + $0x90] sm:$0xff]
        %v594 = vld [vmem:[%s492 + $0x98] sm:$0xff]
        %v595 = vld [vmem:[%s492 + $0xa0] sm:$0xff]
        %v596 = vld [vmem:[%s492 + $0xa8] sm:$0xff]
        %v597 = vld [vmem:[%s492 + $0xb0] sm:$0xff]
        %v598 = vld [vmem:[%s492 + $0xb8] sm:$0xff]
        %v599 = vld [vmem:[%s492 + $0xc0] sm:$0xff]
        %v600 = vld [vmem:[%s492 + $0xc8] sm:$0xff]
        %v601 = vld [vmem:[%s492 + $0xd0] sm:$0xff]
        %v602 = vld [vmem:[%s492 + $0xd8] sm:$0xff]
        %v603 = vld [vmem:[%s492 + $0xe0] sm:$0xff]
        %v604 = vld [vmem:[%s492 + $0xe8] sm:$0xff]
        %v605 = vld [vmem:[%s492 + $0xf0] sm:$0xff]
        %v606 = vld [vmem:[%s492 + $0xf8] sm:$0xff]
        %v607 = vld [vmem:[%s502] sm:$0xff]
        %v608 = vld [vmem:[%s502 + $0x8] sm:$0xff]
        %v609 = vld [vmem:[%s502 + $0x10] sm:$0xff]
        %v610 = vld [vmem:[%s502 + $0x18] sm:$0xff]
        %v611 = vld [vmem:[%s502 + $0x20] sm:$0xff]
        %v612 = vld [vmem:[%s502 + $0x28] sm:$0xff]
        %v613 = vld [vmem:[%s502 + $0x30] sm:$0xff]
        %v614 = vld [vmem:[%s502 + $0x38] sm:$0xff]
        %v615 = vld [vmem:[%s502 + $0x40] sm:$0xff]
        %v616 = vld [vmem:[%s502 + $0x48] sm:$0xff]
        %v617 = vld [vmem:[%s502 + $0x50] sm:$0xff]
        %v618 = vld [vmem:[%s502 + $0x58] sm:$0xff]
        %v619 = vld [vmem:[%s502 + $0x60] sm:$0xff]
        %v620 = vld [vmem:[%s502 + $0x68] sm:$0xff]
        %v621 = vld [vmem:[%s502 + $0x70] sm:$0xff]
        %v622 = vld [vmem:[%s502 + $0x78] sm:$0xff]
        %v623 = vld [vmem:[%s2] sm:$0x1]
        %v624 = vld [vmem:[%s3] sm:$0x1]
        %625 = vadd.xlane.f32.xlu0 %v575
        %v626 = vpop.xlane.xlu0 %625
        %627 = vadd.xlane.f32.xlu0 %v576
        %v628 = vpop.xlane.xlu0 %627
        %629 = vadd.xlane.f32.xlu0 %v577
        %v630 = vpop.xlane.xlu0 %629
        %631 = vadd.xlane.f32.xlu0 %v578
        %v632 = vpop.xlane.xlu0 %631
        %633 = vadd.xlane.f32.xlu0 %v579
        %v634 = vpop.xlane.xlu0 %633
        %635 = vadd.xlane.f32.xlu0 %v580
        %v636 = vpop.xlane.xlu0 %635
        %637 = vadd.xlane.f32.xlu0 %v581
        %v638 = vpop.xlane.xlu0 %637
        %639 = vadd.xlane.f32.xlu0 %v582
        %v640 = vpop.xlane.xlu0 %639
        %641 = vadd.xlane.f32.xlu0 %v583
        %v642 = vpop.xlane.xlu0 %641
        %643 = vadd.xlane.f32.xlu0 %v584
        %v644 = vpop.xlane.xlu0 %643
        %645 = vadd.xlane.f32.xlu0 %v585
        %v646 = vpop.xlane.xlu0 %645
        %647 = vadd.xlane.f32.xlu0 %v586
        %v648 = vpop.xlane.xlu0 %647
        %649 = vadd.xlane.f32.xlu0 %v587
        %v650 = vpop.xlane.xlu0 %649
        %651 = vadd.xlane.f32.xlu0 %v588
        %v652 = vpop.xlane.xlu0 %651
        %653 = vadd.xlane.f32.xlu0 %v589
        %v654 = vpop.xlane.xlu0 %653
        %655 = vadd.xlane.f32.xlu0 %v590
        %v656 = vpop.xlane.xlu0 %655
        %657 = vadd.xlane.f32.xlu0 %v591
        %v658 = vpop.xlane.xlu0 %657
        %659 = vadd.xlane.f32.xlu0 %v592
        %v660 = vpop.xlane.xlu0 %659
        %661 = vadd.xlane.f32.xlu0 %v593
        %v662 = vpop.xlane.xlu0 %661
        %663 = vadd.xlane.f32.xlu0 %v594
        %v664 = vpop.xlane.xlu0 %663
        %665 = vadd.xlane.f32.xlu0 %v595
        %v666 = vpop.xlane.xlu0 %665
        %667 = vadd.xlane.f32.xlu0 %v596
        %v668 = vpop.xlane.xlu0 %667
        %669 = vadd.xlane.f32.xlu0 %v597
        %v670 = vpop.xlane.xlu0 %669
        %671 = vadd.xlane.f32.xlu0 %v598
        %v672 = vpop.xlane.xlu0 %671
        %673 = vadd.xlane.f32.xlu0 %v599
        %v674 = vpop.xlane.xlu0 %673
        %675 = vadd.xlane.f32.xlu0 %v600
        %v676 = vpop.xlane.xlu0 %675
        %677 = vadd.xlane.f32.xlu0 %v601
        %v678 = vpop.xlane.xlu0 %677
        %679 = vadd.xlane.f32.xlu0 %v602
        %v680 = vpop.xlane.xlu0 %679
        %681 = vadd.xlane.f32.xlu0 %v603
        %v682 = vpop.xlane.xlu0 %681
        %683 = vadd.xlane.f32.xlu0 %v604
        %v684 = vpop.xlane.xlu0 %683
        %685 = vadd.xlane.f32.xlu0 %v605
        %v686 = vpop.xlane.xlu0 %685
        %687 = vadd.xlane.f32.xlu0 %v606
        %v688 = vpop.xlane.xlu0 %687
        %v689 = vrcp.pop 128.0
        %v690 = vmul.f32 128.0, %v689
        %v691 = vsub.f32 1.0, %v690
        %v692 = vmul.f32 %v689, %v691
        %v693 = vadd.f32 %v689, %v692
        %vm694 = vweird.f32 %v689
        %v695 = vsel %vm694, %v689, %v693
        %v696 = vmul.f32 %v626, %v695
        %v697 = vmul.f32 %v628, %v695
        %v698 = vmul.f32 %v630, %v695
        %v699 = vmul.f32 %v632, %v695
        %v700 = vmul.f32 %v634, %v695
        %v701 = vmul.f32 %v636, %v695
        %v702 = vmul.f32 %v638, %v695
        %v703 = vmul.f32 %v640, %v695
        %v704 = vmul.f32 %v642, %v695
        %v705 = vmul.f32 %v644, %v695
        %v706 = vmul.f32 %v646, %v695
        %v707 = vmul.f32 %v648, %v695
        %v708 = vmul.f32 %v650, %v695
        %v709 = vmul.f32 %v652, %v695
        %v710 = vmul.f32 %v654, %v695
        %v711 = vmul.f32 %v656, %v695
        %v712 = vmul.f32 %v658, %v695
        %v713 = vmul.f32 %v660, %v695
        %v714 = vmul.f32 %v662, %v695
        %v715 = vmul.f32 %v664, %v695
        %v716 = vmul.f32 %v666, %v695
        %v717 = vmul.f32 %v668, %v695
        %v718 = vmul.f32 %v670, %v695
        %v719 = vmul.f32 %v672, %v695
        %v720 = vmul.f32 %v674, %v695
        %v721 = vmul.f32 %v676, %v695
        %v722 = vmul.f32 %v678, %v695
        %v723 = vmul.f32 %v680, %v695
        %v724 = vmul.f32 %v682, %v695
        %v725 = vmul.f32 %v684, %v695
        %v726 = vmul.f32 %v686, %v695
        %v727 = vmul.f32 %v688, %v695
        %v728 = vmul.f32 %v575, %v575
        %v729 = vmul.f32 %v576, %v576
        %v730 = vmul.f32 %v577, %v577
        %v731 = vmul.f32 %v578, %v578
        %v732 = vmul.f32 %v579, %v579
        %v733 = vmul.f32 %v580, %v580
        %v734 = vmul.f32 %v581, %v581
        %v735 = vmul.f32 %v582, %v582
        %v736 = vmul.f32 %v583, %v583
        %v737 = vmul.f32 %v584, %v584
        %v738 = vmul.f32 %v585, %v585
        %v739 = vmul.f32 %v586, %v586
        %v740 = vmul.f32 %v587, %v587
        %v741 = vmul.f32 %v588, %v588
        %v742 = vmul.f32 %v589, %v589
        %v743 = vmul.f32 %v590, %v590
        %v744 = vmul.f32 %v591, %v591
        %v745 = vmul.f32 %v592, %v592
        %v746 = vmul.f32 %v593, %v593
        %v747 = vmul.f32 %v594, %v594
        %v748 = vmul.f32 %v595, %v595
        %v749 = vmul.f32 %v596, %v596
        %v750 = vmul.f32 %v597, %v597
        %v751 = vmul.f32 %v598, %v598
        %v752 = vmul.f32 %v599, %v599
        %v753 = vmul.f32 %v600, %v600
        %v754 = vmul.f32 %v601, %v601
        %v755 = vmul.f32 %v602, %v602
        %v756 = vmul.f32 %v603, %v603
        %v757 = vmul.f32 %v604, %v604
        %v758 = vmul.f32 %v605, %v605
        %v759 = vmul.f32 %v606, %v606
        %760 = vadd.xlane.f32.xlu0 %v728
        %v761 = vpop.xlane.xlu0 %760
        %762 = vadd.xlane.f32.xlu0 %v729
        %v763 = vpop.xlane.xlu0 %762
        %764 = vadd.xlane.f32.xlu0 %v730
        %v765 = vpop.xlane.xlu0 %764
        %766 = vadd.xlane.f32.xlu0 %v731
        %v767 = vpop.xlane.xlu0 %766
        %768 = vadd.xlane.f32.xlu0 %v732
        %v769 = vpop.xlane.xlu0 %768
        %770 = vadd.xlane.f32.xlu0 %v733
        %v771 = vpop.xlane.xlu0 %770
        %772 = vadd.xlane.f32.xlu0 %v734
        %v773 = vpop.xlane.xlu0 %772
        %774 = vadd.xlane.f32.xlu0 %v735
        %v775 = vpop.xlane.xlu0 %774
        %776 = vadd.xlane.f32.xlu0 %v736
        %v777 = vpop.xlane.xlu0 %776
        %778 = vadd.xlane.f32.xlu0 %v737
        %v779 = vpop.xlane.xlu0 %778
        %780 = vadd.xlane.f32.xlu0 %v738
        %v781 = vpop.xlane.xlu0 %780
        %782 = vadd.xlane.f32.xlu0 %v739
        %v783 = vpop.xlane.xlu0 %782
        %784 = vadd.xlane.f32.xlu0 %v740
        %v785 = vpop.xlane.xlu0 %784
        %786 = vadd.xlane.f32.xlu0 %v741
        %v787 = vpop.xlane.xlu0 %786
        %788 = vadd.xlane.f32.xlu0 %v742
        %v789 = vpop.xlane.xlu0 %788
        %790 = vadd.xlane.f32.xlu0 %v743
        %v791 = vpop.xlane.xlu0 %790
        %792 = vadd.xlane.f32.xlu0 %v744
        %v793 = vpop.xlane.xlu0 %792
        %794 = vadd.xlane.f32.xlu0 %v745
        %v795 = vpop.xlane.xlu0 %794
        %796 = vadd.xlane.f32.xlu0 %v746
        %v797 = vpop.xlane.xlu0 %796
        %798 = vadd.xlane.f32.xlu0 %v747
        %v799 = vpop.xlane.xlu0 %798
        %800 = vadd.xlane.f32.xlu0 %v748
        %v801 = vpop.xlane.xlu0 %800
        %802 = vadd.xlane.f32.xlu0 %v749
        %v803 = vpop.xlane.xlu0 %802
        %804 = vadd.xlane.f32.xlu0 %v750
        %v805 = vpop.xlane.xlu0 %804
        %806 = vadd.xlane.f32.xlu0 %v751
        %v807 = vpop.xlane.xlu0 %806
        %808 = vadd.xlane.f32.xlu0 %v752
        %v809 = vpop.xlane.xlu0 %808
        %810 = vadd.xlane.f32.xlu0 %v753
        %v811 = vpop.xlane.xlu0 %810
        %812 = vadd.xlane.f32.xlu0 %v754
        %v813 = vpop.xlane.xlu0 %812
        %814 = vadd.xlane.f32.xlu0 %v755
        %v815 = vpop.xlane.xlu0 %814
        %816 = vadd.xlane.f32.xlu0 %v756
        %v817 = vpop.xlane.xlu0 %816
        %818 = vadd.xlane.f32.xlu0 %v757
        %v819 = vpop.xlane.xlu0 %818
        %820 = vadd.xlane.f32.xlu0 %v758
        %v821 = vpop.xlane.xlu0 %820
        %822 = vadd.xlane.f32.xlu0 %v759
        %v823 = vpop.xlane.xlu0 %822
        %v824 = vmul.f32 %v761, %v695
        %v825 = vmul.f32 %v763, %v695
        %v826 = vmul.f32 %v765, %v695
        %v827 = vmul.f32 %v767, %v695
        %v828 = vmul.f32 %v769, %v695
        %v829 = vmul.f32 %v771, %v695
        %v830 = vmul.f32 %v773, %v695
        %v831 = vmul.f32 %v775, %v695
        %v832 = vmul.f32 %v777, %v695
        %v833 = vmul.f32 %v779, %v695
        %v834 = vmul.f32 %v781, %v695
        %v835 = vmul.f32 %v783, %v695
        %v836 = vmul.f32 %v785, %v695
        %v837 = vmul.f32 %v787, %v695
        %v838 = vmul.f32 %v789, %v695
        %v839 = vmul.f32 %v791, %v695
        %v840 = vmul.f32 %v793, %v695
        %v841 = vmul.f32 %v795, %v695
        %v842 = vmul.f32 %v797, %v695
        %v843 = vmul.f32 %v799, %v695
        %v844 = vmul.f32 %v801, %v695
        %v845 = vmul.f32 %v803, %v695
        %v846 = vmul.f32 %v805, %v695
        %v847 = vmul.f32 %v807, %v695
        %v848 = vmul.f32 %v809, %v695
        %v849 = vmul.f32 %v811, %v695
        %v850 = vmul.f32 %v813, %v695
        %v851 = vmul.f32 %v815, %v695
        %v852 = vmul.f32 %v817, %v695
        %v853 = vmul.f32 %v819, %v695
        %v854 = vmul.f32 %v821, %v695
        %v855 = vmul.f32 %v823, %v695
        %v856 = vmul.f32 %v696, %v696
        %v857 = vmul.f32 %v697, %v697
        %v858 = vmul.f32 %v698, %v698
        %v859 = vmul.f32 %v699, %v699
        %v860 = vmul.f32 %v700, %v700
        %v861 = vmul.f32 %v701, %v701
        %v862 = vmul.f32 %v702, %v702
        %v863 = vmul.f32 %v703, %v703
        %v864 = vmul.f32 %v704, %v704
        %v865 = vmul.f32 %v705, %v705
        %v866 = vmul.f32 %v706, %v706
        %v867 = vmul.f32 %v707, %v707
        %v868 = vmul.f32 %v708, %v708
        %v869 = vmul.f32 %v709, %v709
        %v870 = vmul.f32 %v710, %v710
        %v871 = vmul.f32 %v711, %v711
        %v872 = vmul.f32 %v712, %v712
        %v873 = vmul.f32 %v713, %v713
        %v874 = vmul.f32 %v714, %v714
        %v875 = vmul.f32 %v715, %v715
        %v876 = vmul.f32 %v716, %v716
        %v877 = vmul.f32 %v717, %v717
        %v878 = vmul.f32 %v718, %v718
        %v879 = vmul.f32 %v719, %v719
        %v880 = vmul.f32 %v720, %v720
        %v881 = vmul.f32 %v721, %v721
        %v882 = vmul.f32 %v722, %v722
        %v883 = vmul.f32 %v723, %v723
        %v884 = vmul.f32 %v724, %v724
        %v885 = vmul.f32 %v725, %v725
        %v886 = vmul.f32 %v726, %v726
        %v887 = vmul.f32 %v727, %v727
        %v888 = vsub.f32 %v824, %v856
        %v889 = vsub.f32 %v825, %v857
        %v890 = vsub.f32 %v826, %v858
        %v891 = vsub.f32 %v827, %v859
        %v892 = vsub.f32 %v828, %v860
        %v893 = vsub.f32 %v829, %v861
        %v894 = vsub.f32 %v830, %v862
        %v895 = vsub.f32 %v831, %v863
        %v896 = vsub.f32 %v832, %v864
        %v897 = vsub.f32 %v833, %v865
        %v898 = vsub.f32 %v834, %v866
        %v899 = vsub.f32 %v835, %v867
        %v900 = vsub.f32 %v836, %v868
        %v901 = vsub.f32 %v837, %v869
        %v902 = vsub.f32 %v838, %v870
        %v903 = vsub.f32 %v839, %v871
        %v904 = vsub.f32 %v840, %v872
        %v905 = vsub.f32 %v841, %v873
        %v906 = vsub.f32 %v842, %v874
        %v907 = vsub.f32 %v843, %v875
        %v908 = vsub.f32 %v844, %v876
        %v909 = vsub.f32 %v845, %v877
        %v910 = vsub.f32 %v846, %v878
        %v911 = vsub.f32 %v847, %v879
        %v912 = vsub.f32 %v848, %v880
        %v913 = vsub.f32 %v849, %v881
        %v914 = vsub.f32 %v850, %v882
        %v915 = vsub.f32 %v851, %v883
        %v916 = vsub.f32 %v852, %v884
        %v917 = vsub.f32 %v853, %v885
        %v918 = vsub.f32 %v854, %v886
        %v919 = vsub.f32 %v855, %v887
        %v920 = vsub.f32 %v575, %v696
        %v921 = vsub.f32 %v576, %v697
        %v922 = vsub.f32 %v577, %v698
        %v923 = vsub.f32 %v578, %v699
        %v924 = vsub.f32 %v579, %v700
        %v925 = vsub.f32 %v580, %v701
        %v926 = vsub.f32 %v581, %v702
        %v927 = vsub.f32 %v582, %v703
        %v928 = vsub.f32 %v583, %v704
        %v929 = vsub.f32 %v584, %v705
        %v930 = vsub.f32 %v585, %v706
        %v931 = vsub.f32 %v586, %v707
        %v932 = vsub.f32 %v587, %v708
        %v933 = vsub.f32 %v588, %v709
        %v934 = vsub.f32 %v589, %v710
        %v935 = vsub.f32 %v590, %v711
        %v936 = vsub.f32 %v591, %v712
        %v937 = vsub.f32 %v592, %v713
        %v938 = vsub.f32 %v593, %v714
        %v939 = vsub.f32 %v594, %v715
        %v940 = vsub.f32 %v595, %v716
        %v941 = vsub.f32 %v596, %v717
        %v942 = vsub.f32 %v597, %v718
        %v943 = vsub.f32 %v598, %v719
        %v944 = vsub.f32 %v599, %v720
        %v945 = vsub.f32 %v600, %v721
        %v946 = vsub.f32 %v601, %v722
        %v947 = vsub.f32 %v602, %v723
        %v948 = vsub.f32 %v603, %v724
        %v949 = vsub.f32 %v604, %v725
        %v950 = vsub.f32 %v605, %v726
        %v951 = vsub.f32 %v606, %v727
        %v952 = vadd.f32 %v888, 1e-05
        %v953 = vadd.f32 %v889, 1e-05
        %v954 = vadd.f32 %v890, 1e-05
        %v955 = vadd.f32 %v891, 1e-05
        %v956 = vadd.f32 %v892, 1e-05
        %v957 = vadd.f32 %v893, 1e-05
        %v958 = vadd.f32 %v894, 1e-05
        %v959 = vadd.f32 %v895, 1e-05
        %v960 = vadd.f32 %v896, 1e-05
        %v961 = vadd.f32 %v897, 1e-05
        %v962 = vadd.f32 %v898, 1e-05
        %v963 = vadd.f32 %v899, 1e-05
        %v964 = vadd.f32 %v900, 1e-05
        %v965 = vadd.f32 %v901, 1e-05
        %v966 = vadd.f32 %v902, 1e-05
        %v967 = vadd.f32 %v903, 1e-05
        %v968 = vadd.f32 %v904, 1e-05
        %v969 = vadd.f32 %v905, 1e-05
        %v970 = vadd.f32 %v906, 1e-05
        %v971 = vadd.f32 %v907, 1e-05
        %v972 = vadd.f32 %v908, 1e-05
        %v973 = vadd.f32 %v909, 1e-05
        %v974 = vadd.f32 %v910, 1e-05
        %v975 = vadd.f32 %v911, 1e-05
        %v976 = vadd.f32 %v912, 1e-05
        %v977 = vadd.f32 %v913, 1e-05
        %v978 = vadd.f32 %v914, 1e-05
        %v979 = vadd.f32 %v915, 1e-05
        %v980 = vadd.f32 %v916, 1e-05
        %v981 = vadd.f32 %v917, 1e-05
        %v982 = vadd.f32 %v918, 1e-05
        %v983 = vadd.f32 %v919, 1e-05
        %v984 = vrsqrt.pop %v952
        %v985 = vmul.f32 %v984, %v952
        %v986 = vmul.f32 %v985, %v984
        %v987 = vmul.f32 0.5, %v986
        %v988 = vsub.f32 1.5, %v987
        %v989 = vmul.f32 %v984, %v988
        %vm990 = vweird.f32 %v952
        %vm991 = vweird.f32 %v984
        %vm992 = vmor %vm990, %vm991
        %v993 = vsel %vm992, %v984, %v989
        %v994 = vrsqrt.pop %v953
        %v995 = vmul.f32 %v994, %v953
        %v996 = vmul.f32 %v995, %v994
        %v997 = vmul.f32 0.5, %v996
        %v998 = vsub.f32 1.5, %v997
        %v999 = vmul.f32 %v994, %v998
        %vm1000 = vweird.f32 %v953
        %vm1001 = vweird.f32 %v994
        %vm1002 = vmor %vm1000, %vm1001
        %v1003 = vsel %vm1002, %v994, %v999
        %v1004 = vrsqrt.pop %v954
        %v1005 = vmul.f32 %v1004, %v954
        %v1006 = vmul.f32 %v1005, %v1004
        %v1007 = vmul.f32 0.5, %v1006
        %v1008 = vsub.f32 1.5, %v1007
        %v1009 = vmul.f32 %v1004, %v1008
        %vm1010 = vweird.f32 %v954
        %vm1011 = vweird.f32 %v1004
        %vm1012 = vmor %vm1010, %vm1011
        %v1013 = vsel %vm1012, %v1004, %v1009
        %v1014 = vrsqrt.pop %v955
        %v1015 = vmul.f32 %v1014, %v955
        %v1016 = vmul.f32 %v1015, %v1014
        %v1017 = vmul.f32 0.5, %v1016
        %v1018 = vsub.f32 1.5, %v1017
        %v1019 = vmul.f32 %v1014, %v1018
        %vm1020 = vweird.f32 %v955
        %vm1021 = vweird.f32 %v1014
        %vm1022 = vmor %vm1020, %vm1021
        %v1023 = vsel %vm1022, %v1014, %v1019
        %v1024 = vrsqrt.pop %v956
        %v1025 = vmul.f32 %v1024, %v956
        %v1026 = vmul.f32 %v1025, %v1024
        %v1027 = vmul.f32 0.5, %v1026
        %v1028 = vsub.f32 1.5, %v1027
        %v1029 = vmul.f32 %v1024, %v1028
        %vm1030 = vweird.f32 %v956
        %vm1031 = vweird.f32 %v1024
        %vm1032 = vmor %vm1030, %vm1031
        %v1033 = vsel %vm1032, %v1024, %v1029
        %v1034 = vrsqrt.pop %v957
        %v1035 = vmul.f32 %v1034, %v957
        %v1036 = vmul.f32 %v1035, %v1034
        %v1037 = vmul.f32 0.5, %v1036
        %v1038 = vsub.f32 1.5, %v1037
        %v1039 = vmul.f32 %v1034, %v1038
        %vm1040 = vweird.f32 %v957
        %vm1041 = vweird.f32 %v1034
        %vm1042 = vmor %vm1040, %vm1041
        %v1043 = vsel %vm1042, %v1034, %v1039
        %v1044 = vrsqrt.pop %v958
        %v1045 = vmul.f32 %v1044, %v958
        %v1046 = vmul.f32 %v1045, %v1044
        %v1047 = vmul.f32 0.5, %v1046
        %v1048 = vsub.f32 1.5, %v1047
        %v1049 = vmul.f32 %v1044, %v1048
        %vm1050 = vweird.f32 %v958
        %vm1051 = vweird.f32 %v1044
        %vm1052 = vmor %vm1050, %vm1051
        %v1053 = vsel %vm1052, %v1044, %v1049
        %v1054 = vrsqrt.pop %v959
        %v1055 = vmul.f32 %v1054, %v959
        %v1056 = vmul.f32 %v1055, %v1054
        %v1057 = vmul.f32 0.5, %v1056
        %v1058 = vsub.f32 1.5, %v1057
        %v1059 = vmul.f32 %v1054, %v1058
        %vm1060 = vweird.f32 %v959
        %vm1061 = vweird.f32 %v1054
        %vm1062 = vmor %vm1060, %vm1061
        %v1063 = vsel %vm1062, %v1054, %v1059
        %v1064 = vrsqrt.pop %v960
        %v1065 = vmul.f32 %v1064, %v960
        %v1066 = vmul.f32 %v1065, %v1064
        %v1067 = vmul.f32 0.5, %v1066
        %v1068 = vsub.f32 1.5, %v1067
        %v1069 = vmul.f32 %v1064, %v1068
        %vm1070 = vweird.f32 %v960
        %vm1071 = vweird.f32 %v1064
        %vm1072 = vmor %vm1070, %vm1071
        %v1073 = vsel %vm1072, %v1064, %v1069
        %v1074 = vrsqrt.pop %v961
        %v1075 = vmul.f32 %v1074, %v961
        %v1076 = vmul.f32 %v1075, %v1074
        %v1077 = vmul.f32 0.5, %v1076
        %v1078 = vsub.f32 1.5, %v1077
        %v1079 = vmul.f32 %v1074, %v1078
        %vm1080 = vweird.f32 %v961
        %vm1081 = vweird.f32 %v1074
        %vm1082 = vmor %vm1080, %vm1081
        %v1083 = vsel %vm1082, %v1074, %v1079
        %v1084 = vrsqrt.pop %v962
        %v1085 = vmul.f32 %v1084, %v962
        %v1086 = vmul.f32 %v1085, %v1084
        %v1087 = vmul.f32 0.5, %v1086
        %v1088 = vsub.f32 1.5, %v1087
        %v1089 = vmul.f32 %v1084, %v1088
        %vm1090 = vweird.f32 %v962
        %vm1091 = vweird.f32 %v1084
        %vm1092 = vmor %vm1090, %vm1091
        %v1093 = vsel %vm1092, %v1084, %v1089
        %v1094 = vrsqrt.pop %v963
        %v1095 = vmul.f32 %v1094, %v963
        %v1096 = vmul.f32 %v1095, %v1094
        %v1097 = vmul.f32 0.5, %v1096
        %v1098 = vsub.f32 1.5, %v1097
        %v1099 = vmul.f32 %v1094, %v1098
        %vm1100 = vweird.f32 %v963
        %vm1101 = vweird.f32 %v1094
        %vm1102 = vmor %vm1100, %vm1101
        %v1103 = vsel %vm1102, %v1094, %v1099
        %v1104 = vrsqrt.pop %v964
        %v1105 = vmul.f32 %v1104, %v964
        %v1106 = vmul.f32 %v1105, %v1104
        %v1107 = vmul.f32 0.5, %v1106
        %v1108 = vsub.f32 1.5, %v1107
        %v1109 = vmul.f32 %v1104, %v1108
        %vm1110 = vweird.f32 %v964
        %vm1111 = vweird.f32 %v1104
        %vm1112 = vmor %vm1110, %vm1111
        %v1113 = vsel %vm1112, %v1104, %v1109
        %v1114 = vrsqrt.pop %v965
        %v1115 = vmul.f32 %v1114, %v965
        %v1116 = vmul.f32 %v1115, %v1114
        %v1117 = vmul.f32 0.5, %v1116
        %v1118 = vsub.f32 1.5, %v1117
        %v1119 = vmul.f32 %v1114, %v1118
        %vm1120 = vweird.f32 %v965
        %vm1121 = vweird.f32 %v1114
        %vm1122 = vmor %vm1120, %vm1121
        %v1123 = vsel %vm1122, %v1114, %v1119
        %v1124 = vrsqrt.pop %v966
        %v1125 = vmul.f32 %v1124, %v966
        %v1126 = vmul.f32 %v1125, %v1124
        %v1127 = vmul.f32 0.5, %v1126
        %v1128 = vsub.f32 1.5, %v1127
        %v1129 = vmul.f32 %v1124, %v1128
        %vm1130 = vweird.f32 %v966
        %vm1131 = vweird.f32 %v1124
        %vm1132 = vmor %vm1130, %vm1131
        %v1133 = vsel %vm1132, %v1124, %v1129
        %v1134 = vrsqrt.pop %v967
        %v1135 = vmul.f32 %v1134, %v967
        %v1136 = vmul.f32 %v1135, %v1134
        %v1137 = vmul.f32 0.5, %v1136
        %v1138 = vsub.f32 1.5, %v1137
        %v1139 = vmul.f32 %v1134, %v1138
        %vm1140 = vweird.f32 %v967
        %vm1141 = vweird.f32 %v1134
        %vm1142 = vmor %vm1140, %vm1141
        %v1143 = vsel %vm1142, %v1134, %v1139
        %v1144 = vrsqrt.pop %v968
        %v1145 = vmul.f32 %v1144, %v968
        %v1146 = vmul.f32 %v1145, %v1144
        %v1147 = vmul.f32 0.5, %v1146
        %v1148 = vsub.f32 1.5, %v1147
        %v1149 = vmul.f32 %v1144, %v1148
        %vm1150 = vweird.f32 %v968
        %vm1151 = vweird.f32 %v1144
        %vm1152 = vmor %vm1150, %vm1151
        %v1153 = vsel %vm1152, %v1144, %v1149
        %v1154 = vrsqrt.pop %v969
        %v1155 = vmul.f32 %v1154, %v969
        %v1156 = vmul.f32 %v1155, %v1154
        %v1157 = vmul.f32 0.5, %v1156
        %v1158 = vsub.f32 1.5, %v1157
        %v1159 = vmul.f32 %v1154, %v1158
        %vm1160 = vweird.f32 %v969
        %vm1161 = vweird.f32 %v1154
        %vm1162 = vmor %vm1160, %vm1161
        %v1163 = vsel %vm1162, %v1154, %v1159
        %v1164 = vrsqrt.pop %v970
        %v1165 = vmul.f32 %v1164, %v970
        %v1166 = vmul.f32 %v1165, %v1164
        %v1167 = vmul.f32 0.5, %v1166
        %v1168 = vsub.f32 1.5, %v1167
        %v1169 = vmul.f32 %v1164, %v1168
        %vm1170 = vweird.f32 %v970
        %vm1171 = vweird.f32 %v1164
        %vm1172 = vmor %vm1170, %vm1171
        %v1173 = vsel %vm1172, %v1164, %v1169
        %v1174 = vrsqrt.pop %v971
        %v1175 = vmul.f32 %v1174, %v971
        %v1176 = vmul.f32 %v1175, %v1174
        %v1177 = vmul.f32 0.5, %v1176
        %v1178 = vsub.f32 1.5, %v1177
        %v1179 = vmul.f32 %v1174, %v1178
        %vm1180 = vweird.f32 %v971
        %vm1181 = vweird.f32 %v1174
        %vm1182 = vmor %vm1180, %vm1181
        %v1183 = vsel %vm1182, %v1174, %v1179
        %v1184 = vrsqrt.pop %v972
        %v1185 = vmul.f32 %v1184, %v972
        %v1186 = vmul.f32 %v1185, %v1184
        %v1187 = vmul.f32 0.5, %v1186
        %v1188 = vsub.f32 1.5, %v1187
        %v1189 = vmul.f32 %v1184, %v1188
        %vm1190 = vweird.f32 %v972
        %vm1191 = vweird.f32 %v1184
        %vm1192 = vmor %vm1190, %vm1191
        %v1193 = vsel %vm1192, %v1184, %v1189
        %v1194 = vrsqrt.pop %v973
        %v1195 = vmul.f32 %v1194, %v973
        %v1196 = vmul.f32 %v1195, %v1194
        %v1197 = vmul.f32 0.5, %v1196
        %v1198 = vsub.f32 1.5, %v1197
        %v1199 = vmul.f32 %v1194, %v1198
        %vm1200 = vweird.f32 %v973
        %vm1201 = vweird.f32 %v1194
        %vm1202 = vmor %vm1200, %vm1201
        %v1203 = vsel %vm1202, %v1194, %v1199
        %v1204 = vrsqrt.pop %v974
        %v1205 = vmul.f32 %v1204, %v974
        %v1206 = vmul.f32 %v1205, %v1204
        %v1207 = vmul.f32 0.5, %v1206
        %v1208 = vsub.f32 1.5, %v1207
        %v1209 = vmul.f32 %v1204, %v1208
        %vm1210 = vweird.f32 %v974
        %vm1211 = vweird.f32 %v1204
        %vm1212 = vmor %vm1210, %vm1211
        %v1213 = vsel %vm1212, %v1204, %v1209
        %v1214 = vrsqrt.pop %v975
        %v1215 = vmul.f32 %v1214, %v975
        %v1216 = vmul.f32 %v1215, %v1214
        %v1217 = vmul.f32 0.5, %v1216
        %v1218 = vsub.f32 1.5, %v1217
        %v1219 = vmul.f32 %v1214, %v1218
        %vm1220 = vweird.f32 %v975
        %vm1221 = vweird.f32 %v1214
        %vm1222 = vmor %vm1220, %vm1221
        %v1223 = vsel %vm1222, %v1214, %v1219
        %v1224 = vrsqrt.pop %v976
        %v1225 = vmul.f32 %v1224, %v976
        %v1226 = vmul.f32 %v1225, %v1224
        %v1227 = vmul.f32 0.5, %v1226
        %v1228 = vsub.f32 1.5, %v1227
        %v1229 = vmul.f32 %v1224, %v1228
        %vm1230 = vweird.f32 %v976
        %vm1231 = vweird.f32 %v1224
        %vm1232 = vmor %vm1230, %vm1231
        %v1233 = vsel %vm1232, %v1224, %v1229
        %v1234 = vrsqrt.pop %v977
        %v1235 = vmul.f32 %v1234, %v977
        %v1236 = vmul.f32 %v1235, %v1234
        %v1237 = vmul.f32 0.5, %v1236
        %v1238 = vsub.f32 1.5, %v1237
        %v1239 = vmul.f32 %v1234, %v1238
        %vm1240 = vweird.f32 %v977
        %vm1241 = vweird.f32 %v1234
        %vm1242 = vmor %vm1240, %vm1241
        %v1243 = vsel %vm1242, %v1234, %v1239
        %v1244 = vrsqrt.pop %v978
        %v1245 = vmul.f32 %v1244, %v978
        %v1246 = vmul.f32 %v1245, %v1244
        %v1247 = vmul.f32 0.5, %v1246
        %v1248 = vsub.f32 1.5, %v1247
        %v1249 = vmul.f32 %v1244, %v1248
        %vm1250 = vweird.f32 %v978
        %vm1251 = vweird.f32 %v1244
        %vm1252 = vmor %vm1250, %vm1251
        %v1253 = vsel %vm1252, %v1244, %v1249
        %v1254 = vrsqrt.pop %v979
        %v1255 = vmul.f32 %v1254, %v979
        %v1256 = vmul.f32 %v1255, %v1254
        %v1257 = vmul.f32 0.5, %v1256
        %v1258 = vsub.f32 1.5, %v1257
        %v1259 = vmul.f32 %v1254, %v1258
        %vm1260 = vweird.f32 %v979
        %vm1261 = vweird.f32 %v1254
        %vm1262 = vmor %vm1260, %vm1261
        %v1263 = vsel %vm1262, %v1254, %v1259
        %v1264 = vrsqrt.pop %v980
        %v1265 = vmul.f32 %v1264, %v980
        %v1266 = vmul.f32 %v1265, %v1264
        %v1267 = vmul.f32 0.5, %v1266
        %v1268 = vsub.f32 1.5, %v1267
        %v1269 = vmul.f32 %v1264, %v1268
        %vm1270 = vweird.f32 %v980
        %vm1271 = vweird.f32 %v1264
        %vm1272 = vmor %vm1270, %vm1271
        %v1273 = vsel %vm1272, %v1264, %v1269
        %v1274 = vrsqrt.pop %v981
        %v1275 = vmul.f32 %v1274, %v981
        %v1276 = vmul.f32 %v1275, %v1274
        %v1277 = vmul.f32 0.5, %v1276
        %v1278 = vsub.f32 1.5, %v1277
        %v1279 = vmul.f32 %v1274, %v1278
        %vm1280 = vweird.f32 %v981
        %vm1281 = vweird.f32 %v1274
        %vm1282 = vmor %vm1280, %vm1281
        %v1283 = vsel %vm1282, %v1274, %v1279
        %v1284 = vrsqrt.pop %v982
        %v1285 = vmul.f32 %v1284, %v982
        %v1286 = vmul.f32 %v1285, %v1284
        %v1287 = vmul.f32 0.5, %v1286
        %v1288 = vsub.f32 1.5, %v1287
        %v1289 = vmul.f32 %v1284, %v1288
        %vm1290 = vweird.f32 %v982
        %vm1291 = vweird.f32 %v1284
        %vm1292 = vmor %vm1290, %vm1291
        %v1293 = vsel %vm1292, %v1284, %v1289
        %v1294 = vrsqrt.pop %v983
        %v1295 = vmul.f32 %v1294, %v983
        %v1296 = vmul.f32 %v1295, %v1294
        %v1297 = vmul.f32 0.5, %v1296
        %v1298 = vsub.f32 1.5, %v1297
        %v1299 = vmul.f32 %v1294, %v1298
        %vm1300 = vweird.f32 %v983
        %vm1301 = vweird.f32 %v1294
        %vm1302 = vmor %vm1300, %vm1301
        %v1303 = vsel %vm1302, %v1294, %v1299
        %v1304 = vmul.f32 %v920, %v993
        %v1305 = vmul.f32 %v921, %v1003
        %v1306 = vmul.f32 %v922, %v1013
        %v1307 = vmul.f32 %v923, %v1023
        %v1308 = vmul.f32 %v924, %v1033
        %v1309 = vmul.f32 %v925, %v1043
        %v1310 = vmul.f32 %v926, %v1053
        %v1311 = vmul.f32 %v927, %v1063
        %v1312 = vmul.f32 %v928, %v1073
        %v1313 = vmul.f32 %v929, %v1083
        %v1314 = vmul.f32 %v930, %v1093
        %v1315 = vmul.f32 %v931, %v1103
        %v1316 = vmul.f32 %v932, %v1113
        %v1317 = vmul.f32 %v933, %v1123
        %v1318 = vmul.f32 %v934, %v1133
        %v1319 = vmul.f32 %v935, %v1143
        %v1320 = vmul.f32 %v936, %v1153
        %v1321 = vmul.f32 %v937, %v1163
        %v1322 = vmul.f32 %v938, %v1173
        %v1323 = vmul.f32 %v939, %v1183
        %v1324 = vmul.f32 %v940, %v1193
        %v1325 = vmul.f32 %v941, %v1203
        %v1326 = vmul.f32 %v942, %v1213
        %v1327 = vmul.f32 %v943, %v1223
        %v1328 = vmul.f32 %v944, %v1233
        %v1329 = vmul.f32 %v945, %v1243
        %v1330 = vmul.f32 %v946, %v1253
        %v1331 = vmul.f32 %v947, %v1263
        %v1332 = vmul.f32 %v948, %v1273
        %v1333 = vmul.f32 %v949, %v1283
        %v1334 = vmul.f32 %v950, %v1293
        %v1335 = vmul.f32 %v951, %v1303
        %v1337 = vperm.slane %v623, 0
        %v1339 = vmul.f32 %v1304, %v1337
        %v1340 = vmul.f32 %v1305, %v1337
        %v1341 = vmul.f32 %v1306, %v1337
        %v1342 = vmul.f32 %v1307, %v1337
        %v1343 = vmul.f32 %v1308, %v1337
        %v1344 = vmul.f32 %v1309, %v1337
        %v1345 = vmul.f32 %v1310, %v1337
        %v1346 = vmul.f32 %v1311, %v1337
        %v1347 = vmul.f32 %v1312, %v1337
        %v1348 = vmul.f32 %v1313, %v1337
        %v1349 = vmul.f32 %v1314, %v1337
        %v1350 = vmul.f32 %v1315, %v1337
        %v1351 = vmul.f32 %v1316, %v1337
        %v1352 = vmul.f32 %v1317, %v1337
        %v1353 = vmul.f32 %v1318, %v1337
        %v1354 = vmul.f32 %v1319, %v1337
        %v1355 = vmul.f32 %v1320, %v1337
        %v1356 = vmul.f32 %v1321, %v1337
        %v1357 = vmul.f32 %v1322, %v1337
        %v1358 = vmul.f32 %v1323, %v1337
        %v1359 = vmul.f32 %v1324, %v1337
        %v1360 = vmul.f32 %v1325, %v1337
        %v1361 = vmul.f32 %v1326, %v1337
        %v1362 = vmul.f32 %v1327, %v1337
        %v1363 = vmul.f32 %v1328, %v1337
        %v1364 = vmul.f32 %v1329, %v1337
        %v1365 = vmul.f32 %v1330, %v1337
        %v1366 = vmul.f32 %v1331, %v1337
        %v1367 = vmul.f32 %v1332, %v1337
        %v1368 = vmul.f32 %v1333, %v1337
        %v1369 = vmul.f32 %v1334, %v1337
        %v1370 = vmul.f32 %v1335, %v1337
        %v1372 = vperm.slane %v624, 0
        %v1374 = vadd.f32 %v1339, %v1372
        %v1375 = vadd.f32 %v1340, %v1372
        %v1376 = vadd.f32 %v1341, %v1372
        %v1377 = vadd.f32 %v1342, %v1372
        %v1378 = vadd.f32 %v1343, %v1372
        %v1379 = vadd.f32 %v1344, %v1372
        %v1380 = vadd.f32 %v1345, %v1372
        %v1381 = vadd.f32 %v1346, %v1372
        %v1382 = vadd.f32 %v1347, %v1372
        %v1383 = vadd.f32 %v1348, %v1372
        %v1384 = vadd.f32 %v1349, %v1372
        %v1385 = vadd.f32 %v1350, %v1372
        %v1386 = vadd.f32 %v1351, %v1372
        %v1387 = vadd.f32 %v1352, %v1372
        %v1388 = vadd.f32 %v1353, %v1372
        %v1389 = vadd.f32 %v1354, %v1372
        %v1390 = vadd.f32 %v1355, %v1372
        %v1391 = vadd.f32 %v1356, %v1372
        %v1392 = vadd.f32 %v1357, %v1372
        %v1393 = vadd.f32 %v1358, %v1372
        %v1394 = vadd.f32 %v1359, %v1372
        %v1395 = vadd.f32 %v1360, %v1372
        %v1396 = vadd.f32 %v1361, %v1372
        %v1397 = vadd.f32 %v1362, %v1372
        %v1398 = vadd.f32 %v1363, %v1372
        %v1399 = vadd.f32 %v1364, %v1372
        %v1400 = vadd.f32 %v1365, %v1372
        %v1401 = vadd.f32 %v1366, %v1372
        %v1402 = vadd.f32 %v1367, %v1372
        %v1403 = vadd.f32 %v1368, %v1372
        %v1404 = vadd.f32 %v1369, %v1372
        %v1405 = vadd.f32 %v1370, %v1372
        %v1406 = vld [vmem:[%s4] sm:$0x1]
        %v1407 = vld [vmem:[%s5] sm:$0x1]
        %1408 = vadd.xlane.f32.xlu0 %v607
        %v1409 = vpop.xlane.xlu0 %1408
        %1410 = vadd.xlane.f32.xlu0 %v608
        %v1411 = vpop.xlane.xlu0 %1410
        %1412 = vadd.xlane.f32.xlu0 %v609
        %v1413 = vpop.xlane.xlu0 %1412
        %1414 = vadd.xlane.f32.xlu0 %v610
        %v1415 = vpop.xlane.xlu0 %1414
        %1416 = vadd.xlane.f32.xlu0 %v611
        %v1417 = vpop.xlane.xlu0 %1416
        %1418 = vadd.xlane.f32.xlu0 %v612
        %v1419 = vpop.xlane.xlu0 %1418
        %1420 = vadd.xlane.f32.xlu0 %v613
        %v1421 = vpop.xlane.xlu0 %1420
        %1422 = vadd.xlane.f32.xlu0 %v614
        %v1423 = vpop.xlane.xlu0 %1422
        %1424 = vadd.xlane.f32.xlu0 %v615
        %v1425 = vpop.xlane.xlu0 %1424
        %1426 = vadd.xlane.f32.xlu0 %v616
        %v1427 = vpop.xlane.xlu0 %1426
        %1428 = vadd.xlane.f32.xlu0 %v617
        %v1429 = vpop.xlane.xlu0 %1428
        %1430 = vadd.xlane.f32.xlu0 %v618
        %v1431 = vpop.xlane.xlu0 %1430
        %1432 = vadd.xlane.f32.xlu0 %v619
        %v1433 = vpop.xlane.xlu0 %1432
        %1434 = vadd.xlane.f32.xlu0 %v620
        %v1435 = vpop.xlane.xlu0 %1434
        %1436 = vadd.xlane.f32.xlu0 %v621
        %v1437 = vpop.xlane.xlu0 %1436
        %1438 = vadd.xlane.f32.xlu0 %v622
        %v1439 = vpop.xlane.xlu0 %1438
        %v1440 = vmul.f32 %v1409, %v695
        %v1441 = vmul.f32 %v1411, %v695
        %v1442 = vmul.f32 %v1413, %v695
        %v1443 = vmul.f32 %v1415, %v695
        %v1444 = vmul.f32 %v1417, %v695
        %v1445 = vmul.f32 %v1419, %v695
        %v1446 = vmul.f32 %v1421, %v695
        %v1447 = vmul.f32 %v1423, %v695
        %v1448 = vmul.f32 %v1425, %v695
        %v1449 = vmul.f32 %v1427, %v695
        %v1450 = vmul.f32 %v1429, %v695
        %v1451 = vmul.f32 %v1431, %v695
        %v1452 = vmul.f32 %v1433, %v695
        %v1453 = vmul.f32 %v1435, %v695
        %v1454 = vmul.f32 %v1437, %v695
        %v1455 = vmul.f32 %v1439, %v695
        %v1456 = vmul.f32 %v607, %v607
        %v1457 = vmul.f32 %v608, %v608
        %v1458 = vmul.f32 %v609, %v609
        %v1459 = vmul.f32 %v610, %v610
        %v1460 = vmul.f32 %v611, %v611
        %v1461 = vmul.f32 %v612, %v612
        %v1462 = vmul.f32 %v613, %v613
        %v1463 = vmul.f32 %v614, %v614
        %v1464 = vmul.f32 %v615, %v615
        %v1465 = vmul.f32 %v616, %v616
        %v1466 = vmul.f32 %v617, %v617
        %v1467 = vmul.f32 %v618, %v618
        %v1468 = vmul.f32 %v619, %v619
        %v1469 = vmul.f32 %v620, %v620
        %v1470 = vmul.f32 %v621, %v621
        %v1471 = vmul.f32 %v622, %v622
        %1472 = vadd.xlane.f32.xlu0 %v1456
        %v1473 = vpop.xlane.xlu0 %1472
        %1474 = vadd.xlane.f32.xlu0 %v1457
        %v1475 = vpop.xlane.xlu0 %1474
        %1476 = vadd.xlane.f32.xlu0 %v1458
        %v1477 = vpop.xlane.xlu0 %1476
        %1478 = vadd.xlane.f32.xlu0 %v1459
        %v1479 = vpop.xlane.xlu0 %1478
        %1480 = vadd.xlane.f32.xlu0 %v1460
        %v1481 = vpop.xlane.xlu0 %1480
        %1482 = vadd.xlane.f32.xlu0 %v1461
        %v1483 = vpop.xlane.xlu0 %1482
        %1484 = vadd.xlane.f32.xlu0 %v1462
        %v1485 = vpop.xlane.xlu0 %1484
        %1486 = vadd.xlane.f32.xlu0 %v1463
        %v1487 = vpop.xlane.xlu0 %1486
        %1488 = vadd.xlane.f32.xlu0 %v1464
        %v1489 = vpop.xlane.xlu0 %1488
        %1490 = vadd.xlane.f32.xlu0 %v1465
        %v1491 = vpop.xlane.xlu0 %1490
        %1492 = vadd.xlane.f32.xlu0 %v1466
        %v1493 = vpop.xlane.xlu0 %1492
        %1494 = vadd.xlane.f32.xlu0 %v1467
        %v1495 = vpop.xlane.xlu0 %1494
        %1496 = vadd.xlane.f32.xlu0 %v1468
        %v1497 = vpop.xlane.xlu0 %1496
        %1498 = vadd.xlane.f32.xlu0 %v1469
        %v1499 = vpop.xlane.xlu0 %1498
        %1500 = vadd.xlane.f32.xlu0 %v1470
        %v1501 = vpop.xlane.xlu0 %1500
        %1502 = vadd.xlane.f32.xlu0 %v1471
        %v1503 = vpop.xlane.xlu0 %1502
        %v1504 = vmul.f32 %v1473, %v695
        %v1505 = vmul.f32 %v1475, %v695
        %v1506 = vmul.f32 %v1477, %v695
        %v1507 = vmul.f32 %v1479, %v695
        %v1508 = vmul.f32 %v1481, %v695
        %v1509 = vmul.f32 %v1483, %v695
        %v1510 = vmul.f32 %v1485, %v695
        %v1511 = vmul.f32 %v1487, %v695
        %v1512 = vmul.f32 %v1489, %v695
        %v1513 = vmul.f32 %v1491, %v695
        %v1514 = vmul.f32 %v1493, %v695
        %v1515 = vmul.f32 %v1495, %v695
        %v1516 = vmul.f32 %v1497, %v695
        %v1517 = vmul.f32 %v1499, %v695
        %v1518 = vmul.f32 %v1501, %v695
        %v1519 = vmul.f32 %v1503, %v695
        %v1520 = vmul.f32 %v1440, %v1440
        %v1521 = vmul.f32 %v1441, %v1441
        %v1522 = vmul.f32 %v1442, %v1442
        %v1523 = vmul.f32 %v1443, %v1443
        %v1524 = vmul.f32 %v1444, %v1444
        %v1525 = vmul.f32 %v1445, %v1445
        %v1526 = vmul.f32 %v1446, %v1446
        %v1527 = vmul.f32 %v1447, %v1447
        %v1528 = vmul.f32 %v1448, %v1448
        %v1529 = vmul.f32 %v1449, %v1449
        %v1530 = vmul.f32 %v1450, %v1450
        %v1531 = vmul.f32 %v1451, %v1451
        %v1532 = vmul.f32 %v1452, %v1452
        %v1533 = vmul.f32 %v1453, %v1453
        %v1534 = vmul.f32 %v1454, %v1454
        %v1535 = vmul.f32 %v1455, %v1455
        %v1536 = vsub.f32 %v1504, %v1520
        %v1537 = vsub.f32 %v1505, %v1521
        %v1538 = vsub.f32 %v1506, %v1522
        %v1539 = vsub.f32 %v1507, %v1523
        %v1540 = vsub.f32 %v1508, %v1524
        %v1541 = vsub.f32 %v1509, %v1525
        %v1542 = vsub.f32 %v1510, %v1526
        %v1543 = vsub.f32 %v1511, %v1527
        %v1544 = vsub.f32 %v1512, %v1528
        %v1545 = vsub.f32 %v1513, %v1529
        %v1546 = vsub.f32 %v1514, %v1530
        %v1547 = vsub.f32 %v1515, %v1531
        %v1548 = vsub.f32 %v1516, %v1532
        %v1549 = vsub.f32 %v1517, %v1533
        %v1550 = vsub.f32 %v1518, %v1534
        %v1551 = vsub.f32 %v1519, %v1535
        %v1552 = vsub.f32 %v607, %v1440
        %v1553 = vsub.f32 %v608, %v1441
        %v1554 = vsub.f32 %v609, %v1442
        %v1555 = vsub.f32 %v610, %v1443
        %v1556 = vsub.f32 %v611, %v1444
        %v1557 = vsub.f32 %v612, %v1445
        %v1558 = vsub.f32 %v613, %v1446
        %v1559 = vsub.f32 %v614, %v1447
        %v1560 = vsub.f32 %v615, %v1448
        %v1561 = vsub.f32 %v616, %v1449
        %v1562 = vsub.f32 %v617, %v1450
        %v1563 = vsub.f32 %v618, %v1451
        %v1564 = vsub.f32 %v619, %v1452
        %v1565 = vsub.f32 %v620, %v1453
        %v1566 = vsub.f32 %v621, %v1454
        %v1567 = vsub.f32 %v622, %v1455
        %v1568 = vadd.f32 %v1536, 1e-05
        %v1569 = vadd.f32 %v1537, 1e-05
        %v1570 = vadd.f32 %v1538, 1e-05
        %v1571 = vadd.f32 %v1539, 1e-05
        %v1572 = vadd.f32 %v1540, 1e-05
        %v1573 = vadd.f32 %v1541, 1e-05
        %v1574 = vadd.f32 %v1542, 1e-05
        %v1575 = vadd.f32 %v1543, 1e-05
        %v1576 = vadd.f32 %v1544, 1e-05
        %v1577 = vadd.f32 %v1545, 1e-05
        %v1578 = vadd.f32 %v1546, 1e-05
        %v1579 = vadd.f32 %v1547, 1e-05
        %v1580 = vadd.f32 %v1548, 1e-05
        %v1581 = vadd.f32 %v1549, 1e-05
        %v1582 = vadd.f32 %v1550, 1e-05
        %v1583 = vadd.f32 %v1551, 1e-05
        %v1584 = vrsqrt.pop %v1568
        %v1585 = vmul.f32 %v1584, %v1568
        %v1586 = vmul.f32 %v1585, %v1584
        %v1587 = vmul.f32 0.5, %v1586
        %v1588 = vsub.f32 1.5, %v1587
        %v1589 = vmul.f32 %v1584, %v1588
        %vm1590 = vweird.f32 %v1568
        %vm1591 = vweird.f32 %v1584
        %vm1592 = vmor %vm1590, %vm1591
        %v1593 = vsel %vm1592, %v1584, %v1589
        %v1594 = vrsqrt.pop %v1569
        %v1595 = vmul.f32 %v1594, %v1569
        %v1596 = vmul.f32 %v1595, %v1594
        %v1597 = vmul.f32 0.5, %v1596
        %v1598 = vsub.f32 1.5, %v1597
        %v1599 = vmul.f32 %v1594, %v1598
        %vm1600 = vweird.f32 %v1569
        %vm1601 = vweird.f32 %v1594
        %vm1602 = vmor %vm1600, %vm1601
        %v1603 = vsel %vm1602, %v1594, %v1599
        %v1604 = vrsqrt.pop %v1570
        %v1605 = vmul.f32 %v1604, %v1570
        %v1606 = vmul.f32 %v1605, %v1604
        %v1607 = vmul.f32 0.5, %v1606
        %v1608 = vsub.f32 1.5, %v1607
        %v1609 = vmul.f32 %v1604, %v1608
        %vm1610 = vweird.f32 %v1570
        %vm1611 = vweird.f32 %v1604
        %vm1612 = vmor %vm1610, %vm1611
        %v1613 = vsel %vm1612, %v1604, %v1609
        %v1614 = vrsqrt.pop %v1571
        %v1615 = vmul.f32 %v1614, %v1571
        %v1616 = vmul.f32 %v1615, %v1614
        %v1617 = vmul.f32 0.5, %v1616
        %v1618 = vsub.f32 1.5, %v1617
        %v1619 = vmul.f32 %v1614, %v1618
        %vm1620 = vweird.f32 %v1571
        %vm1621 = vweird.f32 %v1614
        %vm1622 = vmor %vm1620, %vm1621
        %v1623 = vsel %vm1622, %v1614, %v1619
        %v1624 = vrsqrt.pop %v1572
        %v1625 = vmul.f32 %v1624, %v1572
        %v1626 = vmul.f32 %v1625, %v1624
        %v1627 = vmul.f32 0.5, %v1626
        %v1628 = vsub.f32 1.5, %v1627
        %v1629 = vmul.f32 %v1624, %v1628
        %vm1630 = vweird.f32 %v1572
        %vm1631 = vweird.f32 %v1624
        %vm1632 = vmor %vm1630, %vm1631
        %v1633 = vsel %vm1632, %v1624, %v1629
        %v1634 = vrsqrt.pop %v1573
        %v1635 = vmul.f32 %v1634, %v1573
        %v1636 = vmul.f32 %v1635, %v1634
        %v1637 = vmul.f32 0.5, %v1636
        %v1638 = vsub.f32 1.5, %v1637
        %v1639 = vmul.f32 %v1634, %v1638
        %vm1640 = vweird.f32 %v1573
        %vm1641 = vweird.f32 %v1634
        %vm1642 = vmor %vm1640, %vm1641
        %v1643 = vsel %vm1642, %v1634, %v1639
        %v1644 = vrsqrt.pop %v1574
        %v1645 = vmul.f32 %v1644, %v1574
        %v1646 = vmul.f32 %v1645, %v1644
        %v1647 = vmul.f32 0.5, %v1646
        %v1648 = vsub.f32 1.5, %v1647
        %v1649 = vmul.f32 %v1644, %v1648
        %vm1650 = vweird.f32 %v1574
        %vm1651 = vweird.f32 %v1644
        %vm1652 = vmor %vm1650, %vm1651
        %v1653 = vsel %vm1652, %v1644, %v1649
        %v1654 = vrsqrt.pop %v1575
        %v1655 = vmul.f32 %v1654, %v1575
        %v1656 = vmul.f32 %v1655, %v1654
        %v1657 = vmul.f32 0.5, %v1656
        %v1658 = vsub.f32 1.5, %v1657
        %v1659 = vmul.f32 %v1654, %v1658
        %vm1660 = vweird.f32 %v1575
        %vm1661 = vweird.f32 %v1654
        %vm1662 = vmor %vm1660, %vm1661
        %v1663 = vsel %vm1662, %v1654, %v1659
        %v1664 = vrsqrt.pop %v1576
        %v1665 = vmul.f32 %v1664, %v1576
        %v1666 = vmul.f32 %v1665, %v1664
        %v1667 = vmul.f32 0.5, %v1666
        %v1668 = vsub.f32 1.5, %v1667
        %v1669 = vmul.f32 %v1664, %v1668
        %vm1670 = vweird.f32 %v1576
        %vm1671 = vweird.f32 %v1664
        %vm1672 = vmor %vm1670, %vm1671
        %v1673 = vsel %vm1672, %v1664, %v1669
        %v1674 = vrsqrt.pop %v1577
        %v1675 = vmul.f32 %v1674, %v1577
        %v1676 = vmul.f32 %v1675, %v1674
        %v1677 = vmul.f32 0.5, %v1676
        %v1678 = vsub.f32 1.5, %v1677
        %v1679 = vmul.f32 %v1674, %v1678
        %vm1680 = vweird.f32 %v1577
        %vm1681 = vweird.f32 %v1674
        %vm1682 = vmor %vm1680, %vm1681
        %v1683 = vsel %vm1682, %v1674, %v1679
        %v1684 = vrsqrt.pop %v1578
        %v1685 = vmul.f32 %v1684, %v1578
        %v1686 = vmul.f32 %v1685, %v1684
        %v1687 = vmul.f32 0.5, %v1686
        %v1688 = vsub.f32 1.5, %v1687
        %v1689 = vmul.f32 %v1684, %v1688
        %vm1690 = vweird.f32 %v1578
        %vm1691 = vweird.f32 %v1684
        %vm1692 = vmor %vm1690, %vm1691
        %v1693 = vsel %vm1692, %v1684, %v1689
        %v1694 = vrsqrt.pop %v1579
        %v1695 = vmul.f32 %v1694, %v1579
        %v1696 = vmul.f32 %v1695, %v1694
        %v1697 = vmul.f32 0.5, %v1696
        %v1698 = vsub.f32 1.5, %v1697
        %v1699 = vmul.f32 %v1694, %v1698
        %vm1700 = vweird.f32 %v1579
        %vm1701 = vweird.f32 %v1694
        %vm1702 = vmor %vm1700, %vm1701
        %v1703 = vsel %vm1702, %v1694, %v1699
        %v1704 = vrsqrt.pop %v1580
        %v1705 = vmul.f32 %v1704, %v1580
        %v1706 = vmul.f32 %v1705, %v1704
        %v1707 = vmul.f32 0.5, %v1706
        %v1708 = vsub.f32 1.5, %v1707
        %v1709 = vmul.f32 %v1704, %v1708
        %vm1710 = vweird.f32 %v1580
        %vm1711 = vweird.f32 %v1704
        %vm1712 = vmor %vm1710, %vm1711
        %v1713 = vsel %vm1712, %v1704, %v1709
        %v1714 = vrsqrt.pop %v1581
        %v1715 = vmul.f32 %v1714, %v1581
        %v1716 = vmul.f32 %v1715, %v1714
        %v1717 = vmul.f32 0.5, %v1716
        %v1718 = vsub.f32 1.5, %v1717
        %v1719 = vmul.f32 %v1714, %v1718
        %vm1720 = vweird.f32 %v1581
        %vm1721 = vweird.f32 %v1714
        %vm1722 = vmor %vm1720, %vm1721
        %v1723 = vsel %vm1722, %v1714, %v1719
        %v1724 = vrsqrt.pop %v1582
        %v1725 = vmul.f32 %v1724, %v1582
        %v1726 = vmul.f32 %v1725, %v1724
        %v1727 = vmul.f32 0.5, %v1726
        %v1728 = vsub.f32 1.5, %v1727
        %v1729 = vmul.f32 %v1724, %v1728
        %vm1730 = vweird.f32 %v1582
        %vm1731 = vweird.f32 %v1724
        %vm1732 = vmor %vm1730, %vm1731
        %v1733 = vsel %vm1732, %v1724, %v1729
        %v1734 = vrsqrt.pop %v1583
        %v1735 = vmul.f32 %v1734, %v1583
        %v1736 = vmul.f32 %v1735, %v1734
        %v1737 = vmul.f32 0.5, %v1736
        %v1738 = vsub.f32 1.5, %v1737
        %v1739 = vmul.f32 %v1734, %v1738
        %vm1740 = vweird.f32 %v1583
        %vm1741 = vweird.f32 %v1734
        %vm1742 = vmor %vm1740, %vm1741
        %v1743 = vsel %vm1742, %v1734, %v1739
        %v1744 = vmul.f32 %v1552, %v1593
        %v1745 = vmul.f32 %v1553, %v1603
        %v1746 = vmul.f32 %v1554, %v1613
        %v1747 = vmul.f32 %v1555, %v1623
        %v1748 = vmul.f32 %v1556, %v1633
        %v1749 = vmul.f32 %v1557, %v1643
        %v1750 = vmul.f32 %v1558, %v1653
        %v1751 = vmul.f32 %v1559, %v1663
        %v1752 = vmul.f32 %v1560, %v1673
        %v1753 = vmul.f32 %v1561, %v1683
        %v1754 = vmul.f32 %v1562, %v1693
        %v1755 = vmul.f32 %v1563, %v1703
        %v1756 = vmul.f32 %v1564, %v1713
        %v1757 = vmul.f32 %v1565, %v1723
        %v1758 = vmul.f32 %v1566, %v1733
        %v1759 = vmul.f32 %v1567, %v1743
        %v1761 = vperm.slane %v1406, 0
        %v1763 = vmul.f32 %v1744, %v1761
        %v1764 = vmul.f32 %v1745, %v1761
        %v1765 = vmul.f32 %v1746, %v1761
        %v1766 = vmul.f32 %v1747, %v1761
        %v1767 = vmul.f32 %v1748, %v1761
        %v1768 = vmul.f32 %v1749, %v1761
        %v1769 = vmul.f32 %v1750, %v1761
        %v1770 = vmul.f32 %v1751, %v1761
        %v1771 = vmul.f32 %v1752, %v1761
        %v1772 = vmul.f32 %v1753, %v1761
        %v1773 = vmul.f32 %v1754, %v1761
        %v1774 = vmul.f32 %v1755, %v1761
        %v1775 = vmul.f32 %v1756, %v1761
        %v1776 = vmul.f32 %v1757, %v1761
        %v1777 = vmul.f32 %v1758, %v1761
        %v1778 = vmul.f32 %v1759, %v1761
        %v1780 = vperm.slane %v1407, 0
        %v1782 = vadd.f32 %v1763, %v1780
        %v1783 = vadd.f32 %v1764, %v1780
        %v1784 = vadd.f32 %v1765, %v1780
        %v1785 = vadd.f32 %v1766, %v1780
        %v1786 = vadd.f32 %v1767, %v1780
        %v1787 = vadd.f32 %v1768, %v1780
        %v1788 = vadd.f32 %v1769, %v1780
        %v1789 = vadd.f32 %v1770, %v1780
        %v1790 = vadd.f32 %v1771, %v1780
        %v1791 = vadd.f32 %v1772, %v1780
        %v1792 = vadd.f32 %v1773, %v1780
        %v1793 = vadd.f32 %v1774, %v1780
        %v1794 = vadd.f32 %v1775, %v1780
        %v1795 = vadd.f32 %v1776, %v1780
        %v1796 = vadd.f32 %v1777, %v1780
        %v1797 = vadd.f32 %v1778, %v1780
        %v1798 = vpack.c.bf16 %v1375, %v1374
        %v1799 = vpack.c.bf16 %v1377, %v1376
        %v1800 = vpack.c.bf16 %v1379, %v1378
        %v1801 = vpack.c.bf16 %v1381, %v1380
        %v1802 = vpack.c.bf16 %v1383, %v1382
        %v1803 = vpack.c.bf16 %v1385, %v1384
        %v1804 = vpack.c.bf16 %v1387, %v1386
        %v1805 = vpack.c.bf16 %v1389, %v1388
        %v1806 = vpack.c.bf16 %v1391, %v1390
        %v1807 = vpack.c.bf16 %v1393, %v1392
        %v1808 = vpack.c.bf16 %v1395, %v1394
        %v1809 = vpack.c.bf16 %v1397, %v1396
        %v1810 = vpack.c.bf16 %v1399, %v1398
        %v1811 = vpack.c.bf16 %v1401, %v1400
        %v1812 = vpack.c.bf16 %v1403, %v1402
        %v1813 = vpack.c.bf16 %v1405, %v1404
        %v1814 = vpack.c.bf16 %v1783, %v1782
        %v1815 = vpack.c.bf16 %v1785, %v1784
        %v1816 = vpack.c.bf16 %v1787, %v1786
        %v1817 = vpack.c.bf16 %v1789, %v1788
        %v1818 = vpack.c.bf16 %v1791, %v1790
        %v1819 = vpack.c.bf16 %v1793, %v1792
        %v1820 = vpack.c.bf16 %v1795, %v1794
        %v1821 = vpack.c.bf16 %v1797, %v1796
        %v1822 = vld [vmem:[#allocation7] sm:$0xf]
        %v1823 = vld [vmem:[#allocation7 + $0x4] sm:$0xf]
        %v1824 = vld [vmem:[#allocation7 + $0x8] sm:$0xf]
        %v1825 = vld [vmem:[#allocation7 + $0xc] sm:$0xf]
        %v1826 = vld [vmem:[#allocation7 + $0x10] sm:$0xf]
        %v1827 = vld [vmem:[#allocation7 + $0x14] sm:$0xf]
        %v1828 = vld [vmem:[#allocation7 + $0x18] sm:$0xf]
        %v1829 = vld [vmem:[#allocation7 + $0x1c] sm:$0xf]
        %v1830 = vld [vmem:[#allocation7 + $0x20] sm:$0xf]
        %v1831 = vld [vmem:[#allocation7 + $0x24] sm:$0xf]
        %v1832 = vld [vmem:[#allocation7 + $0x28] sm:$0xf]
        %v1833 = vld [vmem:[#allocation7 + $0x2c] sm:$0xf]
        %v1834 = vld [vmem:[#allocation7 + $0x30] sm:$0xf]
        %v1835 = vld [vmem:[#allocation7 + $0x34] sm:$0xf]
        %v1836 = vld [vmem:[#allocation7 + $0x38] sm:$0xf]
        %v1837 = vld [vmem:[#allocation7 + $0x3c] sm:$0xf]
        %v1838 = vld [vmem:[%s7] sm:$0x1]
        %v1840 = vperm.slane %v1838, 0
        %v1858 = vunpack.c.l.b16 %v1822
        %v1859 = vunpack.c.l.b16 %v1823
        %v1860 = vunpack.c.l.b16 %v1824
        %v1861 = vunpack.c.l.b16 %v1825
        %v1862 = vunpack.c.l.b16 %v1826
        %v1863 = vunpack.c.l.b16 %v1827
        %v1864 = vunpack.c.l.b16 %v1828
        %v1865 = vunpack.c.l.b16 %v1829
        %v1866 = vunpack.c.l.b16 %v1830
        %v1867 = vunpack.c.l.b16 %v1831
        %v1868 = vunpack.c.l.b16 %v1832
        %v1869 = vunpack.c.l.b16 %v1833
        %v1870 = vunpack.c.l.b16 %v1834
        %v1871 = vunpack.c.l.b16 %v1835
        %v1872 = vunpack.c.l.b16 %v1836
        %v1873 = vunpack.c.l.b16 %v1837
        %v1874 = vpack.c.b16 %v1859, %v1858
        %v1875 = vpack.c.b16 %v1861, %v1860
        %v1876 = vpack.c.b16 %v1863, %v1862
        %v1877 = vpack.c.b16 %v1865, %v1864
        %v1878 = vpack.c.b16 %v1867, %v1866
        %v1879 = vpack.c.b16 %v1869, %v1868
        %v1880 = vpack.c.b16 %v1871, %v1870
        %v1881 = vpack.c.b16 %v1873, %v1872
        %1890 = vmatpush.bf16.msra.mxu0 %v1881
        %1891 = vmatpush.bf16.msra.mxu0 %v1880
        %1892 = vmatpush.bf16.msra.mxu0 %v1879
        %1893 = vmatpush.bf16.msra.mxu0 %v1878
        %1894 = vmatpush.bf16.msra.mxu0 %v1877
        %1895 = vmatpush.bf16.msra.mxu0 %v1876
        %1896 = vmatpush.bf16.msra.mxu0 %v1875
        %1897 = vmatpush.bf16.msra.mxu0 %v1874
        %1898 = vmatmul.bf16.gmra.mxu0 %v1798
        %v1899 = vpop.f32.mrf.mxu0
        %v1900 = vadd.f32 %v1840, %v1899
        %v1901 = vpop.f32.mrf.mxu0
        %v1902 = vadd.f32 %v1840, %v1901
        %1903 = vmatmul.bf16.gmra.mxu0 %v1799
        %v1904 = vpop.f32.mrf.mxu0
        %v1905 = vadd.f32 %v1840, %v1904
        %v1906 = vpop.f32.mrf.mxu0
        %v1907 = vadd.f32 %v1840, %v1906
        %1908 = vmatmul.bf16.gmra.mxu0 %v1800
        %v1909 = vpop.f32.mrf.mxu0
        %v1910 = vadd.f32 %v1840, %v1909
        %v1911 = vpop.f32.mrf.mxu0
        %v1912 = vadd.f32 %v1840, %v1911
        %1913 = vmatmul.bf16.gmra.mxu0 %v1801
        %v1914 = vpop.f32.mrf.mxu0
        %v1915 = vadd.f32 %v1840, %v1914
        %v1916 = vpop.f32.mrf.mxu0
        %v1917 = vadd.f32 %v1840, %v1916
        %1918 = vmatmul.bf16.gmra.mxu0 %v1802
        %v1919 = vpop.f32.mrf.mxu0
        %v1920 = vadd.f32 %v1840, %v1919
        %v1921 = vpop.f32.mrf.mxu0
        %v1922 = vadd.f32 %v1840, %v1921
        %1923 = vmatmul.bf16.gmra.mxu0 %v1803
        %v1924 = vpop.f32.mrf.mxu0
        %v1925 = vadd.f32 %v1840, %v1924
        %v1926 = vpop.f32.mrf.mxu0
        %v1927 = vadd.f32 %v1840, %v1926
        %1928 = vmatmul.bf16.gmra.mxu0 %v1804
        %v1929 = vpop.f32.mrf.mxu0
        %v1930 = vadd.f32 %v1840, %v1929
        %v1931 = vpop.f32.mrf.mxu0
        %v1932 = vadd.f32 %v1840, %v1931
        %1933 = vmatmul.bf16.gmra.mxu0 %v1805
        %v1934 = vpop.f32.mrf.mxu0
        %v1935 = vadd.f32 %v1840, %v1934
        %v1936 = vpop.f32.mrf.mxu0
        %v1937 = vadd.f32 %v1840, %v1936
        %1938 = vmatmul.bf16.gmra.mxu0 %v1806
        %v1939 = vpop.f32.mrf.mxu0
        %v1940 = vadd.f32 %v1840, %v1939
        %v1941 = vpop.f32.mrf.mxu0
        %v1942 = vadd.f32 %v1840, %v1941
        %1943 = vmatmul.bf16.gmra.mxu0 %v1807
        %v1944 = vpop.f32.mrf.mxu0
        %v1945 = vadd.f32 %v1840, %v1944
        %v1946 = vpop.f32.mrf.mxu0
        %v1947 = vadd.f32 %v1840, %v1946
        %1948 = vmatmul.bf16.gmra.mxu0 %v1808
        %v1949 = vpop.f32.mrf.mxu0
        %v1950 = vadd.f32 %v1840, %v1949
        %v1951 = vpop.f32.mrf.mxu0
        %v1952 = vadd.f32 %v1840, %v1951
        %1953 = vmatmul.bf16.gmra.mxu0 %v1809
        %v1954 = vpop.f32.mrf.mxu0
        %v1955 = vadd.f32 %v1840, %v1954
        %v1956 = vpop.f32.mrf.mxu0
        %v1957 = vadd.f32 %v1840, %v1956
        %1958 = vmatmul.bf16.gmra.mxu0 %v1810
        %v1959 = vpop.f32.mrf.mxu0
        %v1960 = vadd.f32 %v1840, %v1959
        %v1961 = vpop.f32.mrf.mxu0
        %v1962 = vadd.f32 %v1840, %v1961
        %1963 = vmatmul.bf16.gmra.mxu0 %v1811
        %v1964 = vpop.f32.mrf.mxu0
        %v1965 = vadd.f32 %v1840, %v1964
        %v1966 = vpop.f32.mrf.mxu0
        %v1967 = vadd.f32 %v1840, %v1966
        %1968 = vmatmul.bf16.gmra.mxu0 %v1812
        %v1969 = vpop.f32.mrf.mxu0
        %v1970 = vadd.f32 %v1840, %v1969
        %v1971 = vpop.f32.mrf.mxu0
        %v1972 = vadd.f32 %v1840, %v1971
        %1973 = vmatmul.bf16.gmra.mxu0 %v1813
        %v1974 = vpop.f32.mrf.mxu0
        %v1975 = vadd.f32 %v1840, %v1974
        %v1976 = vpop.f32.mrf.mxu0
        %v1977 = vadd.f32 %v1840, %v1976
        %1978 = vdwg.mxu0
        %v1979 = vld [vmem:[#allocation8] sm:$0xf]
        %v1980 = vld [vmem:[#allocation8 + $0x4] sm:$0xf]
        %v1981 = vld [vmem:[#allocation8 + $0x8] sm:$0xf]
        %v1982 = vld [vmem:[#allocation8 + $0xc] sm:$0xf]
        %v1983 = vld [vmem:[#allocation8 + $0x10] sm:$0xf]
        %v1984 = vld [vmem:[#allocation8 + $0x14] sm:$0xf]
        %v1985 = vld [vmem:[#allocation8 + $0x18] sm:$0xf]
        %v1986 = vld [vmem:[#allocation8 + $0x1c] sm:$0xf]
        %v1987 = vld [vmem:[#allocation8 + $0x20] sm:$0xf]
        %v1988 = vld [vmem:[#allocation8 + $0x24] sm:$0xf]
        %v1989 = vld [vmem:[#allocation8 + $0x28] sm:$0xf]
        %v1990 = vld [vmem:[#allocation8 + $0x2c] sm:$0xf]
        %v1991 = vld [vmem:[#allocation8 + $0x30] sm:$0xf]
        %v1992 = vld [vmem:[#allocation8 + $0x34] sm:$0xf]
        %v1993 = vld [vmem:[#allocation8 + $0x38] sm:$0xf]
        %v1994 = vld [vmem:[#allocation8 + $0x3c] sm:$0xf]
        %v1995 = vld [vmem:[%s9] sm:$0x1]
        %v1997 = vperm.slane %v1995, 0
        %v2015 = vunpack.c.l.b16 %v1979
        %v2016 = vunpack.c.l.b16 %v1980
        %v2017 = vunpack.c.l.b16 %v1981
        %v2018 = vunpack.c.l.b16 %v1982
        %v2019 = vunpack.c.l.b16 %v1983
        %v2020 = vunpack.c.l.b16 %v1984
        %v2021 = vunpack.c.l.b16 %v1985
        %v2022 = vunpack.c.l.b16 %v1986
        %v2023 = vunpack.c.l.b16 %v1987
        %v2024 = vunpack.c.l.b16 %v1988
        %v2025 = vunpack.c.l.b16 %v1989
        %v2026 = vunpack.c.l.b16 %v1990
        %v2027 = vunpack.c.l.b16 %v1991
        %v2028 = vunpack.c.l.b16 %v1992
        %v2029 = vunpack.c.l.b16 %v1993
        %v2030 = vunpack.c.l.b16 %v1994
        %v2031 = vpack.c.b16 %v2016, %v2015
        %v2032 = vpack.c.b16 %v2018, %v2017
        %v2033 = vpack.c.b16 %v2020, %v2019
        %v2034 = vpack.c.b16 %v2022, %v2021
        %v2035 = vpack.c.b16 %v2024, %v2023
        %v2036 = vpack.c.b16 %v2026, %v2025
        %v2037 = vpack.c.b16 %v2028, %v2027
        %v2038 = vpack.c.b16 %v2030, %v2029
        %2047 = vmatpush.bf16.msra.mxu0 %v2038
        %2048 = vmatpush.bf16.msra.mxu0 %v2037
        %2049 = vmatpush.bf16.msra.mxu0 %v2036
        %2050 = vmatpush.bf16.msra.mxu0 %v2035
        %2051 = vmatpush.bf16.msra.mxu0 %v2034
        %2052 = vmatpush.bf16.msra.mxu0 %v2033
        %2053 = vmatpush.bf16.msra.mxu0 %v2032
        %2054 = vmatpush.bf16.msra.mxu0 %v2031
        %2055 = vmatmul.bf16.gmra.mxu0 %v1814
        %v2056 = vpop.f32.mrf.mxu0
        %v2057 = vadd.f32 %v1997, %v2056
        %v2058 = vpop.f32.mrf.mxu0
        %v2059 = vadd.f32 %v1997, %v2058
        %2060 = vmatmul.bf16.gmra.mxu0 %v1815
        %v2061 = vpop.f32.mrf.mxu0
        %v2062 = vadd.f32 %v1997, %v2061
        %v2063 = vpop.f32.mrf.mxu0
        %v2064 = vadd.f32 %v1997, %v2063
        %2065 = vmatmul.bf16.gmra.mxu0 %v1816
        %v2066 = vpop.f32.mrf.mxu0
        %v2067 = vadd.f32 %v1997, %v2066
        %v2068 = vpop.f32.mrf.mxu0
        %v2069 = vadd.f32 %v1997, %v2068
        %2070 = vmatmul.bf16.gmra.mxu0 %v1817
        %v2071 = vpop.f32.mrf.mxu0
        %v2072 = vadd.f32 %v1997, %v2071
        %v2073 = vpop.f32.mrf.mxu0
        %v2074 = vadd.f32 %v1997, %v2073
        %2075 = vmatmul.bf16.gmra.mxu0 %v1818
        %v2076 = vpop.f32.mrf.mxu0
        %v2077 = vadd.f32 %v1997, %v2076
        %v2078 = vpop.f32.mrf.mxu0
        %v2079 = vadd.f32 %v1997, %v2078
        %2080 = vmatmul.bf16.gmra.mxu0 %v1819
        %v2081 = vpop.f32.mrf.mxu0
        %v2082 = vadd.f32 %v1997, %v2081
        %v2083 = vpop.f32.mrf.mxu0
        %v2084 = vadd.f32 %v1997, %v2083
        %2085 = vmatmul.bf16.gmra.mxu0 %v1820
        %v2086 = vpop.f32.mrf.mxu0
        %v2087 = vadd.f32 %v1997, %v2086
        %v2088 = vpop.f32.mrf.mxu0
        %v2089 = vadd.f32 %v1997, %v2088
        %2090 = vmatmul.bf16.gmra.mxu0 %v1821
        %v2091 = vpop.f32.mrf.mxu0
        %v2092 = vadd.f32 %v1997, %v2091
        %v2093 = vpop.f32.mrf.mxu0
        %v2094 = vadd.f32 %v1997, %v2093
        %2095 = vdwg.mxu0
        %v2096 = vld [vmem:[#allocation10] sm:$0xf]
        %v2097 = vld [vmem:[#allocation10 + $0x4] sm:$0xf]
        %v2098 = vld [vmem:[#allocation10 + $0x8] sm:$0xf]
        %v2099 = vld [vmem:[#allocation10 + $0xc] sm:$0xf]
        %v2100 = vld [vmem:[#allocation10 + $0x10] sm:$0xf]
        %v2101 = vld [vmem:[#allocation10 + $0x14] sm:$0xf]
        %v2102 = vld [vmem:[#allocation10 + $0x18] sm:$0xf]
        %v2103 = vld [vmem:[#allocation10 + $0x1c] sm:$0xf]
        %v2104 = vld [vmem:[#allocation10 + $0x20] sm:$0xf]
        %v2105 = vld [vmem:[#allocation10 + $0x24] sm:$0xf]
        %v2106 = vld [vmem:[#allocation10 + $0x28] sm:$0xf]
        %v2107 = vld [vmem:[#allocation10 + $0x2c] sm:$0xf]
        %v2108 = vld [vmem:[#allocation10 + $0x30] sm:$0xf]
        %v2109 = vld [vmem:[#allocation10 + $0x34] sm:$0xf]
        %v2110 = vld [vmem:[#allocation10 + $0x38] sm:$0xf]
        %v2111 = vld [vmem:[#allocation10 + $0x3c] sm:$0xf]
        %v2112 = vld [vmem:[%s11] sm:$0x1]
        %v2114 = vperm.slane %v2112, 0
        %v2132 = vunpack.c.l.b16 %v2096
        %v2133 = vunpack.c.l.b16 %v2097
        %v2134 = vunpack.c.l.b16 %v2098
        %v2135 = vunpack.c.l.b16 %v2099
        %v2136 = vunpack.c.l.b16 %v2100
        %v2137 = vunpack.c.l.b16 %v2101
        %v2138 = vunpack.c.l.b16 %v2102
        %v2139 = vunpack.c.l.b16 %v2103
        %v2140 = vunpack.c.l.b16 %v2104
        %v2141 = vunpack.c.l.b16 %v2105
        %v2142 = vunpack.c.l.b16 %v2106
        %v2143 = vunpack.c.l.b16 %v2107
        %v2144 = vunpack.c.l.b16 %v2108
        %v2145 = vunpack.c.l.b16 %v2109
        %v2146 = vunpack.c.l.b16 %v2110
        %v2147 = vunpack.c.l.b16 %v2111
        %v2148 = vpack.c.b16 %v2133, %v2132
        %v2149 = vpack.c.b16 %v2135, %v2134
        %v2150 = vpack.c.b16 %v2137, %v2136
        %v2151 = vpack.c.b16 %v2139, %v2138
        %v2152 = vpack.c.b16 %v2141, %v2140
        %v2153 = vpack.c.b16 %v2143, %v2142
        %v2154 = vpack.c.b16 %v2145, %v2144
        %v2155 = vpack.c.b16 %v2147, %v2146
        %2164 = vmatpush.bf16.msra.mxu0 %v2155
        %2165 = vmatpush.bf16.msra.mxu0 %v2154
        %2166 = vmatpush.bf16.msra.mxu0 %v2153
        %2167 = vmatpush.bf16.msra.mxu0 %v2152
        %2168 = vmatpush.bf16.msra.mxu0 %v2151
        %2169 = vmatpush.bf16.msra.mxu0 %v2150
        %2170 = vmatpush.bf16.msra.mxu0 %v2149
        %2171 = vmatpush.bf16.msra.mxu0 %v2148
        %2172 = vmatmul.bf16.gmra.mxu0 %v1814
        %v2173 = vpop.f32.mrf.mxu0
        %v2174 = vadd.f32 %v2114, %v2173
        %v2175 = vpop.f32.mrf.mxu0
        %v2176 = vadd.f32 %v2114, %v2175
        %2177 = vmatmul.bf16.gmra.mxu0 %v1815
        %v2178 = vpop.f32.mrf.mxu0
        %v2179 = vadd.f32 %v2114, %v2178
        %v2180 = vpop.f32.mrf.mxu0
        %v2181 = vadd.f32 %v2114, %v2180
        %2182 = vmatmul.bf16.gmra.mxu0 %v1816
        %v2183 = vpop.f32.mrf.mxu0
        %v2184 = vadd.f32 %v2114, %v2183
        %v2185 = vpop.f32.mrf.mxu0
        %v2186 = vadd.f32 %v2114, %v2185
        %2187 = vmatmul.bf16.gmra.mxu0 %v1817
        %v2188 = vpop.f32.mrf.mxu0
        %v2189 = vadd.f32 %v2114, %v2188
        %v2190 = vpop.f32.mrf.mxu0
        %v2191 = vadd.f32 %v2114, %v2190
        %2192 = vmatmul.bf16.gmra.mxu0 %v1818
        %v2193 = vpop.f32.mrf.mxu0
        %v2194 = vadd.f32 %v2114, %v2193
        %v2195 = vpop.f32.mrf.mxu0
        %v2196 = vadd.f32 %v2114, %v2195
        %2197 = vmatmul.bf16.gmra.mxu0 %v1819
        %v2198 = vpop.f32.mrf.mxu0
        %v2199 = vadd.f32 %v2114, %v2198
        %v2200 = vpop.f32.mrf.mxu0
        %v2201 = vadd.f32 %v2114, %v2200
        %2202 = vmatmul.bf16.gmra.mxu0 %v1820
        %v2203 = vpop.f32.mrf.mxu0
        %v2204 = vadd.f32 %v2114, %v2203
        %v2205 = vpop.f32.mrf.mxu0
        %v2206 = vadd.f32 %v2114, %v2205
        %2207 = vmatmul.bf16.gmra.mxu0 %v1821
        %v2208 = vpop.f32.mrf.mxu0
        %v2209 = vadd.f32 %v2114, %v2208
        %v2210 = vpop.f32.mrf.mxu0
        %v2211 = vadd.f32 %v2114, %v2210
        %2212 = vdwg.mxu0
        %v2213 = vld [vmem:[#allocation11] sm:$0xff]
        %v2214 = vld [vmem:[#allocation11 + $0x8] sm:$0xff]
        %v2215 = vld [vmem:[#allocation11 + $0x10] sm:$0xff]
        %v2216 = vld [vmem:[#allocation11 + $0x18] sm:$0xff]
        %v2217 = vld [vmem:[#allocation11 + $0x20] sm:$0xff]
        %v2218 = vld [vmem:[#allocation11 + $0x28] sm:$0xff]
        %v2219 = vld [vmem:[#allocation11 + $0x30] sm:$0xff]
        %v2220 = vld [vmem:[#allocation11 + $0x38] sm:$0xff]
        %v2221 = vld [vmem:[#allocation11 + $0x40] sm:$0xff]
        %v2222 = vld [vmem:[#allocation11 + $0x48] sm:$0xff]
        %v2223 = vld [vmem:[#allocation11 + $0x50] sm:$0xff]
        %v2224 = vld [vmem:[#allocation11 + $0x58] sm:$0xff]
        %v2225 = vld [vmem:[#allocation11 + $0x60] sm:$0xff]
        %v2226 = vld [vmem:[#allocation11 + $0x68] sm:$0xff]
        %v2227 = vld [vmem:[#allocation11 + $0x70] sm:$0xff]
        %v2228 = vld [vmem:[#allocation11 + $0x78] sm:$0xff]
        %vm2229 = vcmask 261120
        %v2230 = vsel %vm2229, %v1900, -inf
        %2231 = vmax.xlane.f32.xlu0 %v2230
        %v2232 = vpop.xlane.xlu0 %2231
        %v2233 = vsel %vm2229, %v1902, -inf
        %2234 = vmax.xlane.f32.xlu0 %v2233
        %v2235 = vpop.xlane.xlu0 %2234
        %v2236 = vsel %vm2229, %v1905, -inf
        %2237 = vmax.xlane.f32.xlu0 %v2236
        %v2238 = vpop.xlane.xlu0 %2237
        %v2239 = vsel %vm2229, %v1907, -inf
        %2240 = vmax.xlane.f32.xlu0 %v2239
        %v2241 = vpop.xlane.xlu0 %2240
        %v2242 = vsel %vm2229, %v1910, -inf
        %2243 = vmax.xlane.f32.xlu0 %v2242
        %v2244 = vpop.xlane.xlu0 %2243
        %v2245 = vsel %vm2229, %v1912, -inf
        %2246 = vmax.xlane.f32.xlu0 %v2245
        %v2247 = vpop.xlane.xlu0 %2246
        %v2248 = vsel %vm2229, %v1915, -inf
        %2249 = vmax.xlane.f32.xlu0 %v2248
        %v2250 = vpop.xlane.xlu0 %2249
        %v2251 = vsel %vm2229, %v1917, -inf
        %2252 = vmax.xlane.f32.xlu0 %v2251
        %v2253 = vpop.xlane.xlu0 %2252
        %v2254 = vsel %vm2229, %v1920, -inf
        %2255 = vmax.xlane.f32.xlu0 %v2254
        %v2256 = vpop.xlane.xlu0 %2255
        %v2257 = vsel %vm2229, %v1922, -inf
        %2258 = vmax.xlane.f32.xlu0 %v2257
        %v2259 = vpop.xlane.xlu0 %2258
        %v2260 = vsel %vm2229, %v1925, -inf
        %2261 = vmax.xlane.f32.xlu0 %v2260
        %v2262 = vpop.xlane.xlu0 %2261
        %v2263 = vsel %vm2229, %v1927, -inf
        %2264 = vmax.xlane.f32.xlu0 %v2263
        %v2265 = vpop.xlane.xlu0 %2264
        %v2266 = vsel %vm2229, %v1930, -inf
        %2267 = vmax.xlane.f32.xlu0 %v2266
        %v2268 = vpop.xlane.xlu0 %2267
        %v2269 = vsel %vm2229, %v1932, -inf
        %2270 = vmax.xlane.f32.xlu0 %v2269
        %v2271 = vpop.xlane.xlu0 %2270
        %v2272 = vsel %vm2229, %v1935, -inf
        %2273 = vmax.xlane.f32.xlu0 %v2272
        %v2274 = vpop.xlane.xlu0 %2273
        %v2275 = vsel %vm2229, %v1937, -inf
        %2276 = vmax.xlane.f32.xlu0 %v2275
        %v2277 = vpop.xlane.xlu0 %2276
        %v2278 = vsel %vm2229, %v1940, -inf
        %2279 = vmax.xlane.f32.xlu0 %v2278
        %v2280 = vpop.xlane.xlu0 %2279
        %v2281 = vsel %vm2229, %v1942, -inf
        %2282 = vmax.xlane.f32.xlu0 %v2281
        %v2283 = vpop.xlane.xlu0 %2282
        %v2284 = vsel %vm2229, %v1945, -inf
        %2285 = vmax.xlane.f32.xlu0 %v2284
        %v2286 = vpop.xlane.xlu0 %2285
        %v2287 = vsel %vm2229, %v1947, -inf
        %2288 = vmax.xlane.f32.xlu0 %v2287
        %v2289 = vpop.xlane.xlu0 %2288
        %v2290 = vsel %vm2229, %v1950, -inf
        %2291 = vmax.xlane.f32.xlu0 %v2290
        %v2292 = vpop.xlane.xlu0 %2291
        %v2293 = vsel %vm2229, %v1952, -inf
        %2294 = vmax.xlane.f32.xlu0 %v2293
        %v2295 = vpop.xlane.xlu0 %2294
        %v2296 = vsel %vm2229, %v1955, -inf
        %2297 = vmax.xlane.f32.xlu0 %v2296
        %v2298 = vpop.xlane.xlu0 %2297
        %v2299 = vsel %vm2229, %v1957, -inf
        %2300 = vmax.xlane.f32.xlu0 %v2299
        %v2301 = vpop.xlane.xlu0 %2300
        %v2302 = vsel %vm2229, %v1960, -inf
        %2303 = vmax.xlane.f32.xlu0 %v2302
        %v2304 = vpop.xlane.xlu0 %2303
        %v2305 = vsel %vm2229, %v1962, -inf
        %2306 = vmax.xlane.f32.xlu0 %v2305
        %v2307 = vpop.xlane.xlu0 %2306
        %v2308 = vsel %vm2229, %v1965, -inf
        %2309 = vmax.xlane.f32.xlu0 %v2308
        %v2310 = vpop.xlane.xlu0 %2309
        %v2311 = vsel %vm2229, %v1967, -inf
        %2312 = vmax.xlane.f32.xlu0 %v2311
        %v2313 = vpop.xlane.xlu0 %2312
        %v2314 = vsel %vm2229, %v1970, -inf
        %2315 = vmax.xlane.f32.xlu0 %v2314
        %v2316 = vpop.xlane.xlu0 %2315
        %v2317 = vsel %vm2229, %v1972, -inf
        %2318 = vmax.xlane.f32.xlu0 %v2317
        %v2319 = vpop.xlane.xlu0 %2318
        %v2320 = vsel %vm2229, %v1975, -inf
        %2321 = vmax.xlane.f32.xlu0 %v2320
        %v2322 = vpop.xlane.xlu0 %2321
        %v2323 = vsel %vm2229, %v1977, -inf
        %2324 = vmax.xlane.f32.xlu0 %v2323
        %v2325 = vpop.xlane.xlu0 %2324
        %v2326 = vperm.slane %v2213, 0
        %v2327 = vmul.f32 %v2232, %v2326
        %v2328 = vmul.f32 %v2235, %v2326
        %v2329 = vmul.f32 %v2238, %v2326
        %v2330 = vmul.f32 %v2241, %v2326
        %v2331 = vmul.f32 %v2244, %v2326
        %v2332 = vmul.f32 %v2247, %v2326
        %v2333 = vmul.f32 %v2250, %v2326
        %v2334 = vmul.f32 %v2253, %v2326
        %v2335 = vmul.f32 %v2256, %v2326
        %v2336 = vmul.f32 %v2259, %v2326
        %v2337 = vmul.f32 %v2262, %v2326
        %v2338 = vmul.f32 %v2265, %v2326
        %v2339 = vmul.f32 %v2268, %v2326
        %v2340 = vmul.f32 %v2271, %v2326
        %v2341 = vmul.f32 %v2274, %v2326
        %v2342 = vmul.f32 %v2277, %v2326
        %v2343 = vmul.f32 %v2280, %v2326
        %v2344 = vmul.f32 %v2283, %v2326
        %v2345 = vmul.f32 %v2286, %v2326
        %v2346 = vmul.f32 %v2289, %v2326
        %v2347 = vmul.f32 %v2292, %v2326
        %v2348 = vmul.f32 %v2295, %v2326
        %v2349 = vmul.f32 %v2298, %v2326
        %v2350 = vmul.f32 %v2301, %v2326
        %v2351 = vmul.f32 %v2304, %v2326
        %v2352 = vmul.f32 %v2307, %v2326
        %v2353 = vmul.f32 %v2310, %v2326
        %v2354 = vmul.f32 %v2313, %v2326
        %v2355 = vmul.f32 %v2316, %v2326
        %v2356 = vmul.f32 %v2319, %v2326
        %v2357 = vmul.f32 %v2322, %v2326
        %v2358 = vmul.f32 %v2325, %v2326
        %vm2359 = vcmask 523520
        %v2360 = vsel %vm2359, %v1900, -inf
        %2361 = vmax.xlane.f32.xlu0 %v2360
        %v2362 = vpop.xlane.xlu0 %2361
        %v2363 = vsel %vm2359, %v1902, -inf
        %2364 = vmax.xlane.f32.xlu0 %v2363
        %v2365 = vpop.xlane.xlu0 %2364
        %v2366 = vsel %vm2359, %v1905, -inf
        %2367 = vmax.xlane.f32.xlu0 %v2366
        %v2368 = vpop.xlane.xlu0 %2367
        %v2369 = vsel %vm2359, %v1907, -inf
        %2370 = vmax.xlane.f32.xlu0 %v2369
        %v2371 = vpop.xlane.xlu0 %2370
        %v2372 = vsel %vm2359, %v1910, -inf
        %2373 = vmax.xlane.f32.xlu0 %v2372
        %v2374 = vpop.xlane.xlu0 %2373
        %v2375 = vsel %vm2359, %v1912, -inf
        %2376 = vmax.xlane.f32.xlu0 %v2375
        %v2377 = vpop.xlane.xlu0 %2376
        %v2378 = vsel %vm2359, %v1915, -inf
        %2379 = vmax.xlane.f32.xlu0 %v2378
        %v2380 = vpop.xlane.xlu0 %2379
        %v2381 = vsel %vm2359, %v1917, -inf
        %2382 = vmax.xlane.f32.xlu0 %v2381
        %v2383 = vpop.xlane.xlu0 %2382
        %v2384 = vsel %vm2359, %v1920, -inf
        %2385 = vmax.xlane.f32.xlu0 %v2384
        %v2386 = vpop.xlane.xlu0 %2385
        %v2387 = vsel %vm2359, %v1922, -inf
        %2388 = vmax.xlane.f32.xlu0 %v2387
        %v2389 = vpop.xlane.xlu0 %2388
        %v2390 = vsel %vm2359, %v1925, -inf
        %2391 = vmax.xlane.f32.xlu0 %v2390
        %v2392 = vpop.xlane.xlu0 %2391
        %v2393 = vsel %vm2359, %v1927, -inf
        %2394 = vmax.xlane.f32.xlu0 %v2393
        %v2395 = vpop.xlane.xlu0 %2394
        %v2396 = vsel %vm2359, %v1930, -inf
        %2397 = vmax.xlane.f32.xlu0 %v2396
        %v2398 = vpop.xlane.xlu0 %2397
        %v2399 = vsel %vm2359, %v1932, -inf
        %2400 = vmax.xlane.f32.xlu0 %v2399
        %v2401 = vpop.xlane.xlu0 %2400
        %v2402 = vsel %vm2359, %v1935, -inf
        %2403 = vmax.xlane.f32.xlu0 %v2402
        %v2404 = vpop.xlane.xlu0 %2403
        %v2405 = vsel %vm2359, %v1937, -inf
        %2406 = vmax.xlane.f32.xlu0 %v2405
        %v2407 = vpop.xlane.xlu0 %2406
        %v2408 = vsel %vm2359, %v1940, -inf
        %2409 = vmax.xlane.f32.xlu0 %v2408
        %v2410 = vpop.xlane.xlu0 %2409
        %v2411 = vsel %vm2359, %v1942, -inf
        %2412 = vmax.xlane.f32.xlu0 %v2411
        %v2413 = vpop.xlane.xlu0 %2412
        %v2414 = vsel %vm2359, %v1945, -inf
        %2415 = vmax.xlane.f32.xlu0 %v2414
        %v2416 = vpop.xlane.xlu0 %2415
        %v2417 = vsel %vm2359, %v1947, -inf
        %2418 = vmax.xlane.f32.xlu0 %v2417
        %v2419 = vpop.xlane.xlu0 %2418
        %v2420 = vsel %vm2359, %v1950, -inf
        %2421 = vmax.xlane.f32.xlu0 %v2420
        %v2422 = vpop.xlane.xlu0 %2421
        %v2423 = vsel %vm2359, %v1952, -inf
        %2424 = vmax.xlane.f32.xlu0 %v2423
        %v2425 = vpop.xlane.xlu0 %2424
        %v2426 = vsel %vm2359, %v1955, -inf
        %2427 = vmax.xlane.f32.xlu0 %v2426
        %v2428 = vpop.xlane.xlu0 %2427
        %v2429 = vsel %vm2359, %v1957, -inf
        %2430 = vmax.xlane.f32.xlu0 %v2429
        %v2431 = vpop.xlane.xlu0 %2430
        %v2432 = vsel %vm2359, %v1960, -inf
        %2433 = vmax.xlane.f32.xlu0 %v2432
        %v2434 = vpop.xlane.xlu0 %2433
        %v2435 = vsel %vm2359, %v1962, -inf
        %2436 = vmax.xlane.f32.xlu0 %v2435
        %v2437 = vpop.xlane.xlu0 %2436
        %v2438 = vsel %vm2359, %v1965, -inf
        %2439 = vmax.xlane.f32.xlu0 %v2438
        %v2440 = vpop.xlane.xlu0 %2439
        %v2441 = vsel %vm2359, %v1967, -inf
        %2442 = vmax.xlane.f32.xlu0 %v2441
        %v2443 = vpop.xlane.xlu0 %2442
        %v2444 = vsel %vm2359, %v1970, -inf
        %2445 = vmax.xlane.f32.xlu0 %v2444
        %v2446 = vpop.xlane.xlu0 %2445
        %v2447 = vsel %vm2359, %v1972, -inf
        %2448 = vmax.xlane.f32.xlu0 %v2447
        %v2449 = vpop.xlane.xlu0 %2448
        %v2450 = vsel %vm2359, %v1975, -inf
        %2451 = vmax.xlane.f32.xlu0 %v2450
        %v2452 = vpop.xlane.xlu0 %2451
        %v2453 = vsel %vm2359, %v1977, -inf
        %2454 = vmax.xlane.f32.xlu0 %v2453
        %v2455 = vpop.xlane.xlu0 %2454
        %v2456 = vperm.slane %v2217, 0
        %v2457 = vmul.f32 %v2362, %v2456
        %v2458 = vmul.f32 %v2365, %v2456
        %v2459 = vmul.f32 %v2368, %v2456
        %v2460 = vmul.f32 %v2371, %v2456
        %v2461 = vmul.f32 %v2374, %v2456
        %v2462 = vmul.f32 %v2377, %v2456
        %v2463 = vmul.f32 %v2380, %v2456
        %v2464 = vmul.f32 %v2383, %v2456
        %v2465 = vmul.f32 %v2386, %v2456
        %v2466 = vmul.f32 %v2389, %v2456
        %v2467 = vmul.f32 %v2392, %v2456
        %v2468 = vmul.f32 %v2395, %v2456
        %v2469 = vmul.f32 %v2398, %v2456
        %v2470 = vmul.f32 %v2401, %v2456
        %v2471 = vmul.f32 %v2404, %v2456
        %v2472 = vmul.f32 %v2407, %v2456
        %v2473 = vmul.f32 %v2410, %v2456
        %v2474 = vmul.f32 %v2413, %v2456
        %v2475 = vmul.f32 %v2416, %v2456
        %v2476 = vmul.f32 %v2419, %v2456
        %v2477 = vmul.f32 %v2422, %v2456
        %v2478 = vmul.f32 %v2425, %v2456
        %v2479 = vmul.f32 %v2428, %v2456
        %v2480 = vmul.f32 %v2431, %v2456
        %v2481 = vmul.f32 %v2434, %v2456
        %v2482 = vmul.f32 %v2437, %v2456
        %v2483 = vmul.f32 %v2440, %v2456
        %v2484 = vmul.f32 %v2443, %v2456
        %v2485 = vmul.f32 %v2446, %v2456
        %v2486 = vmul.f32 %v2449, %v2456
        %v2487 = vmul.f32 %v2452, %v2456
        %v2488 = vmul.f32 %v2455, %v2456
        %v2489 = vadd.f32 %v2327, %v2457
        %v2490 = vadd.f32 %v2328, %v2458
        %v2491 = vadd.f32 %v2329, %v2459
        %v2492 = vadd.f32 %v2330, %v2460
        %v2493 = vadd.f32 %v2331, %v2461
        %v2494 = vadd.f32 %v2332, %v2462
        %v2495 = vadd.f32 %v2333, %v2463
        %v2496 = vadd.f32 %v2334, %v2464
        %v2497 = vadd.f32 %v2335, %v2465
        %v2498 = vadd.f32 %v2336, %v2466
        %v2499 = vadd.f32 %v2337, %v2467
        %v2500 = vadd.f32 %v2338, %v2468
        %v2501 = vadd.f32 %v2339, %v2469
        %v2502 = vadd.f32 %v2340, %v2470
        %v2503 = vadd.f32 %v2341, %v2471
        %v2504 = vadd.f32 %v2342, %v2472
        %v2505 = vadd.f32 %v2343, %v2473
        %v2506 = vadd.f32 %v2344, %v2474
        %v2507 = vadd.f32 %v2345, %v2475
        %v2508 = vadd.f32 %v2346, %v2476
        %v2509 = vadd.f32 %v2347, %v2477
        %v2510 = vadd.f32 %v2348, %v2478
        %v2511 = vadd.f32 %v2349, %v2479
        %v2512 = vadd.f32 %v2350, %v2480
        %v2513 = vadd.f32 %v2351, %v2481
        %v2514 = vadd.f32 %v2352, %v2482
        %v2515 = vadd.f32 %v2353, %v2483
        %v2516 = vadd.f32 %v2354, %v2484
        %v2517 = vadd.f32 %v2355, %v2485
        %v2518 = vadd.f32 %v2356, %v2486
        %v2519 = vadd.f32 %v2357, %v2487
        %v2520 = vadd.f32 %v2358, %v2488
        %vm2521 = vcmask 785920
        %v2522 = vsel %vm2521, %v1900, -inf
        %2523 = vmax.xlane.f32.xlu0 %v2522
        %v2524 = vpop.xlane.xlu0 %2523
        %v2525 = vsel %vm2521, %v1902, -inf
        %2526 = vmax.xlane.f32.xlu0 %v2525
        %v2527 = vpop.xlane.xlu0 %2526
        %v2528 = vsel %vm2521, %v1905, -inf
        %2529 = vmax.xlane.f32.xlu0 %v2528
        %v2530 = vpop.xlane.xlu0 %2529
        %v2531 = vsel %vm2521, %v1907, -inf
        %2532 = vmax.xlane.f32.xlu0 %v2531
        %v2533 = vpop.xlane.xlu0 %2532
        %v2534 = vsel %vm2521, %v1910, -inf
        %2535 = vmax.xlane.f32.xlu0 %v2534
        %v2536 = vpop.xlane.xlu0 %2535
        %v2537 = vsel %vm2521, %v1912, -inf
        %2538 = vmax.xlane.f32.xlu0 %v2537
        %v2539 = vpop.xlane.xlu0 %2538
        %v2540 = vsel %vm2521, %v1915, -inf
        %2541 = vmax.xlane.f32.xlu0 %v2540
        %v2542 = vpop.xlane.xlu0 %2541
        %v2543 = vsel %vm2521, %v1917, -inf
        %2544 = vmax.xlane.f32.xlu0 %v2543
        %v2545 = vpop.xlane.xlu0 %2544
        %v2546 = vsel %vm2521, %v1920, -inf
        %2547 = vmax.xlane.f32.xlu0 %v2546
        %v2548 = vpop.xlane.xlu0 %2547
        %v2549 = vsel %vm2521, %v1922, -inf
        %2550 = vmax.xlane.f32.xlu0 %v2549
        %v2551 = vpop.xlane.xlu0 %2550
        %v2552 = vsel %vm2521, %v1925, -inf
        %2553 = vmax.xlane.f32.xlu0 %v2552
        %v2554 = vpop.xlane.xlu0 %2553
        %v2555 = vsel %vm2521, %v1927, -inf
        %2556 = vmax.xlane.f32.xlu0 %v2555
        %v2557 = vpop.xlane.xlu0 %2556
        %v2558 = vsel %vm2521, %v1930, -inf
        %2559 = vmax.xlane.f32.xlu0 %v2558
        %v2560 = vpop.xlane.xlu0 %2559
        %v2561 = vsel %vm2521, %v1932, -inf
        %2562 = vmax.xlane.f32.xlu0 %v2561
        %v2563 = vpop.xlane.xlu0 %2562
        %v2564 = vsel %vm2521, %v1935, -inf
        %2565 = vmax.xlane.f32.xlu0 %v2564
        %v2566 = vpop.xlane.xlu0 %2565
        %v2567 = vsel %vm2521, %v1937, -inf
        %2568 = vmax.xlane.f32.xlu0 %v2567
        %v2569 = vpop.xlane.xlu0 %2568
        %v2570 = vsel %vm2521, %v1940, -inf
        %2571 = vmax.xlane.f32.xlu0 %v2570
        %v2572 = vpop.xlane.xlu0 %2571
        %v2573 = vsel %vm2521, %v1942, -inf
        %2574 = vmax.xlane.f32.xlu0 %v2573
        %v2575 = vpop.xlane.xlu0 %2574
        %v2576 = vsel %vm2521, %v1945, -inf
        %2577 = vmax.xlane.f32.xlu0 %v2576
        %v2578 = vpop.xlane.xlu0 %2577
        %v2579 = vsel %vm2521, %v1947, -inf
        %2580 = vmax.xlane.f32.xlu0 %v2579
        %v2581 = vpop.xlane.xlu0 %2580
        %v2582 = vsel %vm2521, %v1950, -inf
        %2583 = vmax.xlane.f32.xlu0 %v2582
        %v2584 = vpop.xlane.xlu0 %2583
        %v2585 = vsel %vm2521, %v1952, -inf
        %2586 = vmax.xlane.f32.xlu0 %v2585
        %v2587 = vpop.xlane.xlu0 %2586
        %v2588 = vsel %vm2521, %v1955, -inf
        %2589 = vmax.xlane.f32.xlu0 %v2588
        %v2590 = vpop.xlane.xlu0 %2589
        %v2591 = vsel %vm2521, %v1957, -inf
        %2592 = vmax.xlane.f32.xlu0 %v2591
        %v2593 = vpop.xlane.xlu0 %2592
        %v2594 = vsel %vm2521, %v1960, -inf
        %2595 = vmax.xlane.f32.xlu0 %v2594
        %v2596 = vpop.xlane.xlu0 %2595
        %v2597 = vsel %vm2521, %v1962, -inf
        %2598 = vmax.xlane.f32.xlu0 %v2597
        %v2599 = vpop.xlane.xlu0 %2598
        %v2600 = vsel %vm2521, %v1965, -inf
        %2601 = vmax.xlane.f32.xlu0 %v2600
        %v2602 = vpop.xlane.xlu0 %2601
        %v2603 = vsel %vm2521, %v1967, -inf
        %2604 = vmax.xlane.f32.xlu0 %v2603
        %v2605 = vpop.xlane.xlu0 %2604
        %v2606 = vsel %vm2521, %v1970, -inf
        %2607 = vmax.xlane.f32.xlu0 %v2606
        %v2608 = vpop.xlane.xlu0 %2607
        %v2609 = vsel %vm2521, %v1972, -inf
        %2610 = vmax.xlane.f32.xlu0 %v2609
        %v2611 = vpop.xlane.xlu0 %2610
        %v2612 = vsel %vm2521, %v1975, -inf
        %2613 = vmax.xlane.f32.xlu0 %v2612
        %v2614 = vpop.xlane.xlu0 %2613
        %v2615 = vsel %vm2521, %v1977, -inf
        %2616 = vmax.xlane.f32.xlu0 %v2615
        %v2617 = vpop.xlane.xlu0 %2616
        %v2618 = vperm.slane %v2221, 0
        %v2619 = vmul.f32 %v2524, %v2618
        %v2620 = vmul.f32 %v2527, %v2618
        %v2621 = vmul.f32 %v2530, %v2618
        %v2622 = vmul.f32 %v2533, %v2618
        %v2623 = vmul.f32 %v2536, %v2618
        %v2624 = vmul.f32 %v2539, %v2618
        %v2625 = vmul.f32 %v2542, %v2618
        %v2626 = vmul.f32 %v2545, %v2618
        %v2627 = vmul.f32 %v2548, %v2618
        %v2628 = vmul.f32 %v2551, %v2618
        %v2629 = vmul.f32 %v2554, %v2618
        %v2630 = vmul.f32 %v2557, %v2618
        %v2631 = vmul.f32 %v2560, %v2618
        %v2632 = vmul.f32 %v2563, %v2618
        %v2633 = vmul.f32 %v2566, %v2618
        %v2634 = vmul.f32 %v2569, %v2618
        %v2635 = vmul.f32 %v2572, %v2618
        %v2636 = vmul.f32 %v2575, %v2618
        %v2637 = vmul.f32 %v2578, %v2618
        %v2638 = vmul.f32 %v2581, %v2618
        %v2639 = vmul.f32 %v2584, %v2618
        %v2640 = vmul.f32 %v2587, %v2618
        %v2641 = vmul.f32 %v2590, %v2618
        %v2642 = vmul.f32 %v2593, %v2618
        %v2643 = vmul.f32 %v2596, %v2618
        %v2644 = vmul.f32 %v2599, %v2618
        %v2645 = vmul.f32 %v2602, %v2618
        %v2646 = vmul.f32 %v2605, %v2618
        %v2647 = vmul.f32 %v2608, %v2618
        %v2648 = vmul.f32 %v2611, %v2618
        %v2649 = vmul.f32 %v2614, %v2618
        %v2650 = vmul.f32 %v2617, %v2618
        %v2651 = vadd.f32 %v2489, %v2619
        %v2652 = vadd.f32 %v2490, %v2620
        %v2653 = vadd.f32 %v2491, %v2621
        %v2654 = vadd.f32 %v2492, %v2622
        %v2655 = vadd.f32 %v2493, %v2623
        %v2656 = vadd.f32 %v2494, %v2624
        %v2657 = vadd.f32 %v2495, %v2625
        %v2658 = vadd.f32 %v2496, %v2626
        %v2659 = vadd.f32 %v2497, %v2627
        %v2660 = vadd.f32 %v2498, %v2628
        %v2661 = vadd.f32 %v2499, %v2629
        %v2662 = vadd.f32 %v2500, %v2630
        %v2663 = vadd.f32 %v2501, %v2631
        %v2664 = vadd.f32 %v2502, %v2632
        %v2665 = vadd.f32 %v2503, %v2633
        %v2666 = vadd.f32 %v2504, %v2634
        %v2667 = vadd.f32 %v2505, %v2635
        %v2668 = vadd.f32 %v2506, %v2636
        %v2669 = vadd.f32 %v2507, %v2637
        %v2670 = vadd.f32 %v2508, %v2638
        %v2671 = vadd.f32 %v2509, %v2639
        %v2672 = vadd.f32 %v2510, %v2640
        %v2673 = vadd.f32 %v2511, %v2641
        %v2674 = vadd.f32 %v2512, %v2642
        %v2675 = vadd.f32 %v2513, %v2643
        %v2676 = vadd.f32 %v2514, %v2644
        %v2677 = vadd.f32 %v2515, %v2645
        %v2678 = vadd.f32 %v2516, %v2646
        %v2679 = vadd.f32 %v2517, %v2647
        %v2680 = vadd.f32 %v2518, %v2648
        %v2681 = vadd.f32 %v2519, %v2649
        %v2682 = vadd.f32 %v2520, %v2650
        %vm2683 = vcmask 1048320
        %v2684 = vsel %vm2683, %v1900, -inf
        %2685 = vmax.xlane.f32.xlu0 %v2684
        %v2686 = vpop.xlane.xlu0 %2685
        %v2687 = vsel %vm2683, %v1902, -inf
        %2688 = vmax.xlane.f32.xlu0 %v2687
        %v2689 = vpop.xlane.xlu0 %2688
        %v2690 = vsel %vm2683, %v1905, -inf
        %2691 = vmax.xlane.f32.xlu0 %v2690
        %v2692 = vpop.xlane.xlu0 %2691
        %v2693 = vsel %vm2683, %v1907, -inf
        %2694 = vmax.xlane.f32.xlu0 %v2693
        %v2695 = vpop.xlane.xlu0 %2694
        %v2696 = vsel %vm2683, %v1910, -inf
        %2697 = vmax.xlane.f32.xlu0 %v2696
        %v2698 = vpop.xlane.xlu0 %2697
        %v2699 = vsel %vm2683, %v1912, -inf
        %2700 = vmax.xlane.f32.xlu0 %v2699
        %v2701 = vpop.xlane.xlu0 %2700
        %v2702 = vsel %vm2683, %v1915, -inf
        %2703 = vmax.xlane.f32.xlu0 %v2702
        %v2704 = vpop.xlane.xlu0 %2703
        %v2705 = vsel %vm2683, %v1917, -inf
        %2706 = vmax.xlane.f32.xlu0 %v2705
        %v2707 = vpop.xlane.xlu0 %2706
        %v2708 = vsel %vm2683, %v1920, -inf
        %2709 = vmax.xlane.f32.xlu0 %v2708
        %v2710 = vpop.xlane.xlu0 %2709
        %v2711 = vsel %vm2683, %v1922, -inf
        %2712 = vmax.xlane.f32.xlu0 %v2711
        %v2713 = vpop.xlane.xlu0 %2712
        %v2714 = vsel %vm2683, %v1925, -inf
        %2715 = vmax.xlane.f32.xlu0 %v2714
        %v2716 = vpop.xlane.xlu0 %2715
        %v2717 = vsel %vm2683, %v1927, -inf
        %2718 = vmax.xlane.f32.xlu0 %v2717
        %v2719 = vpop.xlane.xlu0 %2718
        %v2720 = vsel %vm2683, %v1930, -inf
        %2721 = vmax.xlane.f32.xlu0 %v2720
        %v2722 = vpop.xlane.xlu0 %2721
        %v2723 = vsel %vm2683, %v1932, -inf
        %2724 = vmax.xlane.f32.xlu0 %v2723
        %v2725 = vpop.xlane.xlu0 %2724
        %v2726 = vsel %vm2683, %v1935, -inf
        %2727 = vmax.xlane.f32.xlu0 %v2726
        %v2728 = vpop.xlane.xlu0 %2727
        %v2729 = vsel %vm2683, %v1937, -inf
        %2730 = vmax.xlane.f32.xlu0 %v2729
        %v2731 = vpop.xlane.xlu0 %2730
        %v2732 = vsel %vm2683, %v1940, -inf
        %2733 = vmax.xlane.f32.xlu0 %v2732
        %v2734 = vpop.xlane.xlu0 %2733
        %v2735 = vsel %vm2683, %v1942, -inf
        %2736 = vmax.xlane.f32.xlu0 %v2735
        %v2737 = vpop.xlane.xlu0 %2736
        %v2738 = vsel %vm2683, %v1945, -inf
        %2739 = vmax.xlane.f32.xlu0 %v2738
        %v2740 = vpop.xlane.xlu0 %2739
        %v2741 = vsel %vm2683, %v1947, -inf
        %2742 = vmax.xlane.f32.xlu0 %v2741
        %v2743 = vpop.xlane.xlu0 %2742
        %v2744 = vsel %vm2683, %v1950, -inf
        %2745 = vmax.xlane.f32.xlu0 %v2744
        %v2746 = vpop.xlane.xlu0 %2745
        %v2747 = vsel %vm2683, %v1952, -inf
        %2748 = vmax.xlane.f32.xlu0 %v2747
        %v2749 = vpop.xlane.xlu0 %2748
        %v2750 = vsel %vm2683, %v1955, -inf
        %2751 = vmax.xlane.f32.xlu0 %v2750
        %v2752 = vpop.xlane.xlu0 %2751
        %v2753 = vsel %vm2683, %v1957, -inf
        %2754 = vmax.xlane.f32.xlu0 %v2753
        %v2755 = vpop.xlane.xlu0 %2754
        %v2756 = vsel %vm2683, %v1960, -inf
        %2757 = vmax.xlane.f32.xlu0 %v2756
        %v2758 = vpop.xlane.xlu0 %2757
        %v2759 = vsel %vm2683, %v1962, -inf
        %2760 = vmax.xlane.f32.xlu0 %v2759
        %v2761 = vpop.xlane.xlu0 %2760
        %v2762 = vsel %vm2683, %v1965, -inf
        %2763 = vmax.xlane.f32.xlu0 %v2762
        %v2764 = vpop.xlane.xlu0 %2763
        %v2765 = vsel %vm2683, %v1967, -inf
        %2766 = vmax.xlane.f32.xlu0 %v2765
        %v2767 = vpop.xlane.xlu0 %2766
        %v2768 = vsel %vm2683, %v1970, -inf
        %2769 = vmax.xlane.f32.xlu0 %v2768
        %v2770 = vpop.xlane.xlu0 %2769
        %v2771 = vsel %vm2683, %v1972, -inf
        %2772 = vmax.xlane.f32.xlu0 %v2771
        %v2773 = vpop.xlane.xlu0 %2772
        %v2774 = vsel %vm2683, %v1975, -inf
        %2775 = vmax.xlane.f32.xlu0 %v2774
        %v2776 = vpop.xlane.xlu0 %2775
        %v2777 = vsel %vm2683, %v1977, -inf
        %2778 = vmax.xlane.f32.xlu0 %v2777
        %v2779 = vpop.xlane.xlu0 %2778
        %v2780 = vperm.slane %v2225, 0
        %v2781 = vmul.f32 %v2686, %v2780
        %v2782 = vmul.f32 %v2689, %v2780
        %v2783 = vmul.f32 %v2692, %v2780
        %v2784 = vmul.f32 %v2695, %v2780
        %v2785 = vmul.f32 %v2698, %v2780
        %v2786 = vmul.f32 %v2701, %v2780
        %v2787 = vmul.f32 %v2704, %v2780
        %v2788 = vmul.f32 %v2707, %v2780
        %v2789 = vmul.f32 %v2710, %v2780
        %v2790 = vmul.f32 %v2713, %v2780
        %v2791 = vmul.f32 %v2716, %v2780
        %v2792 = vmul.f32 %v2719, %v2780
        %v2793 = vmul.f32 %v2722, %v2780
        %v2794 = vmul.f32 %v2725, %v2780
        %v2795 = vmul.f32 %v2728, %v2780
        %v2796 = vmul.f32 %v2731, %v2780
        %v2797 = vmul.f32 %v2734, %v2780
        %v2798 = vmul.f32 %v2737, %v2780
        %v2799 = vmul.f32 %v2740, %v2780
        %v2800 = vmul.f32 %v2743, %v2780
        %v2801 = vmul.f32 %v2746, %v2780
        %v2802 = vmul.f32 %v2749, %v2780
        %v2803 = vmul.f32 %v2752, %v2780
        %v2804 = vmul.f32 %v2755, %v2780
        %v2805 = vmul.f32 %v2758, %v2780
        %v2806 = vmul.f32 %v2761, %v2780
        %v2807 = vmul.f32 %v2764, %v2780
        %v2808 = vmul.f32 %v2767, %v2780
        %v2809 = vmul.f32 %v2770, %v2780
        %v2810 = vmul.f32 %v2773, %v2780
        %v2811 = vmul.f32 %v2776, %v2780
        %v2812 = vmul.f32 %v2779, %v2780
        %v2813 = vadd.f32 %v2651, %v2781
        %v2814 = vadd.f32 %v2652, %v2782
        %v2815 = vadd.f32 %v2653, %v2783
        %v2816 = vadd.f32 %v2654, %v2784
        %v2817 = vadd.f32 %v2655, %v2785
        %v2818 = vadd.f32 %v2656, %v2786
        %v2819 = vadd.f32 %v2657, %v2787
        %v2820 = vadd.f32 %v2658, %v2788
        %v2821 = vadd.f32 %v2659, %v2789
        %v2822 = vadd.f32 %v2660, %v2790
        %v2823 = vadd.f32 %v2661, %v2791
        %v2824 = vadd.f32 %v2662, %v2792
        %v2825 = vadd.f32 %v2663, %v2793
        %v2826 = vadd.f32 %v2664, %v2794
        %v2827 = vadd.f32 %v2665, %v2795
        %v2828 = vadd.f32 %v2666, %v2796
        %v2829 = vadd.f32 %v2667, %v2797
        %v2830 = vadd.f32 %v2668, %v2798
        %v2831 = vadd.f32 %v2669, %v2799
        %v2832 = vadd.f32 %v2670, %v2800
        %v2833 = vadd.f32 %v2671, %v2801
        %v2834 = vadd.f32 %v2672, %v2802
        %v2835 = vadd.f32 %v2673, %v2803
        %v2836 = vadd.f32 %v2674, %v2804
        %v2837 = vadd.f32 %v2675, %v2805
        %v2838 = vadd.f32 %v2676, %v2806
        %v2839 = vadd.f32 %v2677, %v2807
        %v2840 = vadd.f32 %v2678, %v2808
        %v2841 = vadd.f32 %v2679, %v2809
        %v2842 = vadd.f32 %v2680, %v2810
        %v2843 = vadd.f32 %v2681, %v2811
        %v2844 = vadd.f32 %v2682, %v2812
        %v2845 = vsub.f32 %v1900, %v2813
        %v2846 = vsub.f32 %v1902, %v2814
        %v2847 = vsub.f32 %v1905, %v2815
        %v2848 = vsub.f32 %v1907, %v2816
        %v2849 = vsub.f32 %v1910, %v2817
        %v2850 = vsub.f32 %v1912, %v2818
        %v2851 = vsub.f32 %v1915, %v2819
        %v2852 = vsub.f32 %v1917, %v2820
        %v2853 = vsub.f32 %v1920, %v2821
        %v2854 = vsub.f32 %v1922, %v2822
        %v2855 = vsub.f32 %v1925, %v2823
        %v2856 = vsub.f32 %v1927, %v2824
        %v2857 = vsub.f32 %v1930, %v2825
        %v2858 = vsub.f32 %v1932, %v2826
        %v2859 = vsub.f32 %v1935, %v2827
        %v2860 = vsub.f32 %v1937, %v2828
        %v2861 = vsub.f32 %v1940, %v2829
        %v2862 = vsub.f32 %v1942, %v2830
        %v2863 = vsub.f32 %v1945, %v2831
        %v2864 = vsub.f32 %v1947, %v2832
        %v2865 = vsub.f32 %v1950, %v2833
        %v2866 = vsub.f32 %v1952, %v2834
        %v2867 = vsub.f32 %v1955, %v2835
        %v2868 = vsub.f32 %v1957, %v2836
        %v2869 = vsub.f32 %v1960, %v2837
        %v2870 = vsub.f32 %v1962, %v2838
        %v2871 = vsub.f32 %v1965, %v2839
        %v2872 = vsub.f32 %v1967, %v2840
        %v2873 = vsub.f32 %v1970, %v2841
        %v2874 = vsub.f32 %v1972, %v2842
        %v2875 = vsub.f32 %v1975, %v2843
        %v2876 = vsub.f32 %v1977, %v2844
        %v2877 = vmul.f32 %v2845, 1.442695
        %v2878 = vpow.pop %v2877
        %v2879 = vmul.f32 %v2846, 1.442695
        %v2880 = vpow.pop %v2879
        %v2881 = vmul.f32 %v2847, 1.442695
        %v2882 = vpow.pop %v2881
        %v2883 = vmul.f32 %v2848, 1.442695
        %v2884 = vpow.pop %v2883
        %v2885 = vmul.f32 %v2849, 1.442695
        %v2886 = vpow.pop %v2885
        %v2887 = vmul.f32 %v2850, 1.442695
        %v2888 = vpow.pop %v2887
        %v2889 = vmul.f32 %v2851, 1.442695
        %v2890 = vpow.pop %v2889
        %v2891 = vmul.f32 %v2852, 1.442695
        %v2892 = vpow.pop %v2891
        %v2893 = vmul.f32 %v2853, 1.442695
        %v2894 = vpow.pop %v2893
        %v2895 = vmul.f32 %v2854, 1.442695
        %v2896 = vpow.pop %v2895
        %v2897 = vmul.f32 %v2855, 1.442695
        %v2898 = vpow.pop %v2897
        %v2899 = vmul.f32 %v2856, 1.442695
        %v2900 = vpow.pop %v2899
        %v2901 = vmul.f32 %v2857, 1.442695
        %v2902 = vpow.pop %v2901
        %v2903 = vmul.f32 %v2858, 1.442695
        %v2904 = vpow.pop %v2903
        %v2905 = vmul.f32 %v2859, 1.442695
        %v2906 = vpow.pop %v2905
        %v2907 = vmul.f32 %v2860, 1.442695
        %v2908 = vpow.pop %v2907
        %v2909 = vmul.f32 %v2861, 1.442695
        %v2910 = vpow.pop %v2909
        %v2911 = vmul.f32 %v2862, 1.442695
        %v2912 = vpow.pop %v2911
        %v2913 = vmul.f32 %v2863, 1.442695
        %v2914 = vpow.pop %v2913
        %v2915 = vmul.f32 %v2864, 1.442695
        %v2916 = vpow.pop %v2915
        %v2917 = vmul.f32 %v2865, 1.442695
        %v2918 = vpow.pop %v2917
        %v2919 = vmul.f32 %v2866, 1.442695
        %v2920 = vpow.pop %v2919
        %v2921 = vmul.f32 %v2867, 1.442695
        %v2922 = vpow.pop %v2921
        %v2923 = vmul.f32 %v2868, 1.442695
        %v2924 = vpow.pop %v2923
        %v2925 = vmul.f32 %v2869, 1.442695
        %v2926 = vpow.pop %v2925
        %v2927 = vmul.f32 %v2870, 1.442695
        %v2928 = vpow.pop %v2927
        %v2929 = vmul.f32 %v2871, 1.442695
        %v2930 = vpow.pop %v2929
        %v2931 = vmul.f32 %v2872, 1.442695
        %v2932 = vpow.pop %v2931
        %v2933 = vmul.f32 %v2873, 1.442695
        %v2934 = vpow.pop %v2933
        %v2935 = vmul.f32 %v2874, 1.442695
        %v2936 = vpow.pop %v2935
        %v2937 = vmul.f32 %v2875, 1.442695
        %v2938 = vpow.pop %v2937
        %v2939 = vmul.f32 %v2876, 1.442695
        %v2940 = vpow.pop %v2939
        %v2941 = vsel %vm2229, %v2878, 0.0
        %2942 = vadd.xlane.f32.xlu0 %v2941
        %v2943 = vpop.xlane.xlu0 %2942
        %v2944 = vsel %vm2229, %v2880, 0.0
        %2945 = vadd.xlane.f32.xlu0 %v2944
        %v2946 = vpop.xlane.xlu0 %2945
        %v2947 = vsel %vm2229, %v2882, 0.0
        %2948 = vadd.xlane.f32.xlu0 %v2947
        %v2949 = vpop.xlane.xlu0 %2948
        %v2950 = vsel %vm2229, %v2884, 0.0
        %2951 = vadd.xlane.f32.xlu0 %v2950
        %v2952 = vpop.xlane.xlu0 %2951
        %v2953 = vsel %vm2229, %v2886, 0.0
        %2954 = vadd.xlane.f32.xlu0 %v2953
        %v2955 = vpop.xlane.xlu0 %2954
        %v2956 = vsel %vm2229, %v2888, 0.0
        %2957 = vadd.xlane.f32.xlu0 %v2956
        %v2958 = vpop.xlane.xlu0 %2957
        %v2959 = vsel %vm2229, %v2890, 0.0
        %2960 = vadd.xlane.f32.xlu0 %v2959
        %v2961 = vpop.xlane.xlu0 %2960
        %v2962 = vsel %vm2229, %v2892, 0.0
        %2963 = vadd.xlane.f32.xlu0 %v2962
        %v2964 = vpop.xlane.xlu0 %2963
        %v2965 = vsel %vm2229, %v2894, 0.0
        %2966 = vadd.xlane.f32.xlu0 %v2965
        %v2967 = vpop.xlane.xlu0 %2966
        %v2968 = vsel %vm2229, %v2896, 0.0
        %2969 = vadd.xlane.f32.xlu0 %v2968
        %v2970 = vpop.xlane.xlu0 %2969
        %v2971 = vsel %vm2229, %v2898, 0.0
        %2972 = vadd.xlane.f32.xlu0 %v2971
        %v2973 = vpop.xlane.xlu0 %2972
        %v2974 = vsel %vm2229, %v2900, 0.0
        %2975 = vadd.xlane.f32.xlu0 %v2974
        %v2976 = vpop.xlane.xlu0 %2975
        %v2977 = vsel %vm2229, %v2902, 0.0
        %2978 = vadd.xlane.f32.xlu0 %v2977
        %v2979 = vpop.xlane.xlu0 %2978
        %v2980 = vsel %vm2229, %v2904, 0.0
        %2981 = vadd.xlane.f32.xlu0 %v2980
        %v2982 = vpop.xlane.xlu0 %2981
        %v2983 = vsel %vm2229, %v2906, 0.0
        %2984 = vadd.xlane.f32.xlu0 %v2983
        %v2985 = vpop.xlane.xlu0 %2984
        %v2986 = vsel %vm2229, %v2908, 0.0
        %2987 = vadd.xlane.f32.xlu0 %v2986
        %v2988 = vpop.xlane.xlu0 %2987
        %v2989 = vsel %vm2229, %v2910, 0.0
        %2990 = vadd.xlane.f32.xlu0 %v2989
        %v2991 = vpop.xlane.xlu0 %2990
        %v2992 = vsel %vm2229, %v2912, 0.0
        %2993 = vadd.xlane.f32.xlu0 %v2992
        %v2994 = vpop.xlane.xlu0 %2993
        %v2995 = vsel %vm2229, %v2914, 0.0
        %2996 = vadd.xlane.f32.xlu0 %v2995
        %v2997 = vpop.xlane.xlu0 %2996
        %v2998 = vsel %vm2229, %v2916, 0.0
        %2999 = vadd.xlane.f32.xlu0 %v2998
        %v3000 = vpop.xlane.xlu0 %2999
        %v3001 = vsel %vm2229, %v2918, 0.0
        %3002 = vadd.xlane.f32.xlu0 %v3001
        %v3003 = vpop.xlane.xlu0 %3002
        %v3004 = vsel %vm2229, %v2920, 0.0
        %3005 = vadd.xlane.f32.xlu0 %v3004
        %v3006 = vpop.xlane.xlu0 %3005
        %v3007 = vsel %vm2229, %v2922, 0.0
        %3008 = vadd.xlane.f32.xlu0 %v3007
        %v3009 = vpop.xlane.xlu0 %3008
        %v3010 = vsel %vm2229, %v2924, 0.0
        %3011 = vadd.xlane.f32.xlu0 %v3010
        %v3012 = vpop.xlane.xlu0 %3011
        %v3013 = vsel %vm2229, %v2926, 0.0
        %3014 = vadd.xlane.f32.xlu0 %v3013
        %v3015 = vpop.xlane.xlu0 %3014
        %v3016 = vsel %vm2229, %v2928, 0.0
        %3017 = vadd.xlane.f32.xlu0 %v3016
        %v3018 = vpop.xlane.xlu0 %3017
        %v3019 = vsel %vm2229, %v2930, 0.0
        %3020 = vadd.xlane.f32.xlu0 %v3019
        %v3021 = vpop.xlane.xlu0 %3020
        %v3022 = vsel %vm2229, %v2932, 0.0
        %3023 = vadd.xlane.f32.xlu0 %v3022
        %v3024 = vpop.xlane.xlu0 %3023
        %v3025 = vsel %vm2229, %v2934, 0.0
        %3026 = vadd.xlane.f32.xlu0 %v3025
        %v3027 = vpop.xlane.xlu0 %3026
        %v3028 = vsel %vm2229, %v2936, 0.0
        %3029 = vadd.xlane.f32.xlu0 %v3028
        %v3030 = vpop.xlane.xlu0 %3029
        %v3031 = vsel %vm2229, %v2938, 0.0
        %3032 = vadd.xlane.f32.xlu0 %v3031
        %v3033 = vpop.xlane.xlu0 %3032
        %v3034 = vsel %vm2229, %v2940, 0.0
        %3035 = vadd.xlane.f32.xlu0 %v3034
        %v3036 = vpop.xlane.xlu0 %3035
        %v3037 = vmul.f32 %v2943, %v2326
        %v3038 = vmul.f32 %v2946, %v2326
        %v3039 = vmul.f32 %v2949, %v2326
        %v3040 = vmul.f32 %v2952, %v2326
        %v3041 = vmul.f32 %v2955, %v2326
        %v3042 = vmul.f32 %v2958, %v2326
        %v3043 = vmul.f32 %v2961, %v2326
        %v3044 = vmul.f32 %v2964, %v2326
        %v3045 = vmul.f32 %v2967, %v2326
        %v3046 = vmul.f32 %v2970, %v2326
        %v3047 = vmul.f32 %v2973, %v2326
        %v3048 = vmul.f32 %v2976, %v2326
        %v3049 = vmul.f32 %v2979, %v2326
        %v3050 = vmul.f32 %v2982, %v2326
        %v3051 = vmul.f32 %v2985, %v2326
        %v3052 = vmul.f32 %v2988, %v2326
        %v3053 = vmul.f32 %v2991, %v2326
        %v3054 = vmul.f32 %v2994, %v2326
        %v3055 = vmul.f32 %v2997, %v2326
        %v3056 = vmul.f32 %v3000, %v2326
        %v3057 = vmul.f32 %v3003, %v2326
        %v3058 = vmul.f32 %v3006, %v2326
        %v3059 = vmul.f32 %v3009, %v2326
        %v3060 = vmul.f32 %v3012, %v2326
        %v3061 = vmul.f32 %v3015, %v2326
        %v3062 = vmul.f32 %v3018, %v2326
        %v3063 = vmul.f32 %v3021, %v2326
        %v3064 = vmul.f32 %v3024, %v2326
        %v3065 = vmul.f32 %v3027, %v2326
        %v3066 = vmul.f32 %v3030, %v2326
        %v3067 = vmul.f32 %v3033, %v2326
        %v3068 = vmul.f32 %v3036, %v2326
        %3101 = vrot.lane.b32.xlu0 %v2878, 96
        %v3102 = vpop.permute.xlu0 %3101
        %3103 = vrot.lane.b32.xlu0 %v2880, 96
        %v3104 = vpop.permute.xlu0 %3103
        %3105 = vrot.lane.b32.xlu0 %v2882, 96
        %v3106 = vpop.permute.xlu0 %3105
        %3107 = vrot.lane.b32.xlu0 %v2884, 96
        %v3108 = vpop.permute.xlu0 %3107
        %3109 = vrot.lane.b32.xlu0 %v2886, 96
        %v3110 = vpop.permute.xlu0 %3109
        %3111 = vrot.lane.b32.xlu0 %v2888, 96
        %v3112 = vpop.permute.xlu0 %3111
        %3113 = vrot.lane.b32.xlu0 %v2890, 96
        %v3114 = vpop.permute.xlu0 %3113
        %3115 = vrot.lane.b32.xlu0 %v2892, 96
        %v3116 = vpop.permute.xlu0 %3115
        %3117 = vrot.lane.b32.xlu0 %v2894, 96
        %v3118 = vpop.permute.xlu0 %3117
        %3119 = vrot.lane.b32.xlu0 %v2896, 96
        %v3120 = vpop.permute.xlu0 %3119
        %3121 = vrot.lane.b32.xlu0 %v2898, 96
        %v3122 = vpop.permute.xlu0 %3121
        %3123 = vrot.lane.b32.xlu0 %v2900, 96
        %v3124 = vpop.permute.xlu0 %3123
        %3125 = vrot.lane.b32.xlu0 %v2902, 96
        %v3126 = vpop.permute.xlu0 %3125
        %3127 = vrot.lane.b32.xlu0 %v2904, 96
        %v3128 = vpop.permute.xlu0 %3127
        %3129 = vrot.lane.b32.xlu0 %v2906, 96
        %v3130 = vpop.permute.xlu0 %3129
        %3131 = vrot.lane.b32.xlu0 %v2908, 96
        %v3132 = vpop.permute.xlu0 %3131
        %3133 = vrot.lane.b32.xlu0 %v2910, 96
        %v3134 = vpop.permute.xlu0 %3133
        %3135 = vrot.lane.b32.xlu0 %v2912, 96
        %v3136 = vpop.permute.xlu0 %3135
        %3137 = vrot.lane.b32.xlu0 %v2914, 96
        %v3138 = vpop.permute.xlu0 %3137
        %3139 = vrot.lane.b32.xlu0 %v2916, 96
        %v3140 = vpop.permute.xlu0 %3139
        %3141 = vrot.lane.b32.xlu0 %v2918, 96
        %v3142 = vpop.permute.xlu0 %3141
        %3143 = vrot.lane.b32.xlu0 %v2920, 96
        %v3144 = vpop.permute.xlu0 %3143
        %3145 = vrot.lane.b32.xlu0 %v2922, 96
        %v3146 = vpop.permute.xlu0 %3145
        %3147 = vrot.lane.b32.xlu0 %v2924, 96
        %v3148 = vpop.permute.xlu0 %3147
        %3149 = vrot.lane.b32.xlu0 %v2926, 96
        %v3150 = vpop.permute.xlu0 %3149
        %3151 = vrot.lane.b32.xlu0 %v2928, 96
        %v3152 = vpop.permute.xlu0 %3151
        %3153 = vrot.lane.b32.xlu0 %v2930, 96
        %v3154 = vpop.permute.xlu0 %3153
        %3155 = vrot.lane.b32.xlu0 %v2932, 96
        %v3156 = vpop.permute.xlu0 %3155
        %3157 = vrot.lane.b32.xlu0 %v2934, 96
        %v3158 = vpop.permute.xlu0 %3157
        %3159 = vrot.lane.b32.xlu0 %v2936, 96
        %v3160 = vpop.permute.xlu0 %3159
        %3161 = vrot.lane.b32.xlu0 %v2938, 96
        %v3162 = vpop.permute.xlu0 %3161
        %3163 = vrot.lane.b32.xlu0 %v2940, 96
        %v3164 = vpop.permute.xlu0 %3163
        %v3197 = vsel %vm2229, %v3102, 0.0
        %3198 = vadd.xlane.f32.xlu0 %v3197
        %v3199 = vpop.xlane.xlu0 %3198
        %v3200 = vsel %vm2229, %v3104, 0.0
        %3201 = vadd.xlane.f32.xlu0 %v3200
        %v3202 = vpop.xlane.xlu0 %3201
        %v3203 = vsel %vm2229, %v3106, 0.0
        %3204 = vadd.xlane.f32.xlu0 %v3203
        %v3205 = vpop.xlane.xlu0 %3204
        %v3206 = vsel %vm2229, %v3108, 0.0
        %3207 = vadd.xlane.f32.xlu0 %v3206
        %v3208 = vpop.xlane.xlu0 %3207
        %v3209 = vsel %vm2229, %v3110, 0.0
        %3210 = vadd.xlane.f32.xlu0 %v3209
        %v3211 = vpop.xlane.xlu0 %3210
        %v3212 = vsel %vm2229, %v3112, 0.0
        %3213 = vadd.xlane.f32.xlu0 %v3212
        %v3214 = vpop.xlane.xlu0 %3213
        %v3215 = vsel %vm2229, %v3114, 0.0
        %3216 = vadd.xlane.f32.xlu0 %v3215
        %v3217 = vpop.xlane.xlu0 %3216
        %v3218 = vsel %vm2229, %v3116, 0.0
        %3219 = vadd.xlane.f32.xlu0 %v3218
        %v3220 = vpop.xlane.xlu0 %3219
        %v3221 = vsel %vm2229, %v3118, 0.0
        %3222 = vadd.xlane.f32.xlu0 %v3221
        %v3223 = vpop.xlane.xlu0 %3222
        %v3224 = vsel %vm2229, %v3120, 0.0
        %3225 = vadd.xlane.f32.xlu0 %v3224
        %v3226 = vpop.xlane.xlu0 %3225
        %v3227 = vsel %vm2229, %v3122, 0.0
        %3228 = vadd.xlane.f32.xlu0 %v3227
        %v3229 = vpop.xlane.xlu0 %3228
        %v3230 = vsel %vm2229, %v3124, 0.0
        %3231 = vadd.xlane.f32.xlu0 %v3230
        %v3232 = vpop.xlane.xlu0 %3231
        %v3233 = vsel %vm2229, %v3126, 0.0
        %3234 = vadd.xlane.f32.xlu0 %v3233
        %v3235 = vpop.xlane.xlu0 %3234
        %v3236 = vsel %vm2229, %v3128, 0.0
        %3237 = vadd.xlane.f32.xlu0 %v3236
        %v3238 = vpop.xlane.xlu0 %3237
        %v3239 = vsel %vm2229, %v3130, 0.0
        %3240 = vadd.xlane.f32.xlu0 %v3239
        %v3241 = vpop.xlane.xlu0 %3240
        %v3242 = vsel %vm2229, %v3132, 0.0
        %3243 = vadd.xlane.f32.xlu0 %v3242
        %v3244 = vpop.xlane.xlu0 %3243
        %v3245 = vsel %vm2229, %v3134, 0.0
        %3246 = vadd.xlane.f32.xlu0 %v3245
        %v3247 = vpop.xlane.xlu0 %3246
        %v3248 = vsel %vm2229, %v3136, 0.0
        %3249 = vadd.xlane.f32.xlu0 %v3248
        %v3250 = vpop.xlane.xlu0 %3249
        %v3251 = vsel %vm2229, %v3138, 0.0
        %3252 = vadd.xlane.f32.xlu0 %v3251
        %v3253 = vpop.xlane.xlu0 %3252
        %v3254 = vsel %vm2229, %v3140, 0.0
        %3255 = vadd.xlane.f32.xlu0 %v3254
        %v3256 = vpop.xlane.xlu0 %3255
        %v3257 = vsel %vm2229, %v3142, 0.0
        %3258 = vadd.xlane.f32.xlu0 %v3257
        %v3259 = vpop.xlane.xlu0 %3258
        %v3260 = vsel %vm2229, %v3144, 0.0
        %3261 = vadd.xlane.f32.xlu0 %v3260
        %v3262 = vpop.xlane.xlu0 %3261
        %v3263 = vsel %vm2229, %v3146, 0.0
        %3264 = vadd.xlane.f32.xlu0 %v3263
        %v3265 = vpop.xlane.xlu0 %3264
        %v3266 = vsel %vm2229, %v3148, 0.0
        %3267 = vadd.xlane.f32.xlu0 %v3266
        %v3268 = vpop.xlane.xlu0 %3267
        %v3269 = vsel %vm2229, %v3150, 0.0
        %3270 = vadd.xlane.f32.xlu0 %v3269
        %v3271 = vpop.xlane.xlu0 %3270
        %v3272 = vsel %vm2229, %v3152, 0.0
        %3273 = vadd.xlane.f32.xlu0 %v3272
        %v3274 = vpop.xlane.xlu0 %3273
        %v3275 = vsel %vm2229, %v3154, 0.0
        %3276 = vadd.xlane.f32.xlu0 %v3275
        %v3277 = vpop.xlane.xlu0 %3276
        %v3278 = vsel %vm2229, %v3156, 0.0
        %3279 = vadd.xlane.f32.xlu0 %v3278
        %v3280 = vpop.xlane.xlu0 %3279
        %v3281 = vsel %vm2229, %v3158, 0.0
        %3282 = vadd.xlane.f32.xlu0 %v3281
        %v3283 = vpop.xlane.xlu0 %3282
        %v3284 = vsel %vm2229, %v3160, 0.0
        %3285 = vadd.xlane.f32.xlu0 %v3284
        %v3286 = vpop.xlane.xlu0 %3285
        %v3287 = vsel %vm2229, %v3162, 0.0
        %3288 = vadd.xlane.f32.xlu0 %v3287
        %v3289 = vpop.xlane.xlu0 %3288
        %v3290 = vsel %vm2229, %v3164, 0.0
        %3291 = vadd.xlane.f32.xlu0 %v3290
        %v3292 = vpop.xlane.xlu0 %3291
        %v3293 = vmul.f32 %v3199, %v2456
        %v3294 = vmul.f32 %v3202, %v2456
        %v3295 = vmul.f32 %v3205, %v2456
        %v3296 = vmul.f32 %v3208, %v2456
        %v3297 = vmul.f32 %v3211, %v2456
        %v3298 = vmul.f32 %v3214, %v2456
        %v3299 = vmul.f32 %v3217, %v2456
        %v3300 = vmul.f32 %v3220, %v2456
        %v3301 = vmul.f32 %v3223, %v2456
        %v3302 = vmul.f32 %v3226, %v2456
        %v3303 = vmul.f32 %v3229, %v2456
        %v3304 = vmul.f32 %v3232, %v2456
        %v3305 = vmul.f32 %v3235, %v2456
        %v3306 = vmul.f32 %v3238, %v2456
        %v3307 = vmul.f32 %v3241, %v2456
        %v3308 = vmul.f32 %v3244, %v2456
        %v3309 = vmul.f32 %v3247, %v2456
        %v3310 = vmul.f32 %v3250, %v2456
        %v3311 = vmul.f32 %v3253, %v2456
        %v3312 = vmul.f32 %v3256, %v2456
        %v3313 = vmul.f32 %v3259, %v2456
        %v3314 = vmul.f32 %v3262, %v2456
        %v3315 = vmul.f32 %v3265, %v2456
        %v3316 = vmul.f32 %v3268, %v2456
        %v3317 = vmul.f32 %v3271, %v2456
        %v3318 = vmul.f32 %v3274, %v2456
        %v3319 = vmul.f32 %v3277, %v2456
        %v3320 = vmul.f32 %v3280, %v2456
        %v3321 = vmul.f32 %v3283, %v2456
        %v3322 = vmul.f32 %v3286, %v2456
        %v3323 = vmul.f32 %v3289, %v2456
        %v3324 = vmul.f32 %v3292, %v2456
        %v3325 = vadd.f32 %v3037, %v3293
        %v3326 = vadd.f32 %v3038, %v3294
        %v3327 = vadd.f32 %v3039, %v3295
        %v3328 = vadd.f32 %v3040, %v3296
        %v3329 = vadd.f32 %v3041, %v3297
        %v3330 = vadd.f32 %v3042, %v3298
        %v3331 = vadd.f32 %v3043, %v3299
        %v3332 = vadd.f32 %v3044, %v3300
        %v3333 = vadd.f32 %v3045, %v3301
        %v3334 = vadd.f32 %v3046, %v3302
        %v3335 = vadd.f32 %v3047, %v3303
        %v3336 = vadd.f32 %v3048, %v3304
        %v3337 = vadd.f32 %v3049, %v3305
        %v3338 = vadd.f32 %v3050, %v3306
        %v3339 = vadd.f32 %v3051, %v3307
        %v3340 = vadd.f32 %v3052, %v3308
        %v3341 = vadd.f32 %v3053, %v3309
        %v3342 = vadd.f32 %v3054, %v3310
        %v3343 = vadd.f32 %v3055, %v3311
        %v3344 = vadd.f32 %v3056, %v3312
        %v3345 = vadd.f32 %v3057, %v3313
        %v3346 = vadd.f32 %v3058, %v3314
        %v3347 = vadd.f32 %v3059, %v3315
        %v3348 = vadd.f32 %v3060, %v3316
        %v3349 = vadd.f32 %v3061, %v3317
        %v3350 = vadd.f32 %v3062, %v3318
        %v3351 = vadd.f32 %v3063, %v3319
        %v3352 = vadd.f32 %v3064, %v3320
        %v3353 = vadd.f32 %v3065, %v3321
        %v3354 = vadd.f32 %v3066, %v3322
        %v3355 = vadd.f32 %v3067, %v3323
        %v3356 = vadd.f32 %v3068, %v3324
        %3357 = vrot.lane.b32.xlu0 %v2878, 64
        %v3358 = vpop.permute.xlu0 %3357
        %3359 = vrot.lane.b32.xlu0 %v2880, 64
        %v3360 = vpop.permute.xlu0 %3359
        %3361 = vrot.lane.b32.xlu0 %v2882, 64
        %v3362 = vpop.permute.xlu0 %3361
        %3363 = vrot.lane.b32.xlu0 %v2884, 64
        %v3364 = vpop.permute.xlu0 %3363
        %3365 = vrot.lane.b32.xlu0 %v2886, 64
        %v3366 = vpop.permute.xlu0 %3365
        %3367 = vrot.lane.b32.xlu0 %v2888, 64
        %v3368 = vpop.permute.xlu0 %3367
        %3369 = vrot.lane.b32.xlu0 %v2890, 64
        %v3370 = vpop.permute.xlu0 %3369
        %3371 = vrot.lane.b32.xlu0 %v2892, 64
        %v3372 = vpop.permute.xlu0 %3371
        %3373 = vrot.lane.b32.xlu0 %v2894, 64
        %v3374 = vpop.permute.xlu0 %3373
        %3375 = vrot.lane.b32.xlu0 %v2896, 64
        %v3376 = vpop.permute.xlu0 %3375
        %3377 = vrot.lane.b32.xlu0 %v2898, 64
        %v3378 = vpop.permute.xlu0 %3377
        %3379 = vrot.lane.b32.xlu0 %v2900, 64
        %v3380 = vpop.permute.xlu0 %3379
        %3381 = vrot.lane.b32.xlu0 %v2902, 64
        %v3382 = vpop.permute.xlu0 %3381
        %3383 = vrot.lane.b32.xlu0 %v2904, 64
        %v3384 = vpop.permute.xlu0 %3383
        %3385 = vrot.lane.b32.xlu0 %v2906, 64
        %v3386 = vpop.permute.xlu0 %3385
        %3387 = vrot.lane.b32.xlu0 %v2908, 64
        %v3388 = vpop.permute.xlu0 %3387
        %3389 = vrot.lane.b32.xlu0 %v2910, 64
        %v3390 = vpop.permute.xlu0 %3389
        %3391 = vrot.lane.b32.xlu0 %v2912, 64
        %v3392 = vpop.permute.xlu0 %3391
        %3393 = vrot.lane.b32.xlu0 %v2914, 64
        %v3394 = vpop.permute.xlu0 %3393
        %3395 = vrot.lane.b32.xlu0 %v2916, 64
        %v3396 = vpop.permute.xlu0 %3395
        %3397 = vrot.lane.b32.xlu0 %v2918, 64
        %v3398 = vpop.permute.xlu0 %3397
        %3399 = vrot.lane.b32.xlu0 %v2920, 64
        %v3400 = vpop.permute.xlu0 %3399
        %3401 = vrot.lane.b32.xlu0 %v2922, 64
        %v3402 = vpop.permute.xlu0 %3401
        %3403 = vrot.lane.b32.xlu0 %v2924, 64
        %v3404 = vpop.permute.xlu0 %3403
        %3405 = vrot.lane.b32.xlu0 %v2926, 64
        %v3406 = vpop.permute.xlu0 %3405
        %3407 = vrot.lane.b32.xlu0 %v2928, 64
        %v3408 = vpop.permute.xlu0 %3407
        %3409 = vrot.lane.b32.xlu0 %v2930, 64
        %v3410 = vpop.permute.xlu0 %3409
        %3411 = vrot.lane.b32.xlu0 %v2932, 64
        %v3412 = vpop.permute.xlu0 %3411
        %3413 = vrot.lane.b32.xlu0 %v2934, 64
        %v3414 = vpop.permute.xlu0 %3413
        %3415 = vrot.lane.b32.xlu0 %v2936, 64
        %v3416 = vpop.permute.xlu0 %3415
        %3417 = vrot.lane.b32.xlu0 %v2938, 64
        %v3418 = vpop.permute.xlu0 %3417
        %3419 = vrot.lane.b32.xlu0 %v2940, 64
        %v3420 = vpop.permute.xlu0 %3419
        %v3453 = vsel %vm2229, %v3358, 0.0
        %3454 = vadd.xlane.f32.xlu0 %v3453
        %v3455 = vpop.xlane.xlu0 %3454
        %v3456 = vsel %vm2229, %v3360, 0.0
        %3457 = vadd.xlane.f32.xlu0 %v3456
        %v3458 = vpop.xlane.xlu0 %3457
        %v3459 = vsel %vm2229, %v3362, 0.0
        %3460 = vadd.xlane.f32.xlu0 %v3459
        %v3461 = vpop.xlane.xlu0 %3460
        %v3462 = vsel %vm2229, %v3364, 0.0
        %3463 = vadd.xlane.f32.xlu0 %v3462
        %v3464 = vpop.xlane.xlu0 %3463
        %v3465 = vsel %vm2229, %v3366, 0.0
        %3466 = vadd.xlane.f32.xlu0 %v3465
        %v3467 = vpop.xlane.xlu0 %3466
        %v3468 = vsel %vm2229, %v3368, 0.0
        %3469 = vadd.xlane.f32.xlu0 %v3468
        %v3470 = vpop.xlane.xlu0 %3469
        %v3471 = vsel %vm2229, %v3370, 0.0
        %3472 = vadd.xlane.f32.xlu0 %v3471
        %v3473 = vpop.xlane.xlu0 %3472
        %v3474 = vsel %vm2229, %v3372, 0.0
        %3475 = vadd.xlane.f32.xlu0 %v3474
        %v3476 = vpop.xlane.xlu0 %3475
        %v3477 = vsel %vm2229, %v3374, 0.0
        %3478 = vadd.xlane.f32.xlu0 %v3477
        %v3479 = vpop.xlane.xlu0 %3478
        %v3480 = vsel %vm2229, %v3376, 0.0
        %3481 = vadd.xlane.f32.xlu0 %v3480
        %v3482 = vpop.xlane.xlu0 %3481
        %v3483 = vsel %vm2229, %v3378, 0.0
        %3484 = vadd.xlane.f32.xlu0 %v3483
        %v3485 = vpop.xlane.xlu0 %3484
        %v3486 = vsel %vm2229, %v3380, 0.0
        %3487 = vadd.xlane.f32.xlu0 %v3486
        %v3488 = vpop.xlane.xlu0 %3487
        %v3489 = vsel %vm2229, %v3382, 0.0
        %3490 = vadd.xlane.f32.xlu0 %v3489
        %v3491 = vpop.xlane.xlu0 %3490
        %v3492 = vsel %vm2229, %v3384, 0.0
        %3493 = vadd.xlane.f32.xlu0 %v3492
        %v3494 = vpop.xlane.xlu0 %3493
        %v3495 = vsel %vm2229, %v3386, 0.0
        %3496 = vadd.xlane.f32.xlu0 %v3495
        %v3497 = vpop.xlane.xlu0 %3496
        %v3498 = vsel %vm2229, %v3388, 0.0
        %3499 = vadd.xlane.f32.xlu0 %v3498
        %v3500 = vpop.xlane.xlu0 %3499
        %v3501 = vsel %vm2229, %v3390, 0.0
        %3502 = vadd.xlane.f32.xlu0 %v3501
        %v3503 = vpop.xlane.xlu0 %3502
        %v3504 = vsel %vm2229, %v3392, 0.0
        %3505 = vadd.xlane.f32.xlu0 %v3504
        %v3506 = vpop.xlane.xlu0 %3505
        %v3507 = vsel %vm2229, %v3394, 0.0
        %3508 = vadd.xlane.f32.xlu0 %v3507
        %v3509 = vpop.xlane.xlu0 %3508
        %v3510 = vsel %vm2229, %v3396, 0.0
        %3511 = vadd.xlane.f32.xlu0 %v3510
        %v3512 = vpop.xlane.xlu0 %3511
        %v3513 = vsel %vm2229, %v3398, 0.0
        %3514 = vadd.xlane.f32.xlu0 %v3513
        %v3515 = vpop.xlane.xlu0 %3514
        %v3516 = vsel %vm2229, %v3400, 0.0
        %3517 = vadd.xlane.f32.xlu0 %v3516
        %v3518 = vpop.xlane.xlu0 %3517
        %v3519 = vsel %vm2229, %v3402, 0.0
        %3520 = vadd.xlane.f32.xlu0 %v3519
        %v3521 = vpop.xlane.xlu0 %3520
        %v3522 = vsel %vm2229, %v3404, 0.0
        %3523 = vadd.xlane.f32.xlu0 %v3522
        %v3524 = vpop.xlane.xlu0 %3523
        %v3525 = vsel %vm2229, %v3406, 0.0
        %3526 = vadd.xlane.f32.xlu0 %v3525
        %v3527 = vpop.xlane.xlu0 %3526
        %v3528 = vsel %vm2229, %v3408, 0.0
        %3529 = vadd.xlane.f32.xlu0 %v3528
        %v3530 = vpop.xlane.xlu0 %3529
        %v3531 = vsel %vm2229, %v3410, 0.0
        %3532 = vadd.xlane.f32.xlu0 %v3531
        %v3533 = vpop.xlane.xlu0 %3532
        %v3534 = vsel %vm2229, %v3412, 0.0
        %3535 = vadd.xlane.f32.xlu0 %v3534
        %v3536 = vpop.xlane.xlu0 %3535
        %v3537 = vsel %vm2229, %v3414, 0.0
        %3538 = vadd.xlane.f32.xlu0 %v3537
        %v3539 = vpop.xlane.xlu0 %3538
        %v3540 = vsel %vm2229, %v3416, 0.0
        %3541 = vadd.xlane.f32.xlu0 %v3540
        %v3542 = vpop.xlane.xlu0 %3541
        %v3543 = vsel %vm2229, %v3418, 0.0
        %3544 = vadd.xlane.f32.xlu0 %v3543
        %v3545 = vpop.xlane.xlu0 %3544
        %v3546 = vsel %vm2229, %v3420, 0.0
        %3547 = vadd.xlane.f32.xlu0 %v3546
        %v3548 = vpop.xlane.xlu0 %3547
        %v3549 = vmul.f32 %v3455, %v2618
        %v3550 = vmul.f32 %v3458, %v2618
        %v3551 = vmul.f32 %v3461, %v2618
        %v3552 = vmul.f32 %v3464, %v2618
        %v3553 = vmul.f32 %v3467, %v2618
        %v3554 = vmul.f32 %v3470, %v2618
        %v3555 = vmul.f32 %v3473, %v2618
        %v3556 = vmul.f32 %v3476, %v2618
        %v3557 = vmul.f32 %v3479, %v2618
        %v3558 = vmul.f32 %v3482, %v2618
        %v3559 = vmul.f32 %v3485, %v2618
        %v3560 = vmul.f32 %v3488, %v2618
        %v3561 = vmul.f32 %v3491, %v2618
        %v3562 = vmul.f32 %v3494, %v2618
        %v3563 = vmul.f32 %v3497, %v2618
        %v3564 = vmul.f32 %v3500, %v2618
        %v3565 = vmul.f32 %v3503, %v2618
        %v3566 = vmul.f32 %v3506, %v2618
        %v3567 = vmul.f32 %v3509, %v2618
        %v3568 = vmul.f32 %v3512, %v2618
        %v3569 = vmul.f32 %v3515, %v2618
        %v3570 = vmul.f32 %v3518, %v2618
        %v3571 = vmul.f32 %v3521, %v2618
        %v3572 = vmul.f32 %v3524, %v2618
        %v3573 = vmul.f32 %v3527, %v2618
        %v3574 = vmul.f32 %v3530, %v2618
        %v3575 = vmul.f32 %v3533, %v2618
        %v3576 = vmul.f32 %v3536, %v2618
        %v3577 = vmul.f32 %v3539, %v2618
        %v3578 = vmul.f32 %v3542, %v2618
        %v3579 = vmul.f32 %v3545, %v2618
        %v3580 = vmul.f32 %v3548, %v2618
        %v3581 = vadd.f32 %v3325, %v3549
        %v3582 = vadd.f32 %v3326, %v3550
        %v3583 = vadd.f32 %v3327, %v3551
        %v3584 = vadd.f32 %v3328, %v3552
        %v3585 = vadd.f32 %v3329, %v3553
        %v3586 = vadd.f32 %v3330, %v3554
        %v3587 = vadd.f32 %v3331, %v3555
        %v3588 = vadd.f32 %v3332, %v3556
        %v3589 = vadd.f32 %v3333, %v3557
        %v3590 = vadd.f32 %v3334, %v3558
        %v3591 = vadd.f32 %v3335, %v3559
        %v3592 = vadd.f32 %v3336, %v3560
        %v3593 = vadd.f32 %v3337, %v3561
        %v3594 = vadd.f32 %v3338, %v3562
        %v3595 = vadd.f32 %v3339, %v3563
        %v3596 = vadd.f32 %v3340, %v3564
        %v3597 = vadd.f32 %v3341, %v3565
        %v3598 = vadd.f32 %v3342, %v3566
        %v3599 = vadd.f32 %v3343, %v3567
        %v3600 = vadd.f32 %v3344, %v3568
        %v3601 = vadd.f32 %v3345, %v3569
        %v3602 = vadd.f32 %v3346, %v3570
        %v3603 = vadd.f32 %v3347, %v3571
        %v3604 = vadd.f32 %v3348, %v3572
        %v3605 = vadd.f32 %v3349, %v3573
        %v3606 = vadd.f32 %v3350, %v3574
        %v3607 = vadd.f32 %v3351, %v3575
        %v3608 = vadd.f32 %v3352, %v3576
        %v3609 = vadd.f32 %v3353, %v3577
        %v3610 = vadd.f32 %v3354, %v3578
        %v3611 = vadd.f32 %v3355, %v3579
        %v3612 = vadd.f32 %v3356, %v3580
        %3613 = vrot.lane.b32.xlu0 %v2878, 32
        %v3614 = vpop.permute.xlu0 %3613
        %3615 = vrot.lane.b32.xlu0 %v2880, 32
        %v3616 = vpop.permute.xlu0 %3615
        %3617 = vrot.lane.b32.xlu0 %v2882, 32
        %v3618 = vpop.permute.xlu0 %3617
        %3619 = vrot.lane.b32.xlu0 %v2884, 32
        %v3620 = vpop.permute.xlu0 %3619
        %3621 = vrot.lane.b32.xlu0 %v2886, 32
        %v3622 = vpop.permute.xlu0 %3621
        %3623 = vrot.lane.b32.xlu0 %v2888, 32
        %v3624 = vpop.permute.xlu0 %3623
        %3625 = vrot.lane.b32.xlu0 %v2890, 32
        %v3626 = vpop.permute.xlu0 %3625
        %3627 = vrot.lane.b32.xlu0 %v2892, 32
        %v3628 = vpop.permute.xlu0 %3627
        %3629 = vrot.lane.b32.xlu0 %v2894, 32
        %v3630 = vpop.permute.xlu0 %3629
        %3631 = vrot.lane.b32.xlu0 %v2896, 32
        %v3632 = vpop.permute.xlu0 %3631
        %3633 = vrot.lane.b32.xlu0 %v2898, 32
        %v3634 = vpop.permute.xlu0 %3633
        %3635 = vrot.lane.b32.xlu0 %v2900, 32
        %v3636 = vpop.permute.xlu0 %3635
        %3637 = vrot.lane.b32.xlu0 %v2902, 32
        %v3638 = vpop.permute.xlu0 %3637
        %3639 = vrot.lane.b32.xlu0 %v2904, 32
        %v3640 = vpop.permute.xlu0 %3639
        %3641 = vrot.lane.b32.xlu0 %v2906, 32
        %v3642 = vpop.permute.xlu0 %3641
        %3643 = vrot.lane.b32.xlu0 %v2908, 32
        %v3644 = vpop.permute.xlu0 %3643
        %3645 = vrot.lane.b32.xlu0 %v2910, 32
        %v3646 = vpop.permute.xlu0 %3645
        %3647 = vrot.lane.b32.xlu0 %v2912, 32
        %v3648 = vpop.permute.xlu0 %3647
        %3649 = vrot.lane.b32.xlu0 %v2914, 32
        %v3650 = vpop.permute.xlu0 %3649
        %3651 = vrot.lane.b32.xlu0 %v2916, 32
        %v3652 = vpop.permute.xlu0 %3651
        %3653 = vrot.lane.b32.xlu0 %v2918, 32
        %v3654 = vpop.permute.xlu0 %3653
        %3655 = vrot.lane.b32.xlu0 %v2920, 32
        %v3656 = vpop.permute.xlu0 %3655
        %3657 = vrot.lane.b32.xlu0 %v2922, 32
        %v3658 = vpop.permute.xlu0 %3657
        %3659 = vrot.lane.b32.xlu0 %v2924, 32
        %v3660 = vpop.permute.xlu0 %3659
        %3661 = vrot.lane.b32.xlu0 %v2926, 32
        %v3662 = vpop.permute.xlu0 %3661
        %3663 = vrot.lane.b32.xlu0 %v2928, 32
        %v3664 = vpop.permute.xlu0 %3663
        %3665 = vrot.lane.b32.xlu0 %v2930, 32
        %v3666 = vpop.permute.xlu0 %3665
        %3667 = vrot.lane.b32.xlu0 %v2932, 32
        %v3668 = vpop.permute.xlu0 %3667
        %3669 = vrot.lane.b32.xlu0 %v2934, 32
        %v3670 = vpop.permute.xlu0 %3669
        %3671 = vrot.lane.b32.xlu0 %v2936, 32
        %v3672 = vpop.permute.xlu0 %3671
        %3673 = vrot.lane.b32.xlu0 %v2938, 32
        %v3674 = vpop.permute.xlu0 %3673
        %3675 = vrot.lane.b32.xlu0 %v2940, 32
        %v3676 = vpop.permute.xlu0 %3675
        %v3709 = vsel %vm2229, %v3614, 0.0
        %3710 = vadd.xlane.f32.xlu0 %v3709
        %v3711 = vpop.xlane.xlu0 %3710
        %v3712 = vsel %vm2229, %v3616, 0.0
        %3713 = vadd.xlane.f32.xlu0 %v3712
        %v3714 = vpop.xlane.xlu0 %3713
        %v3715 = vsel %vm2229, %v3618, 0.0
        %3716 = vadd.xlane.f32.xlu0 %v3715
        %v3717 = vpop.xlane.xlu0 %3716
        %v3718 = vsel %vm2229, %v3620, 0.0
        %3719 = vadd.xlane.f32.xlu0 %v3718
        %v3720 = vpop.xlane.xlu0 %3719
        %v3721 = vsel %vm2229, %v3622, 0.0
        %3722 = vadd.xlane.f32.xlu0 %v3721
        %v3723 = vpop.xlane.xlu0 %3722
        %v3724 = vsel %vm2229, %v3624, 0.0
        %3725 = vadd.xlane.f32.xlu0 %v3724
        %v3726 = vpop.xlane.xlu0 %3725
        %v3727 = vsel %vm2229, %v3626, 0.0
        %3728 = vadd.xlane.f32.xlu0 %v3727
        %v3729 = vpop.xlane.xlu0 %3728
        %v3730 = vsel %vm2229, %v3628, 0.0
        %3731 = vadd.xlane.f32.xlu0 %v3730
        %v3732 = vpop.xlane.xlu0 %3731
        %v3733 = vsel %vm2229, %v3630, 0.0
        %3734 = vadd.xlane.f32.xlu0 %v3733
        %v3735 = vpop.xlane.xlu0 %3734
        %v3736 = vsel %vm2229, %v3632, 0.0
        %3737 = vadd.xlane.f32.xlu0 %v3736
        %v3738 = vpop.xlane.xlu0 %3737
        %v3739 = vsel %vm2229, %v3634, 0.0
        %3740 = vadd.xlane.f32.xlu0 %v3739
        %v3741 = vpop.xlane.xlu0 %3740
        %v3742 = vsel %vm2229, %v3636, 0.0
        %3743 = vadd.xlane.f32.xlu0 %v3742
        %v3744 = vpop.xlane.xlu0 %3743
        %v3745 = vsel %vm2229, %v3638, 0.0
        %3746 = vadd.xlane.f32.xlu0 %v3745
        %v3747 = vpop.xlane.xlu0 %3746
        %v3748 = vsel %vm2229, %v3640, 0.0
        %3749 = vadd.xlane.f32.xlu0 %v3748
        %v3750 = vpop.xlane.xlu0 %3749
        %v3751 = vsel %vm2229, %v3642, 0.0
        %3752 = vadd.xlane.f32.xlu0 %v3751
        %v3753 = vpop.xlane.xlu0 %3752
        %v3754 = vsel %vm2229, %v3644, 0.0
        %3755 = vadd.xlane.f32.xlu0 %v3754
        %v3756 = vpop.xlane.xlu0 %3755
        %v3757 = vsel %vm2229, %v3646, 0.0
        %3758 = vadd.xlane.f32.xlu0 %v3757
        %v3759 = vpop.xlane.xlu0 %3758
        %v3760 = vsel %vm2229, %v3648, 0.0
        %3761 = vadd.xlane.f32.xlu0 %v3760
        %v3762 = vpop.xlane.xlu0 %3761
        %v3763 = vsel %vm2229, %v3650, 0.0
        %3764 = vadd.xlane.f32.xlu0 %v3763
        %v3765 = vpop.xlane.xlu0 %3764
        %v3766 = vsel %vm2229, %v3652, 0.0
        %3767 = vadd.xlane.f32.xlu0 %v3766
        %v3768 = vpop.xlane.xlu0 %3767
        %v3769 = vsel %vm2229, %v3654, 0.0
        %3770 = vadd.xlane.f32.xlu0 %v3769
        %v3771 = vpop.xlane.xlu0 %3770
        %v3772 = vsel %vm2229, %v3656, 0.0
        %3773 = vadd.xlane.f32.xlu0 %v3772
        %v3774 = vpop.xlane.xlu0 %3773
        %v3775 = vsel %vm2229, %v3658, 0.0
        %3776 = vadd.xlane.f32.xlu0 %v3775
        %v3777 = vpop.xlane.xlu0 %3776
        %v3778 = vsel %vm2229, %v3660, 0.0
        %3779 = vadd.xlane.f32.xlu0 %v3778
        %v3780 = vpop.xlane.xlu0 %3779
        %v3781 = vsel %vm2229, %v3662, 0.0
        %3782 = vadd.xlane.f32.xlu0 %v3781
        %v3783 = vpop.xlane.xlu0 %3782
        %v3784 = vsel %vm2229, %v3664, 0.0
        %3785 = vadd.xlane.f32.xlu0 %v3784
        %v3786 = vpop.xlane.xlu0 %3785
        %v3787 = vsel %vm2229, %v3666, 0.0
        %3788 = vadd.xlane.f32.xlu0 %v3787
        %v3789 = vpop.xlane.xlu0 %3788
        %v3790 = vsel %vm2229, %v3668, 0.0
        %3791 = vadd.xlane.f32.xlu0 %v3790
        %v3792 = vpop.xlane.xlu0 %3791
        %v3793 = vsel %vm2229, %v3670, 0.0
        %3794 = vadd.xlane.f32.xlu0 %v3793
        %v3795 = vpop.xlane.xlu0 %3794
        %v3796 = vsel %vm2229, %v3672, 0.0
        %3797 = vadd.xlane.f32.xlu0 %v3796
        %v3798 = vpop.xlane.xlu0 %3797
        %v3799 = vsel %vm2229, %v3674, 0.0
        %3800 = vadd.xlane.f32.xlu0 %v3799
        %v3801 = vpop.xlane.xlu0 %3800
        %v3802 = vsel %vm2229, %v3676, 0.0
        %3803 = vadd.xlane.f32.xlu0 %v3802
        %v3804 = vpop.xlane.xlu0 %3803
        %v3805 = vmul.f32 %v3711, %v2780
        %v3806 = vmul.f32 %v3714, %v2780
        %v3807 = vmul.f32 %v3717, %v2780
        %v3808 = vmul.f32 %v3720, %v2780
        %v3809 = vmul.f32 %v3723, %v2780
        %v3810 = vmul.f32 %v3726, %v2780
        %v3811 = vmul.f32 %v3729, %v2780
        %v3812 = vmul.f32 %v3732, %v2780
        %v3813 = vmul.f32 %v3735, %v2780
        %v3814 = vmul.f32 %v3738, %v2780
        %v3815 = vmul.f32 %v3741, %v2780
        %v3816 = vmul.f32 %v3744, %v2780
        %v3817 = vmul.f32 %v3747, %v2780
        %v3818 = vmul.f32 %v3750, %v2780
        %v3819 = vmul.f32 %v3753, %v2780
        %v3820 = vmul.f32 %v3756, %v2780
        %v3821 = vmul.f32 %v3759, %v2780
        %v3822 = vmul.f32 %v3762, %v2780
        %v3823 = vmul.f32 %v3765, %v2780
        %v3824 = vmul.f32 %v3768, %v2780
        %v3825 = vmul.f32 %v3771, %v2780
        %v3826 = vmul.f32 %v3774, %v2780
        %v3827 = vmul.f32 %v3777, %v2780
        %v3828 = vmul.f32 %v3780, %v2780
        %v3829 = vmul.f32 %v3783, %v2780
        %v3830 = vmul.f32 %v3786, %v2780
        %v3831 = vmul.f32 %v3789, %v2780
        %v3832 = vmul.f32 %v3792, %v2780
        %v3833 = vmul.f32 %v3795, %v2780
        %v3834 = vmul.f32 %v3798, %v2780
        %v3835 = vmul.f32 %v3801, %v2780
        %v3836 = vmul.f32 %v3804, %v2780
        %v3837 = vadd.f32 %v3581, %v3805
        %v3838 = vadd.f32 %v3582, %v3806
        %v3839 = vadd.f32 %v3583, %v3807
        %v3840 = vadd.f32 %v3584, %v3808
        %v3841 = vadd.f32 %v3585, %v3809
        %v3842 = vadd.f32 %v3586, %v3810
        %v3843 = vadd.f32 %v3587, %v3811
        %v3844 = vadd.f32 %v3588, %v3812
        %v3845 = vadd.f32 %v3589, %v3813
        %v3846 = vadd.f32 %v3590, %v3814
        %v3847 = vadd.f32 %v3591, %v3815
        %v3848 = vadd.f32 %v3592, %v3816
        %v3849 = vadd.f32 %v3593, %v3817
        %v3850 = vadd.f32 %v3594, %v3818
        %v3851 = vadd.f32 %v3595, %v3819
        %v3852 = vadd.f32 %v3596, %v3820
        %v3853 = vadd.f32 %v3597, %v3821
        %v3854 = vadd.f32 %v3598, %v3822
        %v3855 = vadd.f32 %v3599, %v3823
        %v3856 = vadd.f32 %v3600, %v3824
        %v3857 = vadd.f32 %v3601, %v3825
        %v3858 = vadd.f32 %v3602, %v3826
        %v3859 = vadd.f32 %v3603, %v3827
        %v3860 = vadd.f32 %v3604, %v3828
        %v3861 = vadd.f32 %v3605, %v3829
        %v3862 = vadd.f32 %v3606, %v3830
        %v3863 = vadd.f32 %v3607, %v3831
        %v3864 = vadd.f32 %v3608, %v3832
        %v3865 = vadd.f32 %v3609, %v3833
        %v3866 = vadd.f32 %v3610, %v3834
        %v3867 = vadd.f32 %v3611, %v3835
        %v3868 = vadd.f32 %v3612, %v3836
        %v3869 = vrcp.pop %v3837
        %v3870 = vrcp.pop %v3838
        %v3871 = vrcp.pop %v3839
        %v3872 = vrcp.pop %v3840
        %v3873 = vrcp.pop %v3841
        %v3874 = vrcp.pop %v3842
        %v3875 = vrcp.pop %v3843
        %v3876 = vrcp.pop %v3844
        %v3877 = vrcp.pop %v3845
        %v3878 = vrcp.pop %v3846
        %v3879 = vrcp.pop %v3847
        %v3880 = vrcp.pop %v3848
        %v3881 = vrcp.pop %v3849
        %v3882 = vrcp.pop %v3850
        %v3883 = vrcp.pop %v3851
        %v3884 = vrcp.pop %v3852
        %v3885 = vrcp.pop %v3853
        %v3886 = vrcp.pop %v3854
        %v3887 = vrcp.pop %v3855
        %v3888 = vrcp.pop %v3856
        %v3889 = vrcp.pop %v3857
        %v3890 = vrcp.pop %v3858
        %v3891 = vrcp.pop %v3859
        %v3892 = vrcp.pop %v3860
        %v3893 = vrcp.pop %v3861
        %v3894 = vrcp.pop %v3862
        %v3895 = vrcp.pop %v3863
        %v3896 = vrcp.pop %v3864
        %v3897 = vrcp.pop %v3865
        %v3898 = vrcp.pop %v3866
        %v3899 = vrcp.pop %v3867
        %v3900 = vrcp.pop %v3868
        %v3901 = vmul.f32 %v2878, %v3869
        %v3902 = vmul.f32 %v2880, %v3870
        %v3903 = vmul.f32 %v2882, %v3871
        %v3904 = vmul.f32 %v2884, %v3872
        %v3905 = vmul.f32 %v2886, %v3873
        %v3906 = vmul.f32 %v2888, %v3874
        %v3907 = vmul.f32 %v2890, %v3875
        %v3908 = vmul.f32 %v2892, %v3876
        %v3909 = vmul.f32 %v2894, %v3877
        %v3910 = vmul.f32 %v2896, %v3878
        %v3911 = vmul.f32 %v2898, %v3879
        %v3912 = vmul.f32 %v2900, %v3880
        %v3913 = vmul.f32 %v2902, %v3881
        %v3914 = vmul.f32 %v2904, %v3882
        %v3915 = vmul.f32 %v2906, %v3883
        %v3916 = vmul.f32 %v2908, %v3884
        %v3917 = vmul.f32 %v2910, %v3885
        %v3918 = vmul.f32 %v2912, %v3886
        %v3919 = vmul.f32 %v2914, %v3887
        %v3920 = vmul.f32 %v2916, %v3888
        %v3921 = vmul.f32 %v2918, %v3889
        %v3922 = vmul.f32 %v2920, %v3890
        %v3923 = vmul.f32 %v2922, %v3891
        %v3924 = vmul.f32 %v2924, %v3892
        %v3925 = vmul.f32 %v2926, %v3893
        %v3926 = vmul.f32 %v2928, %v3894
        %v3927 = vmul.f32 %v2930, %v3895
        %v3928 = vmul.f32 %v2932, %v3896
        %v3929 = vmul.f32 %v2934, %v3897
        %v3930 = vmul.f32 %v2936, %v3898
        %v3931 = vmul.f32 %v2938, %v3899
        %v3932 = vmul.f32 %v2940, %v3900
        %v3933 = vmax.f32 %v2057, %v2059
        %v3934 = vrot.slane %v3933, 4
        %v3935 = vmax.f32 %v3933, %v3934
        %v3936 = vrot.slane %v3935, 2
        %v3937 = vmax.f32 %v3935, %v3936
        %v3938 = vrot.slane %v3937, 1
        %v3939 = vmax.f32 %v3937, %v3938
        %v3940 = vmax.f32 %v2062, %v2064
        %v3941 = vrot.slane %v3940, 4
        %v3942 = vmax.f32 %v3940, %v3941
        %v3943 = vrot.slane %v3942, 2
        %v3944 = vmax.f32 %v3942, %v3943
        %v3945 = vrot.slane %v3944, 1
        %v3946 = vmax.f32 %v3944, %v3945
        %v3947 = vmax.f32 %v2067, %v2069
        %v3948 = vrot.slane %v3947, 4
        %v3949 = vmax.f32 %v3947, %v3948
        %v3950 = vrot.slane %v3949, 2
        %v3951 = vmax.f32 %v3949, %v3950
        %v3952 = vrot.slane %v3951, 1
        %v3953 = vmax.f32 %v3951, %v3952
        %v3954 = vmax.f32 %v2072, %v2074
        %v3955 = vrot.slane %v3954, 4
        %v3956 = vmax.f32 %v3954, %v3955
        %v3957 = vrot.slane %v3956, 2
        %v3958 = vmax.f32 %v3956, %v3957
        %v3959 = vrot.slane %v3958, 1
        %v3960 = vmax.f32 %v3958, %v3959
        %v3961 = vmax.f32 %v2077, %v2079
        %v3962 = vrot.slane %v3961, 4
        %v3963 = vmax.f32 %v3961, %v3962
        %v3964 = vrot.slane %v3963, 2
        %v3965 = vmax.f32 %v3963, %v3964
        %v3966 = vrot.slane %v3965, 1
        %v3967 = vmax.f32 %v3965, %v3966
        %v3968 = vmax.f32 %v2082, %v2084
        %v3969 = vrot.slane %v3968, 4
        %v3970 = vmax.f32 %v3968, %v3969
        %v3971 = vrot.slane %v3970, 2
        %v3972 = vmax.f32 %v3970, %v3971
        %v3973 = vrot.slane %v3972, 1
        %v3974 = vmax.f32 %v3972, %v3973
        %v3975 = vmax.f32 %v2087, %v2089
        %v3976 = vrot.slane %v3975, 4
        %v3977 = vmax.f32 %v3975, %v3976
        %v3978 = vrot.slane %v3977, 2
        %v3979 = vmax.f32 %v3977, %v3978
        %v3980 = vrot.slane %v3979, 1
        %v3981 = vmax.f32 %v3979, %v3980
        %v3982 = vmax.f32 %v2092, %v2094
        %v3983 = vrot.slane %v3982, 4
        %v3984 = vmax.f32 %v3982, %v3983
        %v3985 = vrot.slane %v3984, 2
        %v3986 = vmax.f32 %v3984, %v3985
        %v3987 = vrot.slane %v3986, 1
        %v3988 = vmax.f32 %v3986, %v3987
        %v3989 = vsub.f32 %v2057, %v3939
        %v3990 = vsub.f32 %v2059, %v3939
        %v3991 = vsub.f32 %v2062, %v3946
        %v3992 = vsub.f32 %v2064, %v3946
        %v3993 = vsub.f32 %v2067, %v3953
        %v3994 = vsub.f32 %v2069, %v3953
        %v3995 = vsub.f32 %v2072, %v3960
        %v3996 = vsub.f32 %v2074, %v3960
        %v3997 = vsub.f32 %v2077, %v3967
        %v3998 = vsub.f32 %v2079, %v3967
        %v3999 = vsub.f32 %v2082, %v3974
        %v4000 = vsub.f32 %v2084, %v3974
        %v4001 = vsub.f32 %v2087, %v3981
        %v4002 = vsub.f32 %v2089, %v3981
        %v4003 = vsub.f32 %v2092, %v3988
        %v4004 = vsub.f32 %v2094, %v3988
        %v4005 = vmul.f32 %v3989, 1.442695
        %v4006 = vpow.pop %v4005
        %v4007 = vmul.f32 %v3990, 1.442695
        %v4008 = vpow.pop %v4007
        %v4009 = vmul.f32 %v3991, 1.442695
        %v4010 = vpow.pop %v4009
        %v4011 = vmul.f32 %v3992, 1.442695
        %v4012 = vpow.pop %v4011
        %v4013 = vmul.f32 %v3993, 1.442695
        %v4014 = vpow.pop %v4013
        %v4015 = vmul.f32 %v3994, 1.442695
        %v4016 = vpow.pop %v4015
        %v4017 = vmul.f32 %v3995, 1.442695
        %v4018 = vpow.pop %v4017
        %v4019 = vmul.f32 %v3996, 1.442695
        %v4020 = vpow.pop %v4019
        %v4021 = vmul.f32 %v3997, 1.442695
        %v4022 = vpow.pop %v4021
        %v4023 = vmul.f32 %v3998, 1.442695
        %v4024 = vpow.pop %v4023
        %v4025 = vmul.f32 %v3999, 1.442695
        %v4026 = vpow.pop %v4025
        %v4027 = vmul.f32 %v4000, 1.442695
        %v4028 = vpow.pop %v4027
        %v4029 = vmul.f32 %v4001, 1.442695
        %v4030 = vpow.pop %v4029
        %v4031 = vmul.f32 %v4002, 1.442695
        %v4032 = vpow.pop %v4031
        %v4033 = vmul.f32 %v4003, 1.442695
        %v4034 = vpow.pop %v4033
        %v4035 = vmul.f32 %v4004, 1.442695
        %v4036 = vpow.pop %v4035
        %v4037 = vadd.f32 %v4006, %v4008
        %v4038 = vrot.slane %v4037, 4
        %v4039 = vadd.f32 %v4037, %v4038
        %v4040 = vrot.slane %v4039, 2
        %v4041 = vadd.f32 %v4039, %v4040
        %v4042 = vrot.slane %v4041, 1
        %v4043 = vadd.f32 %v4041, %v4042
        %v4044 = vadd.f32 %v4010, %v4012
        %v4045 = vrot.slane %v4044, 4
        %v4046 = vadd.f32 %v4044, %v4045
        %v4047 = vrot.slane %v4046, 2
        %v4048 = vadd.f32 %v4046, %v4047
        %v4049 = vrot.slane %v4048, 1
        %v4050 = vadd.f32 %v4048, %v4049
        %v4051 = vadd.f32 %v4014, %v4016
        %v4052 = vrot.slane %v4051, 4
        %v4053 = vadd.f32 %v4051, %v4052
        %v4054 = vrot.slane %v4053, 2
        %v4055 = vadd.f32 %v4053, %v4054
        %v4056 = vrot.slane %v4055, 1
        %v4057 = vadd.f32 %v4055, %v4056
        %v4058 = vadd.f32 %v4018, %v4020
        %v4059 = vrot.slane %v4058, 4
        %v4060 = vadd.f32 %v4058, %v4059
        %v4061 = vrot.slane %v4060, 2
        %v4062 = vadd.f32 %v4060, %v4061
        %v4063 = vrot.slane %v4062, 1
        %v4064 = vadd.f32 %v4062, %v4063
        %v4065 = vadd.f32 %v4022, %v4024
        %v4066 = vrot.slane %v4065, 4
        %v4067 = vadd.f32 %v4065, %v4066
        %v4068 = vrot.slane %v4067, 2
        %v4069 = vadd.f32 %v4067, %v4068
        %v4070 = vrot.slane %v4069, 1
        %v4071 = vadd.f32 %v4069, %v4070
        %v4072 = vadd.f32 %v4026, %v4028
        %v4073 = vrot.slane %v4072, 4
        %v4074 = vadd.f32 %v4072, %v4073
        %v4075 = vrot.slane %v4074, 2
        %v4076 = vadd.f32 %v4074, %v4075
        %v4077 = vrot.slane %v4076, 1
        %v4078 = vadd.f32 %v4076, %v4077
        %v4079 = vadd.f32 %v4030, %v4032
        %v4080 = vrot.slane %v4079, 4
        %v4081 = vadd.f32 %v4079, %v4080
        %v4082 = vrot.slane %v4081, 2
        %v4083 = vadd.f32 %v4081, %v4082
        %v4084 = vrot.slane %v4083, 1
        %v4085 = vadd.f32 %v4083, %v4084
        %v4086 = vadd.f32 %v4034, %v4036
        %v4087 = vrot.slane %v4086, 4
        %v4088 = vadd.f32 %v4086, %v4087
        %v4089 = vrot.slane %v4088, 2
        %v4090 = vadd.f32 %v4088, %v4089
        %v4091 = vrot.slane %v4090, 1
        %v4092 = vadd.f32 %v4090, %v4091
        %v4093 = vrcp.pop %v4043
        %v4094 = vrcp.pop %v4050
        %v4095 = vrcp.pop %v4057
        %v4096 = vrcp.pop %v4064
        %v4097 = vrcp.pop %v4071
        %v4098 = vrcp.pop %v4078
        %v4099 = vrcp.pop %v4085
        %v4100 = vrcp.pop %v4092
        %v4101 = vmul.f32 %v4006, %v4093
        %v4102 = vmul.f32 %v4008, %v4093
        %v4103 = vmul.f32 %v4010, %v4094
        %v4104 = vmul.f32 %v4012, %v4094
        %v4105 = vmul.f32 %v4014, %v4095
        %v4106 = vmul.f32 %v4016, %v4095
        %v4107 = vmul.f32 %v4018, %v4096
        %v4108 = vmul.f32 %v4020, %v4096
        %v4109 = vmul.f32 %v4022, %v4097
        %v4110 = vmul.f32 %v4024, %v4097
        %v4111 = vmul.f32 %v4026, %v4098
        %v4112 = vmul.f32 %v4028, %v4098
        %v4113 = vmul.f32 %v4030, %v4099
        %v4114 = vmul.f32 %v4032, %v4099
        %v4115 = vmul.f32 %v4034, %v4100
        %v4116 = vmul.f32 %v4036, %v4100
        %v4117 = vpack.c.bf16 %v4101, %v4101
        %v4118 = vpack.c.bf16 %v4102, %v4102
        %v4119 = vpack.c.bf16 %v4103, %v4103
        %v4120 = vpack.c.bf16 %v4104, %v4104
        %v4121 = vpack.c.bf16 %v4105, %v4105
        %v4122 = vpack.c.bf16 %v4106, %v4106
        %v4123 = vpack.c.bf16 %v4107, %v4107
        %v4124 = vpack.c.bf16 %v4108, %v4108
        %v4125 = vpack.c.bf16 %v4109, %v4109
        %v4126 = vpack.c.bf16 %v4110, %v4110
        %v4127 = vpack.c.bf16 %v4111, %v4111
        %v4128 = vpack.c.bf16 %v4112, %v4112
        %v4129 = vpack.c.bf16 %v4113, %v4113
        %v4130 = vpack.c.bf16 %v4114, %v4114
        %v4131 = vpack.c.bf16 %v4115, %v4115
        %v4132 = vpack.c.bf16 %v4116, %v4116
        %v4133 = vpack.c.bf16 %v2174, %v2174
        %v4134 = vpack.c.bf16 %v2176, %v2176
        %v4135 = vpack.c.bf16 %v2179, %v2179
        %v4136 = vpack.c.bf16 %v2181, %v2181
        %v4137 = vpack.c.bf16 %v2184, %v2184
        %v4138 = vpack.c.bf16 %v2186, %v2186
        %v4139 = vpack.c.bf16 %v2189, %v2189
        %v4140 = vpack.c.bf16 %v2191, %v2191
        %v4141 = vpack.c.bf16 %v2194, %v2194
        %v4142 = vpack.c.bf16 %v2196, %v2196
        %v4143 = vpack.c.bf16 %v2199, %v2199
        %v4144 = vpack.c.bf16 %v2201, %v2201
        %v4145 = vpack.c.bf16 %v2204, %v2204
        %v4146 = vpack.c.bf16 %v2206, %v2206
        %v4147 = vpack.c.bf16 %v2209, %v2209
        %v4148 = vpack.c.bf16 %v2211, %v2211
        %v4149 = vpack.c.bf16 %v3901, %v3901
        %v4150 = vpack.c.bf16 %v3902, %v3902
        %v4151 = vpack.c.bf16 %v3903, %v3903
        %v4152 = vpack.c.bf16 %v3904, %v3904
        %v4153 = vpack.c.bf16 %v3905, %v3905
        %v4154 = vpack.c.bf16 %v3906, %v3906
        %v4155 = vpack.c.bf16 %v3907, %v3907
        %v4156 = vpack.c.bf16 %v3908, %v3908
        %v4157 = vpack.c.bf16 %v3909, %v3909
        %v4158 = vpack.c.bf16 %v3910, %v3910
        %v4159 = vpack.c.bf16 %v3911, %v3911
        %v4160 = vpack.c.bf16 %v3912, %v3912
        %v4161 = vpack.c.bf16 %v3913, %v3913
        %v4162 = vpack.c.bf16 %v3914, %v3914
        %v4163 = vpack.c.bf16 %v3915, %v3915
        %v4164 = vpack.c.bf16 %v3916, %v3916
        %v4165 = vpack.c.bf16 %v3917, %v3917
        %v4166 = vpack.c.bf16 %v3918, %v3918
        %v4167 = vpack.c.bf16 %v3919, %v3919
        %v4168 = vpack.c.bf16 %v3920, %v3920
        %v4169 = vpack.c.bf16 %v3921, %v3921
        %v4170 = vpack.c.bf16 %v3922, %v3922
        %v4171 = vpack.c.bf16 %v3923, %v3923
        %v4172 = vpack.c.bf16 %v3924, %v3924
        %v4173 = vpack.c.bf16 %v3925, %v3925
        %v4174 = vpack.c.bf16 %v3926, %v3926
        %v4175 = vpack.c.bf16 %v3927, %v3927
        %v4176 = vpack.c.bf16 %v3928, %v3928
        %v4177 = vpack.c.bf16 %v3929, %v3929
        %v4178 = vpack.c.bf16 %v3930, %v3930
        %v4179 = vpack.c.bf16 %v3931, %v3931
        %v4180 = vpack.c.bf16 %v3932, %v3932
        %v4183 = vunpack.c.l.b16 %v4117
        %v4184 = vunpack.c.l.b16 %v4118
        %v4185 = vpack.c.b16 %v4184, %v4183
        %4187 = vxpose.xlu0.c.b16.start [1/8] %v4185, 128
        %4188 = vxpose.xlu0.c.b16.cont [2/8] 0, 128
        %4189 = vxpose.xlu0.c.b16.cont [3/8] 0, 128
        %4190 = vxpose.xlu0.c.b16.cont [4/8] 0, 128
        %4191 = vxpose.xlu0.c.b16.cont [5/8] 0, 128
        %4192 = vxpose.xlu0.c.b16.cont [6/8] 0, 128
        %4193 = vxpose.xlu0.c.b16.cont [7/8] 0, 128
        %4194 = vxpose.xlu0.c.b16.end [8/8] 0, 128
        %v4195 = vpop.trf.xlu0
        %v4196 = vpop.trf.xlu0
        %v4197 = vpop.trf.xlu0
        %v4198 = vpop.trf.xlu0
        %v4199 = vpop.trf.xlu0
        %v4200 = vpop.trf.xlu0
        %v4201 = vpop.trf.xlu0
        %v4202 = vpop.trf.xlu0
        %v4205 = vunpack.c.l.b16 %v4133
        %v4206 = vunpack.c.l.b16 %v4134
        %v4207 = vpack.c.b16 %v4206, %v4205
        %vm4209 = vcmask 130048
        %v4211 = vsel %vm4209, %v4195, 0
        %v4214 = vsel %vm4209, %v4196, 0
        %v4217 = vsel %vm4209, %v4197, 0
        %v4220 = vsel %vm4209, %v4198, 0
        %v4223 = vsel %vm4209, %v4199, 0
        %v4226 = vsel %vm4209, %v4200, 0
        %v4229 = vsel %vm4209, %v4201, 0
        %v4232 = vsel %vm4209, %v4202, 0
        %4234 = vmatpush.bf16.msra.mxu0 0
        %4235 = vmatpush.bf16.msra.mxu0 0
        %4236 = vmatpush.bf16.msra.mxu0 0
        %4237 = vmatpush.bf16.msra.mxu0 0
        %4238 = vmatpush.bf16.msra.mxu0 0
        %4239 = vmatpush.bf16.msra.mxu0 0
        %4240 = vmatpush.bf16.msra.mxu0 0
        %4241 = vmatpush.bf16.msra.mxu0 %v4207
        %4242 = vmatmul.bf16.gmra.mxu0 %v4211
        %v4243 = vpop.f32.mrf.mxu0
        %v4244 = vadd.f32 0.0, %v4243
        %v4245 = vpop.f32.mrf.mxu0
        %v4246 = vadd.f32 0.0, %v4245
        %4247 = vmatmul.bf16.gmra.mxu0 %v4214
        %v4248 = vpop.f32.mrf.mxu0
        %v4249 = vadd.f32 0.0, %v4248
        %v4250 = vpop.f32.mrf.mxu0
        %v4251 = vadd.f32 0.0, %v4250
        %4252 = vmatmul.bf16.gmra.mxu0 %v4217
        %v4253 = vpop.f32.mrf.mxu0
        %v4254 = vadd.f32 0.0, %v4253
        %v4255 = vpop.f32.mrf.mxu0
        %v4256 = vadd.f32 0.0, %v4255
        %4257 = vmatmul.bf16.gmra.mxu0 %v4220
        %v4258 = vpop.f32.mrf.mxu0
        %v4259 = vadd.f32 0.0, %v4258
        %v4260 = vpop.f32.mrf.mxu0
        %v4261 = vadd.f32 0.0, %v4260
        %4262 = vmatmul.bf16.gmra.mxu0 %v4223
        %v4263 = vpop.f32.mrf.mxu0
        %v4264 = vadd.f32 0.0, %v4263
        %v4265 = vpop.f32.mrf.mxu0
        %v4266 = vadd.f32 0.0, %v4265
        %4267 = vmatmul.bf16.gmra.mxu0 %v4226
        %v4268 = vpop.f32.mrf.mxu0
        %v4269 = vadd.f32 0.0, %v4268
        %v4270 = vpop.f32.mrf.mxu0
        %v4271 = vadd.f32 0.0, %v4270
        %4272 = vmatmul.bf16.gmra.mxu0 %v4229
        %v4273 = vpop.f32.mrf.mxu0
        %v4274 = vadd.f32 0.0, %v4273
        %v4275 = vpop.f32.mrf.mxu0
        %v4276 = vadd.f32 0.0, %v4275
        %4277 = vmatmul.bf16.gmra.mxu0 %v4232
        %v4278 = vpop.f32.mrf.mxu0
        %v4279 = vadd.f32 0.0, %v4278
        %v4280 = vpop.f32.mrf.mxu0
        %v4281 = vadd.f32 0.0, %v4280
        %4282 = vdwg.mxu0
        %v4285 = vunpack.c.l.b16 %v4119
        %v4286 = vunpack.c.l.b16 %v4120
        %v4287 = vpack.c.b16 %v4286, %v4285
        %4289 = vxpose.xlu0.c.b16.start [1/8] %v4287, 128
        %4290 = vxpose.xlu0.c.b16.cont [2/8] 0, 128
        %4291 = vxpose.xlu0.c.b16.cont [3/8] 0, 128
        %4292 = vxpose.xlu0.c.b16.cont [4/8] 0, 128
        %4293 = vxpose.xlu0.c.b16.cont [5/8] 0, 128
        %4294 = vxpose.xlu0.c.b16.cont [6/8] 0, 128
        %4295 = vxpose.xlu0.c.b16.cont [7/8] 0, 128
        %4296 = vxpose.xlu0.c.b16.end [8/8] 0, 128
        %v4297 = vpop.trf.xlu0
        %v4298 = vpop.trf.xlu0
        %v4299 = vpop.trf.xlu0
        %v4300 = vpop.trf.xlu0
        %v4301 = vpop.trf.xlu0
        %v4302 = vpop.trf.xlu0
        %v4303 = vpop.trf.xlu0
        %v4304 = vpop.trf.xlu0
        %v4307 = vunpack.c.l.b16 %v4135
        %v4308 = vunpack.c.l.b16 %v4136
        %v4309 = vpack.c.b16 %v4308, %v4307
        %v4312 = vsel %vm4209, %v4297, 0
        %v4315 = vsel %vm4209, %v4298, 0
        %v4318 = vsel %vm4209, %v4299, 0
        %v4321 = vsel %vm4209, %v4300, 0
        %v4324 = vsel %vm4209, %v4301, 0
        %v4327 = vsel %vm4209, %v4302, 0
        %v4330 = vsel %vm4209, %v4303, 0
        %v4333 = vsel %vm4209, %v4304, 0
        %4335 = vmatpush.bf16.msra.mxu0 0
        %4336 = vmatpush.bf16.msra.mxu0 0
        %4337 = vmatpush.bf16.msra.mxu0 0
        %4338 = vmatpush.bf16.msra.mxu0 0
        %4339 = vmatpush.bf16.msra.mxu0 0
        %4340 = vmatpush.bf16.msra.mxu0 0
        %4341 = vmatpush.bf16.msra.mxu0 0
        %4342 = vmatpush.bf16.msra.mxu0 %v4309
        %4343 = vmatmul.bf16.gmra.mxu0 %v4312
        %v4344 = vpop.f32.mrf.mxu0
        %v4345 = vadd.f32 0.0, %v4344
        %v4346 = vpop.f32.mrf.mxu0
        %v4347 = vadd.f32 0.0, %v4346
        %4348 = vmatmul.bf16.gmra.mxu0 %v4315
        %v4349 = vpop.f32.mrf.mxu0
        %v4350 = vadd.f32 0.0, %v4349
        %v4351 = vpop.f32.mrf.mxu0
        %v4352 = vadd.f32 0.0, %v4351
        %4353 = vmatmul.bf16.gmra.mxu0 %v4318
        %v4354 = vpop.f32.mrf.mxu0
        %v4355 = vadd.f32 0.0, %v4354
        %v4356 = vpop.f32.mrf.mxu0
        %v4357 = vadd.f32 0.0, %v4356
        %4358 = vmatmul.bf16.gmra.mxu0 %v4321
        %v4359 = vpop.f32.mrf.mxu0
        %v4360 = vadd.f32 0.0, %v4359
        %v4361 = vpop.f32.mrf.mxu0
        %v4362 = vadd.f32 0.0, %v4361
        %4363 = vmatmul.bf16.gmra.mxu0 %v4324
        %v4364 = vpop.f32.mrf.mxu0
        %v4365 = vadd.f32 0.0, %v4364
        %v4366 = vpop.f32.mrf.mxu0
        %v4367 = vadd.f32 0.0, %v4366
        %4368 = vmatmul.bf16.gmra.mxu0 %v4327
        %v4369 = vpop.f32.mrf.mxu0
        %v4370 = vadd.f32 0.0, %v4369
        %v4371 = vpop.f32.mrf.mxu0
        %v4372 = vadd.f32 0.0, %v4371
        %4373 = vmatmul.bf16.gmra.mxu0 %v4330
        %v4374 = vpop.f32.mrf.mxu0
        %v4375 = vadd.f32 0.0, %v4374
        %v4376 = vpop.f32.mrf.mxu0
        %v4377 = vadd.f32 0.0, %v4376
        %4378 = vmatmul.bf16.gmra.mxu0 %v4333
        %v4379 = vpop.f32.mrf.mxu0
        %v4380 = vadd.f32 0.0, %v4379
        %v4381 = vpop.f32.mrf.mxu0
        %v4382 = vadd.f32 0.0, %v4381
        %4383 = vdwg.mxu0
        %v4386 = vunpack.c.l.b16 %v4121
        %v4387 = vunpack.c.l.b16 %v4122
        %v4388 = vpack.c.b16 %v4387, %v4386
        %4390 = vxpose.xlu0.c.b16.start [1/8] %v4388, 128
        %4391 = vxpose.xlu0.c.b16.cont [2/8] 0, 128
        %4392 = vxpose.xlu0.c.b16.cont [3/8] 0, 128
        %4393 = vxpose.xlu0.c.b16.cont [4/8] 0, 128
        %4394 = vxpose.xlu0.c.b16.cont [5/8] 0, 128
        %4395 = vxpose.xlu0.c.b16.cont [6/8] 0, 128
        %4396 = vxpose.xlu0.c.b16.cont [7/8] 0, 128
        %4397 = vxpose.xlu0.c.b16.end [8/8] 0, 128
        %v4398 = vpop.trf.xlu0
        %v4399 = vpop.trf.xlu0
        %v4400 = vpop.trf.xlu0
        %v4401 = vpop.trf.xlu0
        %v4402 = vpop.trf.xlu0
        %v4403 = vpop.trf.xlu0
        %v4404 = vpop.trf.xlu0
        %v4405 = vpop.trf.xlu0
        %v4408 = vunpack.c.l.b16 %v4137
        %v4409 = vunpack.c.l.b16 %v4138
        %v4410 = vpack.c.b16 %v4409, %v4408
        %v4413 = vsel %vm4209, %v4398, 0
        %v4416 = vsel %vm4209, %v4399, 0
        %v4419 = vsel %vm4209, %v4400, 0
        %v4422 = vsel %vm4209, %v4401, 0
        %v4425 = vsel %vm4209, %v4402, 0
        %v4428 = vsel %vm4209, %v4403, 0
        %v4431 = vsel %vm4209, %v4404, 0
        %v4434 = vsel %vm4209, %v4405, 0
        %4436 = vmatpush.bf16.msra.mxu0 0
        %4437 = vmatpush.bf16.msra.mxu0 0
        %4438 = vmatpush.bf16.msra.mxu0 0
        %4439 = vmatpush.bf16.msra.mxu0 0
        %4440 = vmatpush.bf16.msra.mxu0 0
        %4441 = vmatpush.bf16.msra.mxu0 0
        %4442 = vmatpush.bf16.msra.mxu0 0
        %4443 = vmatpush.bf16.msra.mxu0 %v4410
        %4444 = vmatmul.bf16.gmra.mxu0 %v4413
        %v4445 = vpop.f32.mrf.mxu0
        %v4446 = vadd.f32 0.0, %v4445
        %v4447 = vpop.f32.mrf.mxu0
        %v4448 = vadd.f32 0.0, %v4447
        %4449 = vmatmul.bf16.gmra.mxu0 %v4416
        %v4450 = vpop.f32.mrf.mxu0
        %v4451 = vadd.f32 0.0, %v4450
        %v4452 = vpop.f32.mrf.mxu0
        %v4453 = vadd.f32 0.0, %v4452
        %4454 = vmatmul.bf16.gmra.mxu0 %v4419
        %v4455 = vpop.f32.mrf.mxu0
        %v4456 = vadd.f32 0.0, %v4455
        %v4457 = vpop.f32.mrf.mxu0
        %v4458 = vadd.f32 0.0, %v4457
        %4459 = vmatmul.bf16.gmra.mxu0 %v4422
        %v4460 = vpop.f32.mrf.mxu0
        %v4461 = vadd.f32 0.0, %v4460
        %v4462 = vpop.f32.mrf.mxu0
        %v4463 = vadd.f32 0.0, %v4462
        %4464 = vmatmul.bf16.gmra.mxu0 %v4425
        %v4465 = vpop.f32.mrf.mxu0
        %v4466 = vadd.f32 0.0, %v4465
        %v4467 = vpop.f32.mrf.mxu0
        %v4468 = vadd.f32 0.0, %v4467
        %4469 = vmatmul.bf16.gmra.mxu0 %v4428
        %v4470 = vpop.f32.mrf.mxu0
        %v4471 = vadd.f32 0.0, %v4470
        %v4472 = vpop.f32.mrf.mxu0
        %v4473 = vadd.f32 0.0, %v4472
        %4474 = vmatmul.bf16.gmra.mxu0 %v4431
        %v4475 = vpop.f32.mrf.mxu0
        %v4476 = vadd.f32 0.0, %v4475
        %v4477 = vpop.f32.mrf.mxu0
        %v4478 = vadd.f32 0.0, %v4477
        %4479 = vmatmul.bf16.gmra.mxu0 %v4434
        %v4480 = vpop.f32.mrf.mxu0
        %v4481 = vadd.f32 0.0, %v4480
        %v4482 = vpop.f32.mrf.mxu0
        %v4483 = vadd.f32 0.0, %v4482
        %4484 = vdwg.mxu0
        %v4487 = vunpack.c.l.b16 %v4123
        %v4488 = vunpack.c.l.b16 %v4124
        %v4489 = vpack.c.b16 %v4488, %v4487
        %4491 = vxpose.xlu0.c.b16.start [1/8] %v4489, 128
        %4492 = vxpose.xlu0.c.b16.cont [2/8] 0, 128
        %4493 = vxpose.xlu0.c.b16.cont [3/8] 0, 128
        %4494 = vxpose.xlu0.c.b16.cont [4/8] 0, 128
        %4495 = vxpose.xlu0.c.b16.cont [5/8] 0, 128
        %4496 = vxpose.xlu0.c.b16.cont [6/8] 0, 128
        %4497 = vxpose.xlu0.c.b16.cont [7/8] 0, 128
        %4498 = vxpose.xlu0.c.b16.end [8/8] 0, 128
        %v4499 = vpop.trf.xlu0
        %v4500 = vpop.trf.xlu0
        %v4501 = vpop.trf.xlu0
        %v4502 = vpop.trf.xlu0
        %v4503 = vpop.trf.xlu0
        %v4504 = vpop.trf.xlu0
        %v4505 = vpop.trf.xlu0
        %v4506 = vpop.trf.xlu0
        %v4509 = vunpack.c.l.b16 %v4139
        %v4510 = vunpack.c.l.b16 %v4140
        %v4511 = vpack.c.b16 %v4510, %v4509
        %v4514 = vsel %vm4209, %v4499, 0
        %v4517 = vsel %vm4209, %v4500, 0
        %v4520 = vsel %vm4209, %v4501, 0
        %v4523 = vsel %vm4209, %v4502, 0
        %v4526 = vsel %vm4209, %v4503, 0
        %v4529 = vsel %vm4209, %v4504, 0
        %v4532 = vsel %vm4209, %v4505, 0
        %v4535 = vsel %vm4209, %v4506, 0
        %4537 = vmatpush.bf16.msra.mxu0 0
        %4538 = vmatpush.bf16.msra.mxu0 0
        %4539 = vmatpush.bf16.msra.mxu0 0
        %4540 = vmatpush.bf16.msra.mxu0 0
        %4541 = vmatpush.bf16.msra.mxu0 0
        %4542 = vmatpush.bf16.msra.mxu0 0
        %4543 = vmatpush.bf16.msra.mxu0 0
        %4544 = vmatpush.bf16.msra.mxu0 %v4511
        %4545 = vmatmul.bf16.gmra.mxu0 %v4514
        %v4546 = vpop.f32.mrf.mxu0
        %v4547 = vadd.f32 0.0, %v4546
        %v4548 = vpop.f32.mrf.mxu0
        %v4549 = vadd.f32 0.0, %v4548
        %4550 = vmatmul.bf16.gmra.mxu0 %v4517
        %v4551 = vpop.f32.mrf.mxu0
        %v4552 = vadd.f32 0.0, %v4551
        %v4553 = vpop.f32.mrf.mxu0
        %v4554 = vadd.f32 0.0, %v4553
        %4555 = vmatmul.bf16.gmra.mxu0 %v4520
        %v4556 = vpop.f32.mrf.mxu0
        %v4557 = vadd.f32 0.0, %v4556
        %v4558 = vpop.f32.mrf.mxu0
        %v4559 = vadd.f32 0.0, %v4558
        %4560 = vmatmul.bf16.gmra.mxu0 %v4523
        %v4561 = vpop.f32.mrf.mxu0
        %v4562 = vadd.f32 0.0, %v4561
        %v4563 = vpop.f32.mrf.mxu0
        %v4564 = vadd.f32 0.0, %v4563
        %4565 = vmatmul.bf16.gmra.mxu0 %v4526
        %v4566 = vpop.f32.mrf.mxu0
        %v4567 = vadd.f32 0.0, %v4566
        %v4568 = vpop.f32.mrf.mxu0
        %v4569 = vadd.f32 0.0, %v4568
        %4570 = vmatmul.bf16.gmra.mxu0 %v4529
        %v4571 = vpop.f32.mrf.mxu0
        %v4572 = vadd.f32 0.0, %v4571
        %v4573 = vpop.f32.mrf.mxu0
        %v4574 = vadd.f32 0.0, %v4573
        %4575 = vmatmul.bf16.gmra.mxu0 %v4532
        %v4576 = vpop.f32.mrf.mxu0
        %v4577 = vadd.f32 0.0, %v4576
        %v4578 = vpop.f32.mrf.mxu0
        %v4579 = vadd.f32 0.0, %v4578
        %4580 = vmatmul.bf16.gmra.mxu0 %v4535
        %v4581 = vpop.f32.mrf.mxu0
        %v4582 = vadd.f32 0.0, %v4581
        %v4583 = vpop.f32.mrf.mxu0
        %v4584 = vadd.f32 0.0, %v4583
        %4585 = vdwg.mxu0
        %v4588 = vunpack.c.l.b16 %v4125
        %v4589 = vunpack.c.l.b16 %v4126
        %v4590 = vpack.c.b16 %v4589, %v4588
        %4592 = vxpose.xlu0.c.b16.start [1/8] %v4590, 128
        %4593 = vxpose.xlu0.c.b16.cont [2/8] 0, 128
        %4594 = vxpose.xlu0.c.b16.cont [3/8] 0, 128
        %4595 = vxpose.xlu0.c.b16.cont [4/8] 0, 128
        %4596 = vxpose.xlu0.c.b16.cont [5/8] 0, 128
        %4597 = vxpose.xlu0.c.b16.cont [6/8] 0, 128
        %4598 = vxpose.xlu0.c.b16.cont [7/8] 0, 128
        %4599 = vxpose.xlu0.c.b16.end [8/8] 0, 128
        %v4600 = vpop.trf.xlu0
        %v4601 = vpop.trf.xlu0
        %v4602 = vpop.trf.xlu0
        %v4603 = vpop.trf.xlu0
        %v4604 = vpop.trf.xlu0
        %v4605 = vpop.trf.xlu0
        %v4606 = vpop.trf.xlu0
        %v4607 = vpop.trf.xlu0
        %v4610 = vunpack.c.l.b16 %v4141
        %v4611 = vunpack.c.l.b16 %v4142
        %v4612 = vpack.c.b16 %v4611, %v4610
        %v4615 = vsel %vm4209, %v4600, 0
        %v4618 = vsel %vm4209, %v4601, 0
        %v4621 = vsel %vm4209, %v4602, 0
        %v4624 = vsel %vm4209, %v4603, 0
        %v4627 = vsel %vm4209, %v4604, 0
        %v4630 = vsel %vm4209, %v4605, 0
        %v4633 = vsel %vm4209, %v4606, 0
        %v4636 = vsel %vm4209, %v4607, 0
        %4638 = vmatpush.bf16.msra.mxu0 0
        %4639 = vmatpush.bf16.msra.mxu0 0
        %4640 = vmatpush.bf16.msra.mxu0 0
        %4641 = vmatpush.bf16.msra.mxu0 0
        %4642 = vmatpush.bf16.msra.mxu0 0
        %4643 = vmatpush.bf16.msra.mxu0 0
        %4644 = vmatpush.bf16.msra.mxu0 0
        %4645 = vmatpush.bf16.msra.mxu0 %v4612
        %4646 = vmatmul.bf16.gmra.mxu0 %v4615
        %v4647 = vpop.f32.mrf.mxu0
        %v4648 = vadd.f32 0.0, %v4647
        %v4649 = vpop.f32.mrf.mxu0
        %v4650 = vadd.f32 0.0, %v4649
        %4651 = vmatmul.bf16.gmra.mxu0 %v4618
        %v4652 = vpop.f32.mrf.mxu0
        %v4653 = vadd.f32 0.0, %v4652
        %v4654 = vpop.f32.mrf.mxu0
        %v4655 = vadd.f32 0.0, %v4654
        %4656 = vmatmul.bf16.gmra.mxu0 %v4621
        %v4657 = vpop.f32.mrf.mxu0
        %v4658 = vadd.f32 0.0, %v4657
        %v4659 = vpop.f32.mrf.mxu0
        %v4660 = vadd.f32 0.0, %v4659
        %4661 = vmatmul.bf16.gmra.mxu0 %v4624
        %v4662 = vpop.f32.mrf.mxu0
        %v4663 = vadd.f32 0.0, %v4662
        %v4664 = vpop.f32.mrf.mxu0
        %v4665 = vadd.f32 0.0, %v4664
        %4666 = vmatmul.bf16.gmra.mxu0 %v4627
        %v4667 = vpop.f32.mrf.mxu0
        %v4668 = vadd.f32 0.0, %v4667
        %v4669 = vpop.f32.mrf.mxu0
        %v4670 = vadd.f32 0.0, %v4669
        %4671 = vmatmul.bf16.gmra.mxu0 %v4630
        %v4672 = vpop.f32.mrf.mxu0
        %v4673 = vadd.f32 0.0, %v4672
        %v4674 = vpop.f32.mrf.mxu0
        %v4675 = vadd.f32 0.0, %v4674
        %4676 = vmatmul.bf16.gmra.mxu0 %v4633
        %v4677 = vpop.f32.mrf.mxu0
        %v4678 = vadd.f32 0.0, %v4677
        %v4679 = vpop.f32.mrf.mxu0
        %v4680 = vadd.f32 0.0, %v4679
        %4681 = vmatmul.bf16.gmra.mxu0 %v4636
        %v4682 = vpop.f32.mrf.mxu0
        %v4683 = vadd.f32 0.0, %v4682
        %v4684 = vpop.f32.mrf.mxu0
        %v4685 = vadd.f32 0.0, %v4684
        %4686 = vdwg.mxu0
        %v4689 = vunpack.c.l.b16 %v4127
        %v4690 = vunpack.c.l.b16 %v4128
        %v4691 = vpack.c.b16 %v4690, %v4689
        %4693 = vxpose.xlu0.c.b16.start [1/8] %v4691, 128
        %4694 = vxpose.xlu0.c.b16.cont [2/8] 0, 128
        %4695 = vxpose.xlu0.c.b16.cont [3/8] 0, 128
        %4696 = vxpose.xlu0.c.b16.cont [4/8] 0, 128
        %4697 = vxpose.xlu0.c.b16.cont [5/8] 0, 128
        %4698 = vxpose.xlu0.c.b16.cont [6/8] 0, 128
        %4699 = vxpose.xlu0.c.b16.cont [7/8] 0, 128
        %4700 = vxpose.xlu0.c.b16.end [8/8] 0, 128
        %v4701 = vpop.trf.xlu0
        %v4702 = vpop.trf.xlu0
        %v4703 = vpop.trf.xlu0
        %v4704 = vpop.trf.xlu0
        %v4705 = vpop.trf.xlu0
        %v4706 = vpop.trf.xlu0
        %v4707 = vpop.trf.xlu0
        %v4708 = vpop.trf.xlu0
        %v4711 = vunpack.c.l.b16 %v4143
        %v4712 = vunpack.c.l.b16 %v4144
        %v4713 = vpack.c.b16 %v4712, %v4711
        %v4716 = vsel %vm4209, %v4701, 0
        %v4719 = vsel %vm4209, %v4702, 0
        %v4722 = vsel %vm4209, %v4703, 0
        %v4725 = vsel %vm4209, %v4704, 0
        %v4728 = vsel %vm4209, %v4705, 0
        %v4731 = vsel %vm4209, %v4706, 0
        %v4734 = vsel %vm4209, %v4707, 0
        %v4737 = vsel %vm4209, %v4708, 0
        %4739 = vmatpush.bf16.msra.mxu0 0
        %4740 = vmatpush.bf16.msra.mxu0 0
        %4741 = vmatpush.bf16.msra.mxu0 0
        %4742 = vmatpush.bf16.msra.mxu0 0
        %4743 = vmatpush.bf16.msra.mxu0 0
        %4744 = vmatpush.bf16.msra.mxu0 0
        %4745 = vmatpush.bf16.msra.mxu0 0
        %4746 = vmatpush.bf16.msra.mxu0 %v4713
        %4747 = vmatmul.bf16.gmra.mxu0 %v4716
        %v4748 = vpop.f32.mrf.mxu0
        %v4749 = vadd.f32 0.0, %v4748
        %v4750 = vpop.f32.mrf.mxu0
        %v4751 = vadd.f32 0.0, %v4750
        %4752 = vmatmul.bf16.gmra.mxu0 %v4719
        %v4753 = vpop.f32.mrf.mxu0
        %v4754 = vadd.f32 0.0, %v4753
        %v4755 = vpop.f32.mrf.mxu0
        %v4756 = vadd.f32 0.0, %v4755
        %4757 = vmatmul.bf16.gmra.mxu0 %v4722
        %v4758 = vpop.f32.mrf.mxu0
        %v4759 = vadd.f32 0.0, %v4758
        %v4760 = vpop.f32.mrf.mxu0
        %v4761 = vadd.f32 0.0, %v4760
        %4762 = vmatmul.bf16.gmra.mxu0 %v4725
        %v4763 = vpop.f32.mrf.mxu0
        %v4764 = vadd.f32 0.0, %v4763
        %v4765 = vpop.f32.mrf.mxu0
        %v4766 = vadd.f32 0.0, %v4765
        %4767 = vmatmul.bf16.gmra.mxu0 %v4728
        %v4768 = vpop.f32.mrf.mxu0
        %v4769 = vadd.f32 0.0, %v4768
        %v4770 = vpop.f32.mrf.mxu0
        %v4771 = vadd.f32 0.0, %v4770
        %4772 = vmatmul.bf16.gmra.mxu0 %v4731
        %v4773 = vpop.f32.mrf.mxu0
        %v4774 = vadd.f32 0.0, %v4773
        %v4775 = vpop.f32.mrf.mxu0
        %v4776 = vadd.f32 0.0, %v4775
        %4777 = vmatmul.bf16.gmra.mxu0 %v4734
        %v4778 = vpop.f32.mrf.mxu0
        %v4779 = vadd.f32 0.0, %v4778
        %v4780 = vpop.f32.mrf.mxu0
        %v4781 = vadd.f32 0.0, %v4780
        %4782 = vmatmul.bf16.gmra.mxu0 %v4737
        %v4783 = vpop.f32.mrf.mxu0
        %v4784 = vadd.f32 0.0, %v4783
        %v4785 = vpop.f32.mrf.mxu0
        %v4786 = vadd.f32 0.0, %v4785
        %4787 = vdwg.mxu0
        %v4790 = vunpack.c.l.b16 %v4129
        %v4791 = vunpack.c.l.b16 %v4130
        %v4792 = vpack.c.b16 %v4791, %v4790
        %4794 = vxpose.xlu0.c.b16.start [1/8] %v4792, 128
        %4795 = vxpose.xlu0.c.b16.cont [2/8] 0, 128
        %4796 = vxpose.xlu0.c.b16.cont [3/8] 0, 128
        %4797 = vxpose.xlu0.c.b16.cont [4/8] 0, 128
        %4798 = vxpose.xlu0.c.b16.cont [5/8] 0, 128
        %4799 = vxpose.xlu0.c.b16.cont [6/8] 0, 128
        %4800 = vxpose.xlu0.c.b16.cont [7/8] 0, 128
        %4801 = vxpose.xlu0.c.b16.end [8/8] 0, 128
        %v4802 = vpop.trf.xlu0
        %v4803 = vpop.trf.xlu0
        %v4804 = vpop.trf.xlu0
        %v4805 = vpop.trf.xlu0
        %v4806 = vpop.trf.xlu0
        %v4807 = vpop.trf.xlu0
        %v4808 = vpop.trf.xlu0
        %v4809 = vpop.trf.xlu0
        %v4812 = vunpack.c.l.b16 %v4145
        %v4813 = vunpack.c.l.b16 %v4146
        %v4814 = vpack.c.b16 %v4813, %v4812
        %v4817 = vsel %vm4209, %v4802, 0
        %v4820 = vsel %vm4209, %v4803, 0
        %v4823 = vsel %vm4209, %v4804, 0
        %v4826 = vsel %vm4209, %v4805, 0
        %v4829 = vsel %vm4209, %v4806, 0
        %v4832 = vsel %vm4209, %v4807, 0
        %v4835 = vsel %vm4209, %v4808, 0
        %v4838 = vsel %vm4209, %v4809, 0
        %4840 = vmatpush.bf16.msra.mxu0 0
        %4841 = vmatpush.bf16.msra.mxu0 0
        %4842 = vmatpush.bf16.msra.mxu0 0
        %4843 = vmatpush.bf16.msra.mxu0 0
        %4844 = vmatpush.bf16.msra.mxu0 0
        %4845 = vmatpush.bf16.msra.mxu0 0
        %4846 = vmatpush.bf16.msra.mxu0 0
        %4847 = vmatpush.bf16.msra.mxu0 %v4814
        %4848 = vmatmul.bf16.gmra.mxu0 %v4817
        %v4849 = vpop.f32.mrf.mxu0
        %v4850 = vadd.f32 0.0, %v4849
        %v4851 = vpop.f32.mrf.mxu0
        %v4852 = vadd.f32 0.0, %v4851
        %4853 = vmatmul.bf16.gmra.mxu0 %v4820
        %v4854 = vpop.f32.mrf.mxu0
        %v4855 = vadd.f32 0.0, %v4854
        %v4856 = vpop.f32.mrf.mxu0
        %v4857 = vadd.f32 0.0, %v4856
        %4858 = vmatmul.bf16.gmra.mxu0 %v4823
        %v4859 = vpop.f32.mrf.mxu0
        %v4860 = vadd.f32 0.0, %v4859
        %v4861 = vpop.f32.mrf.mxu0
        %v4862 = vadd.f32 0.0, %v4861
        %4863 = vmatmul.bf16.gmra.mxu0 %v4826
        %v4864 = vpop.f32.mrf.mxu0
        %v4865 = vadd.f32 0.0, %v4864
        %v4866 = vpop.f32.mrf.mxu0
        %v4867 = vadd.f32 0.0, %v4866
        %4868 = vmatmul.bf16.gmra.mxu0 %v4829
        %v4869 = vpop.f32.mrf.mxu0
        %v4870 = vadd.f32 0.0, %v4869
        %v4871 = vpop.f32.mrf.mxu0
        %v4872 = vadd.f32 0.0, %v4871
        %4873 = vmatmul.bf16.gmra.mxu0 %v4832
        %v4874 = vpop.f32.mrf.mxu0
        %v4875 = vadd.f32 0.0, %v4874
        %v4876 = vpop.f32.mrf.mxu0
        %v4877 = vadd.f32 0.0, %v4876
        %4878 = vmatmul.bf16.gmra.mxu0 %v4835
        %v4879 = vpop.f32.mrf.mxu0
        %v4880 = vadd.f32 0.0, %v4879
        %v4881 = vpop.f32.mrf.mxu0
        %v4882 = vadd.f32 0.0, %v4881
        %4883 = vmatmul.bf16.gmra.mxu0 %v4838
        %v4884 = vpop.f32.mrf.mxu0
        %v4885 = vadd.f32 0.0, %v4884
        %v4886 = vpop.f32.mrf.mxu0
        %v4887 = vadd.f32 0.0, %v4886
        %4888 = vdwg.mxu0
        %v4891 = vunpack.c.l.b16 %v4131
        %v4892 = vunpack.c.l.b16 %v4132
        %v4893 = vpack.c.b16 %v4892, %v4891
        %4895 = vxpose.xlu0.c.b16.start [1/8] %v4893, 128
        %4896 = vxpose.xlu0.c.b16.cont [2/8] 0, 128
        %4897 = vxpose.xlu0.c.b16.cont [3/8] 0, 128
        %4898 = vxpose.xlu0.c.b16.cont [4/8] 0, 128
        %4899 = vxpose.xlu0.c.b16.cont [5/8] 0, 128
        %4900 = vxpose.xlu0.c.b16.cont [6/8] 0, 128
        %4901 = vxpose.xlu0.c.b16.cont [7/8] 0, 128
        %4902 = vxpose.xlu0.c.b16.end [8/8] 0, 128
        %v4903 = vpop.trf.xlu0
        %v4904 = vpop.trf.xlu0
        %v4905 = vpop.trf.xlu0
        %v4906 = vpop.trf.xlu0
        %v4907 = vpop.trf.xlu0
        %v4908 = vpop.trf.xlu0
        %v4909 = vpop.trf.xlu0
        %v4910 = vpop.trf.xlu0
        %v4913 = vunpack.c.l.b16 %v4147
        %v4914 = vunpack.c.l.b16 %v4148
        %v4915 = vpack.c.b16 %v4914, %v4913
        %v4918 = vsel %vm4209, %v4903, 0
        %v4921 = vsel %vm4209, %v4904, 0
        %v4924 = vsel %vm4209, %v4905, 0
        %v4927 = vsel %vm4209, %v4906, 0
        %v4930 = vsel %vm4209, %v4907, 0
        %v4933 = vsel %vm4209, %v4908, 0
        %v4936 = vsel %vm4209, %v4909, 0
        %v4939 = vsel %vm4209, %v4910, 0
        %4941 = vmatpush.bf16.msra.mxu0 0
        %4942 = vmatpush.bf16.msra.mxu0 0
        %4943 = vmatpush.bf16.msra.mxu0 0
        %4944 = vmatpush.bf16.msra.mxu0 0
        %4945 = vmatpush.bf16.msra.mxu0 0
        %4946 = vmatpush.bf16.msra.mxu0 0
        %4947 = vmatpush.bf16.msra.mxu0 0
        %4948 = vmatpush.bf16.msra.mxu0 %v4915
        %4949 = vmatmul.bf16.gmra.mxu0 %v4918
        %v4950 = vpop.f32.mrf.mxu0
        %v4951 = vadd.f32 0.0, %v4950
        %v4952 = vpop.f32.mrf.mxu0
        %v4953 = vadd.f32 0.0, %v4952
        %4954 = vmatmul.bf16.gmra.mxu0 %v4921
        %v4955 = vpop.f32.mrf.mxu0
        %v4956 = vadd.f32 0.0, %v4955
        %v4957 = vpop.f32.mrf.mxu0
        %v4958 = vadd.f32 0.0, %v4957
        %4959 = vmatmul.bf16.gmra.mxu0 %v4924
        %v4960 = vpop.f32.mrf.mxu0
        %v4961 = vadd.f32 0.0, %v4960
        %v4962 = vpop.f32.mrf.mxu0
        %v4963 = vadd.f32 0.0, %v4962
        %4964 = vmatmul.bf16.gmra.mxu0 %v4927
        %v4965 = vpop.f32.mrf.mxu0
        %v4966 = vadd.f32 0.0, %v4965
        %v4967 = vpop.f32.mrf.mxu0
        %v4968 = vadd.f32 0.0, %v4967
        %4969 = vmatmul.bf16.gmra.mxu0 %v4930
        %v4970 = vpop.f32.mrf.mxu0
        %v4971 = vadd.f32 0.0, %v4970
        %v4972 = vpop.f32.mrf.mxu0
        %v4973 = vadd.f32 0.0, %v4972
        %4974 = vmatmul.bf16.gmra.mxu0 %v4933
        %v4975 = vpop.f32.mrf.mxu0
        %v4976 = vadd.f32 0.0, %v4975
        %v4977 = vpop.f32.mrf.mxu0
        %v4978 = vadd.f32 0.0, %v4977
        %4979 = vmatmul.bf16.gmra.mxu0 %v4936
        %v4980 = vpop.f32.mrf.mxu0
        %v4981 = vadd.f32 0.0, %v4980
        %v4982 = vpop.f32.mrf.mxu0
        %v4983 = vadd.f32 0.0, %v4982
        %4984 = vmatmul.bf16.gmra.mxu0 %v4939
        %v4985 = vpop.f32.mrf.mxu0
        %v4986 = vadd.f32 0.0, %v4985
        %v4987 = vpop.f32.mrf.mxu0
        %v4988 = vadd.f32 0.0, %v4987
        %4989 = vdwg.mxu0
        %v4990 = vmul.f32 %v4244, %v2213
        %v4991 = vmul.f32 %v4246, %v2214
        %v4992 = vmul.f32 %v4249, %v2215
        %v4993 = vmul.f32 %v4251, %v2216
        %v4994 = vmul.f32 %v4254, %v2217
        %v4995 = vmul.f32 %v4256, %v2218
        %v4996 = vmul.f32 %v4259, %v2219
        %v4997 = vmul.f32 %v4261, %v2220
        %v4998 = vmul.f32 %v4264, %v2221
        %v4999 = vmul.f32 %v4266, %v2222
        %v5000 = vmul.f32 %v4269, %v2223
        %v5001 = vmul.f32 %v4271, %v2224
        %v5002 = vmul.f32 %v4274, %v2225
        %v5003 = vmul.f32 %v4276, %v2226
        %v5004 = vmul.f32 %v4279, %v2227
        %v5005 = vmul.f32 %v4281, %v2228
        %v5006 = vmul.f32 %v4345, %v2213
        %v5007 = vmul.f32 %v4347, %v2214
        %v5008 = vmul.f32 %v4350, %v2215
        %v5009 = vmul.f32 %v4352, %v2216
        %v5010 = vmul.f32 %v4355, %v2217
        %v5011 = vmul.f32 %v4357, %v2218
        %v5012 = vmul.f32 %v4360, %v2219
        %v5013 = vmul.f32 %v4362, %v2220
        %v5014 = vmul.f32 %v4365, %v2221
        %v5015 = vmul.f32 %v4367, %v2222
        %v5016 = vmul.f32 %v4370, %v2223
        %v5017 = vmul.f32 %v4372, %v2224
        %v5018 = vmul.f32 %v4375, %v2225
        %v5019 = vmul.f32 %v4377, %v2226
        %v5020 = vmul.f32 %v4380, %v2227
        %v5021 = vmul.f32 %v4382, %v2228
        %v5022 = vmul.f32 %v4446, %v2213
        %v5023 = vmul.f32 %v4448, %v2214
        %v5024 = vmul.f32 %v4451, %v2215
        %v5025 = vmul.f32 %v4453, %v2216
        %v5026 = vmul.f32 %v4456, %v2217
        %v5027 = vmul.f32 %v4458, %v2218
        %v5028 = vmul.f32 %v4461, %v2219
        %v5029 = vmul.f32 %v4463, %v2220
        %v5030 = vmul.f32 %v4466, %v2221
        %v5031 = vmul.f32 %v4468, %v2222
        %v5032 = vmul.f32 %v4471, %v2223
        %v5033 = vmul.f32 %v4473, %v2224
        %v5034 = vmul.f32 %v4476, %v2225
        %v5035 = vmul.f32 %v4478, %v2226
        %v5036 = vmul.f32 %v4481, %v2227
        %v5037 = vmul.f32 %v4483, %v2228
        %v5038 = vmul.f32 %v4547, %v2213
        %v5039 = vmul.f32 %v4549, %v2214
        %v5040 = vmul.f32 %v4552, %v2215
        %v5041 = vmul.f32 %v4554, %v2216
        %v5042 = vmul.f32 %v4557, %v2217
        %v5043 = vmul.f32 %v4559, %v2218
        %v5044 = vmul.f32 %v4562, %v2219
        %v5045 = vmul.f32 %v4564, %v2220
        %v5046 = vmul.f32 %v4567, %v2221
        %v5047 = vmul.f32 %v4569, %v2222
        %v5048 = vmul.f32 %v4572, %v2223
        %v5049 = vmul.f32 %v4574, %v2224
        %v5050 = vmul.f32 %v4577, %v2225
        %v5051 = vmul.f32 %v4579, %v2226
        %v5052 = vmul.f32 %v4582, %v2227
        %v5053 = vmul.f32 %v4584, %v2228
        %v5054 = vmul.f32 %v4648, %v2213
        %v5055 = vmul.f32 %v4650, %v2214
        %v5056 = vmul.f32 %v4653, %v2215
        %v5057 = vmul.f32 %v4655, %v2216
        %v5058 = vmul.f32 %v4658, %v2217
        %v5059 = vmul.f32 %v4660, %v2218
        %v5060 = vmul.f32 %v4663, %v2219
        %v5061 = vmul.f32 %v4665, %v2220
        %v5062 = vmul.f32 %v4668, %v2221
        %v5063 = vmul.f32 %v4670, %v2222
        %v5064 = vmul.f32 %v4673, %v2223
        %v5065 = vmul.f32 %v4675, %v2224
        %v5066 = vmul.f32 %v4678, %v2225
        %v5067 = vmul.f32 %v4680, %v2226
        %v5068 = vmul.f32 %v4683, %v2227
        %v5069 = vmul.f32 %v4685, %v2228
        %v5070 = vmul.f32 %v4749, %v2213
        %v5071 = vmul.f32 %v4751, %v2214
        %v5072 = vmul.f32 %v4754, %v2215
        %v5073 = vmul.f32 %v4756, %v2216
        %v5074 = vmul.f32 %v4759, %v2217
        %v5075 = vmul.f32 %v4761, %v2218
        %v5076 = vmul.f32 %v4764, %v2219
        %v5077 = vmul.f32 %v4766, %v2220
        %v5078 = vmul.f32 %v4769, %v2221
        %v5079 = vmul.f32 %v4771, %v2222
        %v5080 = vmul.f32 %v4774, %v2223
        %v5081 = vmul.f32 %v4776, %v2224
        %v5082 = vmul.f32 %v4779, %v2225
        %v5083 = vmul.f32 %v4781, %v2226
        %v5084 = vmul.f32 %v4784, %v2227
        %v5085 = vmul.f32 %v4786, %v2228
        %v5086 = vmul.f32 %v4850, %v2213
        %v5087 = vmul.f32 %v4852, %v2214
        %v5088 = vmul.f32 %v4855, %v2215
        %v5089 = vmul.f32 %v4857, %v2216
        %v5090 = vmul.f32 %v4860, %v2217
        %v5091 = vmul.f32 %v4862, %v2218
        %v5092 = vmul.f32 %v4865, %v2219
        %v5093 = vmul.f32 %v4867, %v2220
        %v5094 = vmul.f32 %v4870, %v2221
        %v5095 = vmul.f32 %v4872, %v2222
        %v5096 = vmul.f32 %v4875, %v2223
        %v5097 = vmul.f32 %v4877, %v2224
        %v5098 = vmul.f32 %v4880, %v2225
        %v5099 = vmul.f32 %v4882, %v2226
        %v5100 = vmul.f32 %v4885, %v2227
        %v5101 = vmul.f32 %v4887, %v2228
        %v5102 = vmul.f32 %v4951, %v2213
        %v5103 = vmul.f32 %v4953, %v2214
        %v5104 = vmul.f32 %v4956, %v2215
        %v5105 = vmul.f32 %v4958, %v2216
        %v5106 = vmul.f32 %v4961, %v2217
        %v5107 = vmul.f32 %v4963, %v2218
        %v5108 = vmul.f32 %v4966, %v2219
        %v5109 = vmul.f32 %v4968, %v2220
        %v5110 = vmul.f32 %v4971, %v2221
        %v5111 = vmul.f32 %v4973, %v2222
        %v5112 = vmul.f32 %v4976, %v2223
        %v5113 = vmul.f32 %v4978, %v2224
        %v5114 = vmul.f32 %v4981, %v2225
        %v5115 = vmul.f32 %v4983, %v2226
        %v5116 = vmul.f32 %v4986, %v2227
        %v5117 = vmul.f32 %v4988, %v2228
        %v5118 = vpack.c.bf16 %v4990, %v4990
        %v5119 = vpack.c.bf16 %v4991, %v4991
        %v5120 = vpack.c.bf16 %v4992, %v4992
        %v5121 = vpack.c.bf16 %v4993, %v4993
        %v5122 = vpack.c.bf16 %v4994, %v4994
        %v5123 = vpack.c.bf16 %v4995, %v4995
        %v5124 = vpack.c.bf16 %v4996, %v4996
        %v5125 = vpack.c.bf16 %v4997, %v4997
        %v5126 = vpack.c.bf16 %v4998, %v4998
        %v5127 = vpack.c.bf16 %v4999, %v4999
        %v5128 = vpack.c.bf16 %v5000, %v5000
        %v5129 = vpack.c.bf16 %v5001, %v5001
        %v5130 = vpack.c.bf16 %v5002, %v5002
        %v5131 = vpack.c.bf16 %v5003, %v5003
        %v5132 = vpack.c.bf16 %v5004, %v5004
        %v5133 = vpack.c.bf16 %v5005, %v5005
        %v5134 = vpack.c.bf16 %v5006, %v5006
        %v5135 = vpack.c.bf16 %v5007, %v5007
        %v5136 = vpack.c.bf16 %v5008, %v5008
        %v5137 = vpack.c.bf16 %v5009, %v5009
        %v5138 = vpack.c.bf16 %v5010, %v5010
        %v5139 = vpack.c.bf16 %v5011, %v5011
        %v5140 = vpack.c.bf16 %v5012, %v5012
        %v5141 = vpack.c.bf16 %v5013, %v5013
        %v5142 = vpack.c.bf16 %v5014, %v5014
        %v5143 = vpack.c.bf16 %v5015, %v5015
        %v5144 = vpack.c.bf16 %v5016, %v5016
        %v5145 = vpack.c.bf16 %v5017, %v5017
        %v5146 = vpack.c.bf16 %v5018, %v5018
        %v5147 = vpack.c.bf16 %v5019, %v5019
        %v5148 = vpack.c.bf16 %v5020, %v5020
        %v5149 = vpack.c.bf16 %v5021, %v5021
        %v5150 = vpack.c.bf16 %v5022, %v5022
        %v5151 = vpack.c.bf16 %v5023, %v5023
        %v5152 = vpack.c.bf16 %v5024, %v5024
        %v5153 = vpack.c.bf16 %v5025, %v5025
        %v5154 = vpack.c.bf16 %v5026, %v5026
        %v5155 = vpack.c.bf16 %v5027, %v5027
        %v5156 = vpack.c.bf16 %v5028, %v5028
        %v5157 = vpack.c.bf16 %v5029, %v5029
        %v5158 = vpack.c.bf16 %v5030, %v5030
        %v5159 = vpack.c.bf16 %v5031, %v5031
        %v5160 = vpack.c.bf16 %v5032, %v5032
        %v5161 = vpack.c.bf16 %v5033, %v5033
        %v5162 = vpack.c.bf16 %v5034, %v5034
        %v5163 = vpack.c.bf16 %v5035, %v5035
        %v5164 = vpack.c.bf16 %v5036, %v5036
        %v5165 = vpack.c.bf16 %v5037, %v5037
        %v5166 = vpack.c.bf16 %v5038, %v5038
        %v5167 = vpack.c.bf16 %v5039, %v5039
        %v5168 = vpack.c.bf16 %v5040, %v5040
        %v5169 = vpack.c.bf16 %v5041, %v5041
        %v5170 = vpack.c.bf16 %v5042, %v5042
        %v5171 = vpack.c.bf16 %v5043, %v5043
        %v5172 = vpack.c.bf16 %v5044, %v5044
        %v5173 = vpack.c.bf16 %v5045, %v5045
        %v5174 = vpack.c.bf16 %v5046, %v5046
        %v5175 = vpack.c.bf16 %v5047, %v5047
        %v5176 = vpack.c.bf16 %v5048, %v5048
        %v5177 = vpack.c.bf16 %v5049, %v5049
        %v5178 = vpack.c.bf16 %v5050, %v5050
        %v5179 = vpack.c.bf16 %v5051, %v5051
        %v5180 = vpack.c.bf16 %v5052, %v5052
        %v5181 = vpack.c.bf16 %v5053, %v5053
        %v5182 = vpack.c.bf16 %v5054, %v5054
        %v5183 = vpack.c.bf16 %v5055, %v5055
        %v5184 = vpack.c.bf16 %v5056, %v5056
        %v5185 = vpack.c.bf16 %v5057, %v5057
        %v5186 = vpack.c.bf16 %v5058, %v5058
        %v5187 = vpack.c.bf16 %v5059, %v5059
        %v5188 = vpack.c.bf16 %v5060, %v5060
        %v5189 = vpack.c.bf16 %v5061, %v5061
        %v5190 = vpack.c.bf16 %v5062, %v5062
        %v5191 = vpack.c.bf16 %v5063, %v5063
        %v5192 = vpack.c.bf16 %v5064, %v5064
        %v5193 = vpack.c.bf16 %v5065, %v5065
        %v5194 = vpack.c.bf16 %v5066, %v5066
        %v5195 = vpack.c.bf16 %v5067, %v5067
        %v5196 = vpack.c.bf16 %v5068, %v5068
        %v5197 = vpack.c.bf16 %v5069, %v5069
        %v5198 = vpack.c.bf16 %v5070, %v5070
        %v5199 = vpack.c.bf16 %v5071, %v5071
        %v5200 = vpack.c.bf16 %v5072, %v5072
        %v5201 = vpack.c.bf16 %v5073, %v5073
        %v5202 = vpack.c.bf16 %v5074, %v5074
        %v5203 = vpack.c.bf16 %v5075, %v5075
        %v5204 = vpack.c.bf16 %v5076, %v5076
        %v5205 = vpack.c.bf16 %v5077, %v5077
        %v5206 = vpack.c.bf16 %v5078, %v5078
        %v5207 = vpack.c.bf16 %v5079, %v5079
        %v5208 = vpack.c.bf16 %v5080, %v5080
        %v5209 = vpack.c.bf16 %v5081, %v5081
        %v5210 = vpack.c.bf16 %v5082, %v5082
        %v5211 = vpack.c.bf16 %v5083, %v5083
        %v5212 = vpack.c.bf16 %v5084, %v5084
        %v5213 = vpack.c.bf16 %v5085, %v5085
        %v5214 = vpack.c.bf16 %v5086, %v5086
        %v5215 = vpack.c.bf16 %v5087, %v5087
        %v5216 = vpack.c.bf16 %v5088, %v5088
        %v5217 = vpack.c.bf16 %v5089, %v5089
        %v5218 = vpack.c.bf16 %v5090, %v5090
        %v5219 = vpack.c.bf16 %v5091, %v5091
        %v5220 = vpack.c.bf16 %v5092, %v5092
        %v5221 = vpack.c.bf16 %v5093, %v5093
        %v5222 = vpack.c.bf16 %v5094, %v5094
        %v5223 = vpack.c.bf16 %v5095, %v5095
        %v5224 = vpack.c.bf16 %v5096, %v5096
        %v5225 = vpack.c.bf16 %v5097, %v5097
        %v5226 = vpack.c.bf16 %v5098, %v5098
        %v5227 = vpack.c.bf16 %v5099, %v5099
        %v5228 = vpack.c.bf16 %v5100, %v5100
        %v5229 = vpack.c.bf16 %v5101, %v5101
        %v5230 = vpack.c.bf16 %v5102, %v5102
        %v5231 = vpack.c.bf16 %v5103, %v5103
        %v5232 = vpack.c.bf16 %v5104, %v5104
        %v5233 = vpack.c.bf16 %v5105, %v5105
        %v5234 = vpack.c.bf16 %v5106, %v5106
        %v5235 = vpack.c.bf16 %v5107, %v5107
        %v5236 = vpack.c.bf16 %v5108, %v5108
        %v5237 = vpack.c.bf16 %v5109, %v5109
        %v5238 = vpack.c.bf16 %v5110, %v5110
        %v5239 = vpack.c.bf16 %v5111, %v5111
        %v5240 = vpack.c.bf16 %v5112, %v5112
        %v5241 = vpack.c.bf16 %v5113, %v5113
        %v5242 = vpack.c.bf16 %v5114, %v5114
        %v5243 = vpack.c.bf16 %v5115, %v5115
        %v5244 = vpack.c.bf16 %v5116, %v5116
        %v5245 = vpack.c.bf16 %v5117, %v5117
        %v5250 = vunpack.c.l.b16 %v4149
        %v5251 = vunpack.c.l.b16 %v4150
        %v5252 = vunpack.c.l.b16 %v4151
        %v5253 = vunpack.c.l.b16 %v4152
        %v5254 = vpack.c.b16 %v5251, %v5250
        %v5255 = vpack.c.b16 %v5253, %v5252
        %v5274 = vunpack.c.l.b16 %v5118
        %v5275 = vunpack.c.l.b16 %v5119
        %v5276 = vunpack.c.l.b16 %v5120
        %v5277 = vunpack.c.l.b16 %v5121
        %v5278 = vunpack.c.l.b16 %v5122
        %v5279 = vunpack.c.l.b16 %v5123
        %v5280 = vunpack.c.l.b16 %v5124
        %v5281 = vunpack.c.l.b16 %v5125
        %v5282 = vunpack.c.l.b16 %v5126
        %v5283 = vunpack.c.l.b16 %v5127
        %v5284 = vunpack.c.l.b16 %v5128
        %v5285 = vunpack.c.l.b16 %v5129
        %v5286 = vunpack.c.l.b16 %v5130
        %v5287 = vunpack.c.l.b16 %v5131
        %v5288 = vunpack.c.l.b16 %v5132
        %v5289 = vunpack.c.l.b16 %v5133
        %v5290 = vpack.c.b16 %v5275, %v5274
        %v5291 = vpack.c.b16 %v5277, %v5276
        %v5292 = vpack.c.b16 %v5279, %v5278
        %v5293 = vpack.c.b16 %v5281, %v5280
        %v5294 = vpack.c.b16 %v5283, %v5282
        %v5295 = vpack.c.b16 %v5285, %v5284
        %v5296 = vpack.c.b16 %v5287, %v5286
        %v5297 = vpack.c.b16 %v5289, %v5288
        %5306 = vmatpush.bf16.msra.mxu0 %v5297
        %5307 = vmatpush.bf16.msra.mxu0 %v5296
        %5308 = vmatpush.bf16.msra.mxu0 %v5295
        %5309 = vmatpush.bf16.msra.mxu0 %v5294
        %5310 = vmatpush.bf16.msra.mxu0 %v5293
        %5311 = vmatpush.bf16.msra.mxu0 %v5292
        %5312 = vmatpush.bf16.msra.mxu0 %v5291
        %5313 = vmatpush.bf16.msra.mxu0 %v5290
        %5314 = vmatmul.bf16.gmra.mxu0 %v5254
        %v5315 = vpop.f32.mrf.mxu0
        %v5316 = vadd.f32 0.0, %v5315
        %v5317 = vpop.f32.mrf.mxu0
        %v5318 = vadd.f32 0.0, %v5317
        %5319 = vmatmul.bf16.gmra.mxu0 %v5255
        %v5320 = vpop.f32.mrf.mxu0
        %v5321 = vadd.f32 0.0, %v5320
        %v5322 = vpop.f32.mrf.mxu0
        %v5323 = vadd.f32 0.0, %v5322
        %5324 = vdwg.mxu0
        %v5329 = vunpack.c.l.b16 %v4153
        %v5330 = vunpack.c.l.b16 %v4154
        %v5331 = vunpack.c.l.b16 %v4155
        %v5332 = vunpack.c.l.b16 %v4156
        %v5333 = vpack.c.b16 %v5330, %v5329
        %v5334 = vpack.c.b16 %v5332, %v5331
        %v5353 = vunpack.c.l.b16 %v5134
        %v5354 = vunpack.c.l.b16 %v5135
        %v5355 = vunpack.c.l.b16 %v5136
        %v5356 = vunpack.c.l.b16 %v5137
        %v5357 = vunpack.c.l.b16 %v5138
        %v5358 = vunpack.c.l.b16 %v5139
        %v5359 = vunpack.c.l.b16 %v5140
        %v5360 = vunpack.c.l.b16 %v5141
        %v5361 = vunpack.c.l.b16 %v5142
        %v5362 = vunpack.c.l.b16 %v5143
        %v5363 = vunpack.c.l.b16 %v5144
        %v5364 = vunpack.c.l.b16 %v5145
        %v5365 = vunpack.c.l.b16 %v5146
        %v5366 = vunpack.c.l.b16 %v5147
        %v5367 = vunpack.c.l.b16 %v5148
        %v5368 = vunpack.c.l.b16 %v5149
        %v5369 = vpack.c.b16 %v5354, %v5353
        %v5370 = vpack.c.b16 %v5356, %v5355
        %v5371 = vpack.c.b16 %v5358, %v5357
        %v5372 = vpack.c.b16 %v5360, %v5359
        %v5373 = vpack.c.b16 %v5362, %v5361
        %v5374 = vpack.c.b16 %v5364, %v5363
        %v5375 = vpack.c.b16 %v5366, %v5365
        %v5376 = vpack.c.b16 %v5368, %v5367
        %5385 = vmatpush.bf16.msra.mxu0 %v5376
        %5386 = vmatpush.bf16.msra.mxu0 %v5375
        %5387 = vmatpush.bf16.msra.mxu0 %v5374
        %5388 = vmatpush.bf16.msra.mxu0 %v5373
        %5389 = vmatpush.bf16.msra.mxu0 %v5372
        %5390 = vmatpush.bf16.msra.mxu0 %v5371
        %5391 = vmatpush.bf16.msra.mxu0 %v5370
        %5392 = vmatpush.bf16.msra.mxu0 %v5369
        %5393 = vmatmul.bf16.gmra.mxu0 %v5333
        %v5394 = vpop.f32.mrf.mxu0
        %v5395 = vadd.f32 0.0, %v5394
        %v5396 = vpop.f32.mrf.mxu0
        %v5397 = vadd.f32 0.0, %v5396
        %5398 = vmatmul.bf16.gmra.mxu0 %v5334
        %v5399 = vpop.f32.mrf.mxu0
        %v5400 = vadd.f32 0.0, %v5399
        %v5401 = vpop.f32.mrf.mxu0
        %v5402 = vadd.f32 0.0, %v5401
        %5403 = vdwg.mxu0
        %v5408 = vunpack.c.l.b16 %v4157
        %v5409 = vunpack.c.l.b16 %v4158
        %v5410 = vunpack.c.l.b16 %v4159
        %v5411 = vunpack.c.l.b16 %v4160
        %v5412 = vpack.c.b16 %v5409, %v5408
        %v5413 = vpack.c.b16 %v5411, %v5410
        %v5432 = vunpack.c.l.b16 %v5150
        %v5433 = vunpack.c.l.b16 %v5151
        %v5434 = vunpack.c.l.b16 %v5152
        %v5435 = vunpack.c.l.b16 %v5153
        %v5436 = vunpack.c.l.b16 %v5154
        %v5437 = vunpack.c.l.b16 %v5155
        %v5438 = vunpack.c.l.b16 %v5156
        %v5439 = vunpack.c.l.b16 %v5157
        %v5440 = vunpack.c.l.b16 %v5158
        %v5441 = vunpack.c.l.b16 %v5159
        %v5442 = vunpack.c.l.b16 %v5160
        %v5443 = vunpack.c.l.b16 %v5161
        %v5444 = vunpack.c.l.b16 %v5162
        %v5445 = vunpack.c.l.b16 %v5163
        %v5446 = vunpack.c.l.b16 %v5164
        %v5447 = vunpack.c.l.b16 %v5165
        %v5448 = vpack.c.b16 %v5433, %v5432
        %v5449 = vpack.c.b16 %v5435, %v5434
        %v5450 = vpack.c.b16 %v5437, %v5436
        %v5451 = vpack.c.b16 %v5439, %v5438
        %v5452 = vpack.c.b16 %v5441, %v5440
        %v5453 = vpack.c.b16 %v5443, %v5442
        %v5454 = vpack.c.b16 %v5445, %v5444
        %v5455 = vpack.c.b16 %v5447, %v5446
        %5464 = vmatpush.bf16.msra.mxu0 %v5455
        %5465 = vmatpush.bf16.msra.mxu0 %v5454
        %5466 = vmatpush.bf16.msra.mxu0 %v5453
        %5467 = vmatpush.bf16.msra.mxu0 %v5452
        %5468 = vmatpush.bf16.msra.mxu0 %v5451
        %5469 = vmatpush.bf16.msra.mxu0 %v5450
        %5470 = vmatpush.bf16.msra.mxu0 %v5449
        %5471 = vmatpush.bf16.msra.mxu0 %v5448
        %5472 = vmatmul.bf16.gmra.mxu0 %v5412
        %v5473 = vpop.f32.mrf.mxu0
        %v5474 = vadd.f32 0.0, %v5473
        %v5475 = vpop.f32.mrf.mxu0
        %v5476 = vadd.f32 0.0, %v5475
        %5477 = vmatmul.bf16.gmra.mxu0 %v5413
        %v5478 = vpop.f32.mrf.mxu0
        %v5479 = vadd.f32 0.0, %v5478
        %v5480 = vpop.f32.mrf.mxu0
        %v5481 = vadd.f32 0.0, %v5480
        %5482 = vdwg.mxu0
        %v5487 = vunpack.c.l.b16 %v4161
        %v5488 = vunpack.c.l.b16 %v4162
        %v5489 = vunpack.c.l.b16 %v4163
        %v5490 = vunpack.c.l.b16 %v4164
        %v5491 = vpack.c.b16 %v5488, %v5487
        %v5492 = vpack.c.b16 %v5490, %v5489
        %v5511 = vunpack.c.l.b16 %v5166
        %v5512 = vunpack.c.l.b16 %v5167
        %v5513 = vunpack.c.l.b16 %v5168
        %v5514 = vunpack.c.l.b16 %v5169
        %v5515 = vunpack.c.l.b16 %v5170
        %v5516 = vunpack.c.l.b16 %v5171
        %v5517 = vunpack.c.l.b16 %v5172
        %v5518 = vunpack.c.l.b16 %v5173
        %v5519 = vunpack.c.l.b16 %v5174
        %v5520 = vunpack.c.l.b16 %v5175
        %v5521 = vunpack.c.l.b16 %v5176
        %v5522 = vunpack.c.l.b16 %v5177
        %v5523 = vunpack.c.l.b16 %v5178
        %v5524 = vunpack.c.l.b16 %v5179
        %v5525 = vunpack.c.l.b16 %v5180
        %v5526 = vunpack.c.l.b16 %v5181
        %v5527 = vpack.c.b16 %v5512, %v5511
        %v5528 = vpack.c.b16 %v5514, %v5513
        %v5529 = vpack.c.b16 %v5516, %v5515
        %v5530 = vpack.c.b16 %v5518, %v5517
        %v5531 = vpack.c.b16 %v5520, %v5519
        %v5532 = vpack.c.b16 %v5522, %v5521
        %v5533 = vpack.c.b16 %v5524, %v5523
        %v5534 = vpack.c.b16 %v5526, %v5525
        %5543 = vmatpush.bf16.msra.mxu0 %v5534
        %5544 = vmatpush.bf16.msra.mxu0 %v5533
        %5545 = vmatpush.bf16.msra.mxu0 %v5532
        %5546 = vmatpush.bf16.msra.mxu0 %v5531
        %5547 = vmatpush.bf16.msra.mxu0 %v5530
        %5548 = vmatpush.bf16.msra.mxu0 %v5529
        %5549 = vmatpush.bf16.msra.mxu0 %v5528
        %5550 = vmatpush.bf16.msra.mxu0 %v5527
        %5551 = vmatmul.bf16.gmra.mxu0 %v5491
        %v5552 = vpop.f32.mrf.mxu0
        %v5553 = vadd.f32 0.0, %v5552
        %v5554 = vpop.f32.mrf.mxu0
        %v5555 = vadd.f32 0.0, %v5554
        %5556 = vmatmul.bf16.gmra.mxu0 %v5492
        %v5557 = vpop.f32.mrf.mxu0
        %v5558 = vadd.f32 0.0, %v5557
        %v5559 = vpop.f32.mrf.mxu0
        %v5560 = vadd.f32 0.0, %v5559
        %5561 = vdwg.mxu0
        %v5566 = vunpack.c.l.b16 %v4165
        %v5567 = vunpack.c.l.b16 %v4166
        %v5568 = vunpack.c.l.b16 %v4167
        %v5569 = vunpack.c.l.b16 %v4168
        %v5570 = vpack.c.b16 %v5567, %v5566
        %v5571 = vpack.c.b16 %v5569, %v5568
        %v5590 = vunpack.c.l.b16 %v5182
        %v5591 = vunpack.c.l.b16 %v5183
        %v5592 = vunpack.c.l.b16 %v5184
        %v5593 = vunpack.c.l.b16 %v5185
        %v5594 = vunpack.c.l.b16 %v5186
        %v5595 = vunpack.c.l.b16 %v5187
        %v5596 = vunpack.c.l.b16 %v5188
        %v5597 = vunpack.c.l.b16 %v5189
        %v5598 = vunpack.c.l.b16 %v5190
        %v5599 = vunpack.c.l.b16 %v5191
        %v5600 = vunpack.c.l.b16 %v5192
        %v5601 = vunpack.c.l.b16 %v5193
        %v5602 = vunpack.c.l.b16 %v5194
        %v5603 = vunpack.c.l.b16 %v5195
        %v5604 = vunpack.c.l.b16 %v5196
        %v5605 = vunpack.c.l.b16 %v5197
        %v5606 = vpack.c.b16 %v5591, %v5590
        %v5607 = vpack.c.b16 %v5593, %v5592
        %v5608 = vpack.c.b16 %v5595, %v5594
        %v5609 = vpack.c.b16 %v5597, %v5596
        %v5610 = vpack.c.b16 %v5599, %v5598
        %v5611 = vpack.c.b16 %v5601, %v5600
        %v5612 = vpack.c.b16 %v5603, %v5602
        %v5613 = vpack.c.b16 %v5605, %v5604
        %5622 = vmatpush.bf16.msra.mxu0 %v5613
        %5623 = vmatpush.bf16.msra.mxu0 %v5612
        %5624 = vmatpush.bf16.msra.mxu0 %v5611
        %5625 = vmatpush.bf16.msra.mxu0 %v5610
        %5626 = vmatpush.bf16.msra.mxu0 %v5609
        %5627 = vmatpush.bf16.msra.mxu0 %v5608
        %5628 = vmatpush.bf16.msra.mxu0 %v5607
        %5629 = vmatpush.bf16.msra.mxu0 %v5606
        %5630 = vmatmul.bf16.gmra.mxu0 %v5570
        %v5631 = vpop.f32.mrf.mxu0
        %v5632 = vadd.f32 0.0, %v5631
        %v5633 = vpop.f32.mrf.mxu0
        %v5634 = vadd.f32 0.0, %v5633
        %5635 = vmatmul.bf16.gmra.mxu0 %v5571
        %v5636 = vpop.f32.mrf.mxu0
        %v5637 = vadd.f32 0.0, %v5636
        %v5638 = vpop.f32.mrf.mxu0
        %v5639 = vadd.f32 0.0, %v5638
        %5640 = vdwg.mxu0
        %v5645 = vunpack.c.l.b16 %v4169
        %v5646 = vunpack.c.l.b16 %v4170
        %v5647 = vunpack.c.l.b16 %v4171
        %v5648 = vunpack.c.l.b16 %v4172
        %v5649 = vpack.c.b16 %v5646, %v5645
        %v5650 = vpack.c.b16 %v5648, %v5647
        %v5669 = vunpack.c.l.b16 %v5198
        %v5670 = vunpack.c.l.b16 %v5199
        %v5671 = vunpack.c.l.b16 %v5200
        %v5672 = vunpack.c.l.b16 %v5201
        %v5673 = vunpack.c.l.b16 %v5202
        %v5674 = vunpack.c.l.b16 %v5203
        %v5675 = vunpack.c.l.b16 %v5204
        %v5676 = vunpack.c.l.b16 %v5205
        %v5677 = vunpack.c.l.b16 %v5206
        %v5678 = vunpack.c.l.b16 %v5207
        %v5679 = vunpack.c.l.b16 %v5208
        %v5680 = vunpack.c.l.b16 %v5209
        %v5681 = vunpack.c.l.b16 %v5210
        %v5682 = vunpack.c.l.b16 %v5211
        %v5683 = vunpack.c.l.b16 %v5212
        %v5684 = vunpack.c.l.b16 %v5213
        %v5685 = vpack.c.b16 %v5670, %v5669
        %v5686 = vpack.c.b16 %v5672, %v5671
        %v5687 = vpack.c.b16 %v5674, %v5673
        %v5688 = vpack.c.b16 %v5676, %v5675
        %v5689 = vpack.c.b16 %v5678, %v5677
        %v5690 = vpack.c.b16 %v5680, %v5679
        %v5691 = vpack.c.b16 %v5682, %v5681
        %v5692 = vpack.c.b16 %v5684, %v5683
        %5701 = vmatpush.bf16.msra.mxu0 %v5692
        %5702 = vmatpush.bf16.msra.mxu0 %v5691
        %5703 = vmatpush.bf16.msra.mxu0 %v5690
        %5704 = vmatpush.bf16.msra.mxu0 %v5689
        %5705 = vmatpush.bf16.msra.mxu0 %v5688
        %5706 = vmatpush.bf16.msra.mxu0 %v5687
        %5707 = vmatpush.bf16.msra.mxu0 %v5686
        %5708 = vmatpush.bf16.msra.mxu0 %v5685
        %5709 = vmatmul.bf16.gmra.mxu0 %v5649
        %v5710 = vpop.f32.mrf.mxu0
        %v5711 = vadd.f32 0.0, %v5710
        %v5712 = vpop.f32.mrf.mxu0
        %v5713 = vadd.f32 0.0, %v5712
        %5714 = vmatmul.bf16.gmra.mxu0 %v5650
        %v5715 = vpop.f32.mrf.mxu0
        %v5716 = vadd.f32 0.0, %v5715
        %v5717 = vpop.f32.mrf.mxu0
        %v5718 = vadd.f32 0.0, %v5717
        %5719 = vdwg.mxu0
        %v5724 = vunpack.c.l.b16 %v4173
        %v5725 = vunpack.c.l.b16 %v4174
        %v5726 = vunpack.c.l.b16 %v4175
        %v5727 = vunpack.c.l.b16 %v4176
        %v5728 = vpack.c.b16 %v5725, %v5724
        %v5729 = vpack.c.b16 %v5727, %v5726
        %v5748 = vunpack.c.l.b16 %v5214
        %v5749 = vunpack.c.l.b16 %v5215
        %v5750 = vunpack.c.l.b16 %v5216
        %v5751 = vunpack.c.l.b16 %v5217
        %v5752 = vunpack.c.l.b16 %v5218
        %v5753 = vunpack.c.l.b16 %v5219
        %v5754 = vunpack.c.l.b16 %v5220
        %v5755 = vunpack.c.l.b16 %v5221
        %v5756 = vunpack.c.l.b16 %v5222
        %v5757 = vunpack.c.l.b16 %v5223
        %v5758 = vunpack.c.l.b16 %v5224
        %v5759 = vunpack.c.l.b16 %v5225
        %v5760 = vunpack.c.l.b16 %v5226
        %v5761 = vunpack.c.l.b16 %v5227
        %v5762 = vunpack.c.l.b16 %v5228
        %v5763 = vunpack.c.l.b16 %v5229
        %v5764 = vpack.c.b16 %v5749, %v5748
        %v5765 = vpack.c.b16 %v5751, %v5750
        %v5766 = vpack.c.b16 %v5753, %v5752
        %v5767 = vpack.c.b16 %v5755, %v5754
        %v5768 = vpack.c.b16 %v5757, %v5756
        %v5769 = vpack.c.b16 %v5759, %v5758
        %v5770 = vpack.c.b16 %v5761, %v5760
        %v5771 = vpack.c.b16 %v5763, %v5762
        %5780 = vmatpush.bf16.msra.mxu0 %v5771
        %5781 = vmatpush.bf16.msra.mxu0 %v5770
        %5782 = vmatpush.bf16.msra.mxu0 %v5769
        %5783 = vmatpush.bf16.msra.mxu0 %v5768
        %5784 = vmatpush.bf16.msra.mxu0 %v5767
        %5785 = vmatpush.bf16.msra.mxu0 %v5766
        %5786 = vmatpush.bf16.msra.mxu0 %v5765
        %5787 = vmatpush.bf16.msra.mxu0 %v5764
        %5788 = vmatmul.bf16.gmra.mxu0 %v5728
        %v5789 = vpop.f32.mrf.mxu0
        %v5790 = vadd.f32 0.0, %v5789
        %v5791 = vpop.f32.mrf.mxu0
        %v5792 = vadd.f32 0.0, %v5791
        %5793 = vmatmul.bf16.gmra.mxu0 %v5729
        %v5794 = vpop.f32.mrf.mxu0
        %v5795 = vadd.f32 0.0, %v5794
        %v5796 = vpop.f32.mrf.mxu0
        %v5797 = vadd.f32 0.0, %v5796
        %5798 = vdwg.mxu0
        %v5803 = vunpack.c.l.b16 %v4177
        %v5804 = vunpack.c.l.b16 %v4178
        %v5805 = vunpack.c.l.b16 %v4179
        %v5806 = vunpack.c.l.b16 %v4180
        %v5807 = vpack.c.b16 %v5804, %v5803
        %v5808 = vpack.c.b16 %v5806, %v5805
        %v5827 = vunpack.c.l.b16 %v5230
        %v5828 = vunpack.c.l.b16 %v5231
        %v5829 = vunpack.c.l.b16 %v5232
        %v5830 = vunpack.c.l.b16 %v5233
        %v5831 = vunpack.c.l.b16 %v5234
        %v5832 = vunpack.c.l.b16 %v5235
        %v5833 = vunpack.c.l.b16 %v5236
        %v5834 = vunpack.c.l.b16 %v5237
        %v5835 = vunpack.c.l.b16 %v5238
        %v5836 = vunpack.c.l.b16 %v5239
        %v5837 = vunpack.c.l.b16 %v5240
        %v5838 = vunpack.c.l.b16 %v5241
        %v5839 = vunpack.c.l.b16 %v5242
        %v5840 = vunpack.c.l.b16 %v5243
        %v5841 = vunpack.c.l.b16 %v5244
        %v5842 = vunpack.c.l.b16 %v5245
        %v5843 = vpack.c.b16 %v5828, %v5827
        %v5844 = vpack.c.b16 %v5830, %v5829
        %v5845 = vpack.c.b16 %v5832, %v5831
        %v5846 = vpack.c.b16 %v5834, %v5833
        %v5847 = vpack.c.b16 %v5836, %v5835
        %v5848 = vpack.c.b16 %v5838, %v5837
        %v5849 = vpack.c.b16 %v5840, %v5839
        %v5850 = vpack.c.b16 %v5842, %v5841
        %5859 = vmatpush.bf16.msra.mxu0 %v5850
        %5860 = vmatpush.bf16.msra.mxu0 %v5849
        %5861 = vmatpush.bf16.msra.mxu0 %v5848
        %5862 = vmatpush.bf16.msra.mxu0 %v5847
        %5863 = vmatpush.bf16.msra.mxu0 %v5846
        %5864 = vmatpush.bf16.msra.mxu0 %v5845
        %5865 = vmatpush.bf16.msra.mxu0 %v5844
        %5866 = vmatpush.bf16.msra.mxu0 %v5843
        %5867 = vmatmul.bf16.gmra.mxu0 %v5807
        %v5868 = vpop.f32.mrf.mxu0
        %v5869 = vadd.f32 0.0, %v5868
        %v5870 = vpop.f32.mrf.mxu0
        %v5871 = vadd.f32 0.0, %v5870
        %5872 = vmatmul.bf16.gmra.mxu0 %v5808
        %v5873 = vpop.f32.mrf.mxu0
        %v5874 = vadd.f32 0.0, %v5873
        %v5875 = vpop.f32.mrf.mxu0
        %v5876 = vadd.f32 0.0, %v5875
        %5877 = vdwg.mxu0
        %v5878 = vadd.f32 %v575, %v5316
        %v5879 = vadd.f32 %v576, %v5318
        %v5880 = vadd.f32 %v577, %v5321
        %v5881 = vadd.f32 %v578, %v5323
        %v5882 = vadd.f32 %v579, %v5395
        %v5883 = vadd.f32 %v580, %v5397
        %v5884 = vadd.f32 %v581, %v5400
        %v5885 = vadd.f32 %v582, %v5402
        %v5886 = vadd.f32 %v583, %v5474
        %v5887 = vadd.f32 %v584, %v5476
        %v5888 = vadd.f32 %v585, %v5479
        %v5889 = vadd.f32 %v586, %v5481
        %v5890 = vadd.f32 %v587, %v5553
        %v5891 = vadd.f32 %v588, %v5555
        %v5892 = vadd.f32 %v589, %v5558
        %v5893 = vadd.f32 %v590, %v5560
        %v5894 = vadd.f32 %v591, %v5632
        %v5895 = vadd.f32 %v592, %v5634
        %v5896 = vadd.f32 %v593, %v5637
        %v5897 = vadd.f32 %v594, %v5639
        %v5898 = vadd.f32 %v595, %v5711
        %v5899 = vadd.f32 %v596, %v5713
        %v5900 = vadd.f32 %v597, %v5716
        %v5901 = vadd.f32 %v598, %v5718
        %v5902 = vadd.f32 %v599, %v5790
        %v5903 = vadd.f32 %v600, %v5792
        %v5904 = vadd.f32 %v601, %v5795
        %v5905 = vadd.f32 %v602, %v5797
        %v5906 = vadd.f32 %v603, %v5869
        %v5907 = vadd.f32 %v604, %v5871
        %v5908 = vadd.f32 %v605, %v5874
        %v5909 = vadd.f32 %v606, %v5876
        %5910 = vst [vmem:[%s570] sm:$0xff] %v5878
        %5911 = vst [vmem:[%s570 + $0x8] sm:$0xff] %v5879
        %5912 = vst [vmem:[%s570 + $0x10] sm:$0xff] %v5880
        %5913 = vst [vmem:[%s570 + $0x18] sm:$0xff] %v5881
        %5914 = vst [vmem:[%s570 + $0x20] sm:$0xff] %v5882
        %5915 = vst [vmem:[%s570 + $0x28] sm:$0xff] %v5883
        %5916 = vst [vmem:[%s570 + $0x30] sm:$0xff] %v5884
        %5917 = vst [vmem:[%s570 + $0x38] sm:$0xff] %v5885
        %5918 = vst [vmem:[%s570 + $0x40] sm:$0xff] %v5886
        %5919 = vst [vmem:[%s570 + $0x48] sm:$0xff] %v5887
        %5920 = vst [vmem:[%s570 + $0x50] sm:$0xff] %v5888
        %5921 = vst [vmem:[%s570 + $0x58] sm:$0xff] %v5889
        %5922 = vst [vmem:[%s570 + $0x60] sm:$0xff] %v5890
        %5923 = vst [vmem:[%s570 + $0x68] sm:$0xff] %v5891
        %5924 = vst [vmem:[%s570 + $0x70] sm:$0xff] %v5892
        %5925 = vst [vmem:[%s570 + $0x78] sm:$0xff] %v5893
        %5926 = vst [vmem:[%s570 + $0x80] sm:$0xff] %v5894
        %5927 = vst [vmem:[%s570 + $0x88] sm:$0xff] %v5895
        %5928 = vst [vmem:[%s570 + $0x90] sm:$0xff] %v5896
        %5929 = vst [vmem:[%s570 + $0x98] sm:$0xff] %v5897
        %5930 = vst [vmem:[%s570 + $0xa0] sm:$0xff] %v5898
        %5931 = vst [vmem:[%s570 + $0xa8] sm:$0xff] %v5899
        %5932 = vst [vmem:[%s570 + $0xb0] sm:$0xff] %v5900
        %5933 = vst [vmem:[%s570 + $0xb8] sm:$0xff] %v5901
        %5934 = vst [vmem:[%s570 + $0xc0] sm:$0xff] %v5902
        %5935 = vst [vmem:[%s570 + $0xc8] sm:$0xff] %v5903
        %5936 = vst [vmem:[%s570 + $0xd0] sm:$0xff] %v5904
        %5937 = vst [vmem:[%s570 + $0xd8] sm:$0xff] %v5905
        %5938 = vst [vmem:[%s570 + $0xe0] sm:$0xff] %v5906
        %5939 = vst [vmem:[%s570 + $0xe8] sm:$0xff] %v5907
        %5940 = vst [vmem:[%s570 + $0xf0] sm:$0xff] %v5908
        %5941 = vst [vmem:[%s570 + $0xf8] sm:$0xff] %v5909
        %s5942 = sand.u32 %s326, 1
        %s5943 = scalar_lea.sflag [#allocation4], %s5942
        %s5944 = sand.u32 %s326, 1
        %s5945 = smul.addr %s5944, 256
        %s5946 = scalar_lea.vmem [#allocation13], %s5945
        // Predicated region
        $region97: #{tpu_custom_call.1} parent=71 // pred_check
          %p5947 = pneg %p336
        $region98: #{tpu_custom_call.1} parent=71 // pred_check_branch
          %5949 = sbr.rel (%p5947) target = $region100
        $region99: #{tpu_custom_call.1} parent=71 // pred_region
          %s5950 = smul.u32 8, %s35
          %5952 = vsyncadd %s5943, 0
          %s5953 = smul.addr %s5950, 4
          %s5954 = smul.addr %s5953, 8
          %s5955 = scalar_lea.hbm %s13, %s5954
          %s5956 = sshll.u32 %s5946, 4
          %s5957 = int_to_ptr.vmem [resolvable:$true] %s5956
          %s5958 = sshll.u32 %s5955, 4
          %s5959 = int_to_ptr.hbm [resolvable:$true] %s5958
          %5964 = dma.vmem_to_hbm [thread:$0]  %s5957, 4096, %s5959, %s5943, 128, 128, 8
        $region100: #{tpu_custom_call.1} parent=71 // pred_fallthru
          _
      $region72: #{tpu_custom_call.1} parent=5 // pred_fallthru
        _
      %p5965 = scmp.le.s32.totalorder 2, %s30
      // Predicated region
      $region101: #{tpu_custom_call.1} parent=5 // pred_check
        %p5966 = pneg %p5965
      $region102: #{tpu_custom_call.1} parent=5 // pred_check_branch
        %5968 = sbr.rel (%p5966) target = $region104
      $region103: #{tpu_custom_call.1} parent=5 // pred_region
        %s5969 = ssub.s32 %s30, 2
        // Predicated region
        $region105: #{tpu_custom_call.1} parent=103 // pred_check
          %p5970 = pneg %p342
        $region106: #{tpu_custom_call.1} parent=103 // pred_check_branch
          %5972 = sbr.rel (%p5970) target = $region108
        $region107: #{tpu_custom_call.1} parent=103 // pred_region
          %s5973 = sand.u32 %s327, 1
          %s5974 = scalar_lea.sflag [#allocation4], %s5973
          %s5975 = sand.u32 %s327, 1
          %s5976 = smul.addr %s5975, 256
          %s5977 = scalar_lea.vmem [#allocation13], %s5976
          %5979 = dma.done %s5974, 4096
        $region108: #{tpu_custom_call.1} parent=103 // pred_fallthru
          _
      $region104: #{tpu_custom_call.1} parent=5 // pred_fallthru
        _
    $region6: #{tpu_custom_call.1} parent=1 // loop_footer
      %s34 = sadd.s32 1, %s30
    $region7: #{tpu_custom_call.1} parent=1 // loop_footer_branch
      %29 = sbr.rel target = $region3
    $region8: #{tpu_custom_call.1} parent=1 // loop_exit
      _
    %5980 = vsyncpa [#allocation3], 1
    %s5981 = scalar_lea.sflag [#allocation3], 1
    %5982 = vsyncpa %s5981, 1
    %5983 = vsyncpa [#allocation6], 1
    %s5984 = scalar_lea.sflag [#allocation6], 1
    %5985 = vsyncpa %s5984, 1
    %5986 = vsyncpa [#allocation9], 1
    %5987 = vsyncpa [#allocation12], 1
    %5988 = vsyncpa [#allocation4], 1
    %s5989 = scalar_lea.sflag [#allocation4], 1
    %5990 = vsyncpa %s5989, 1

</llo_original>
